<compile_context>
chip_gen: v7x
topology: tpu7x:2x2x1
jax: 0.10.0
libtpu: 0.0.40
codegen_flags: <defaults>
</compile_context>

<pallas_src>
import functools

import jax
import jax.numpy as jnp
from jax.experimental import pallas as pl
from jax.experimental.pallas import tpu as pltpu


def _epab_kernel(x_ref, wc12_ref, bc12_ref, wc3_ref, bfin_ref,
                 wt12_ref, bt12_ref, wt3_ref, o_ref, *, T, C):
    """One (batch, hw-tile) block: channel + temporal non-local branches fused.

    x_ref   : (1, T*C, S) f32   native-layout block, S = spatial tile (multiple of 128)
    wc12_ref: (2*T*C, T*C) bf16 [Wc1 (x) I_C ; Wc2 (x) I_C]  channel gate | value
    bc12_ref: (2*T*C, 1)   f32  [repeat(bc1,C) ; repeat(bc2,C)]
    wc3_ref : (T*C, T*C)   bf16 Wc3 (x) I_C                   channel conv4
    bfin_ref: (T*C, 1)     f32  bc3[t] + bt3[c]   (both final-conv biases pre-folded)
    wt12_ref: (2*C, C)     bf16 [Wt1 ; Wt2]                   temporal gate | value
    bt12_ref: (2*C, 1)     f32
    wt3_ref : (C, C)       bf16 Wt3                           temporal conv4
    o_ref   : (1, T*C, S)  output block
    """
    TC = T * C
    S = o_ref.shape[-1]

    xf = x_ref[0]                               # (TC, S) f32
    x16 = xf.astype(jnp.bfloat16)               # single-pass MXU operands

    # ---- channel branch ('channel' mode over num_frames): T-mixing on the MXU ----
    gv = jnp.dot(wc12_ref[...], x16,
                 preferred_element_type=jnp.float32) + bc12_ref[...]     # (2TC, S)
    xg = jax.nn.sigmoid(gv[:TC, :]) * gv[TC:, :]                         # (TC, S)
    ch = jnp.dot(wc3_ref[...], xg.astype(jnp.bfloat16),
                 preferred_element_type=jnp.float32)                     # (TC, S)

    # channel_out + temporal_out + x == (ch + bc3 + x) + (yc + bt3 + x) + x,
    # with bc3[t] + bt3[c] pre-folded into bfin.
    base = ch + bfin_ref[...] + 3.0 * xf                                 # (TC, S)

    # ---- temporal branch ('temporal' mode over nf): per-frame MXU dots ----
    wt12 = wt12_ref[...]
    wt3 = wt3_ref[...]
    bt12b = jnp.broadcast_to(bt12_ref[...], (2 * C, S))   # hoisted: one broadcast, not T
    for t in range(T):                                    # unrolled -> one basic block
        lo = t * C
        gvt = jnp.dot(wt12, x16[lo:lo + C, :],
                      preferred_element_type=jnp.float32) + bt12b        # (2C, S)
        ybt = jax.nn.sigmoid(gvt[:C, :]) * gvt[C:, :]                    # (C, S)
        yct = jnp.dot(wt3, ybt.astype(jnp.bfloat16),
                      preferred_element_type=jnp.float32)                # (C, S)
        o_ref[0, lo:lo + C, :] = (yct + base[lo:lo + C, :]).astype(o_ref.dtype)


def _pick_hw_tile(hw_padded, max_lanes, min_total_steps, batch):
    """Largest multiple-of-128 divisor of hw_padded that is <= max_lanes, shrunk until the
    grid has at least `min_total_steps` steps (keeps both v7x TensorCores pipelined)."""
    m = hw_padded // 128
    cands = [128 * d for d in range(1, m + 1) if m % d == 0]
    tile = max([c for c in cands if c <= max(max_lanes, 128)] or [128])
    idx = cands.index(tile)
    while idx > 0 and batch * (hw_padded // cands[idx]) < min_total_steps:
        idx -= 1
    return cands[idx]


def epab_pallas(x, params, *, max_hw_tile=512):
    B, T, C, H, W = x.shape
    TC = T * C
    HW = H * W

    x_r = x.reshape(B, TC, HW)                       # free reshape, native layout
    HWp = ((HW + 127) // 128) * 128                  # lane-dense / legal last-dim blocks
    if HWp != HW:
        # 1x1x1 convs are pointwise in space, so zero-padding is safe; sliced off below.
        x_r = jnp.pad(x_r, ((0, 0), (0, 0), (0, HWp - HW)))

    hw_t = _pick_hw_tile(HWp, max_hw_tile, min_total_steps=4, batch=B)
    n_s = HWp // hw_t

    kernel = functools.partial(_epab_kernel, T=T, C=C)
    const = lambda b, s: (0, 0)

    out_r = pl.pallas_call(
        kernel,
        out_shape=jax.ShapeDtypeStruct((B, TC, HWp), x.dtype),
        grid=(B, n_s),
        in_specs=[
            pl.BlockSpec((1, TC, hw_t), lambda b, s: (b, 0, s)),
            pl.BlockSpec((2 * TC, TC), const),   # wc12 (bf16)
            pl.BlockSpec((2 * TC, 1), const),    # bc12
            pl.BlockSpec((TC, TC), const),       # wc3  (bf16)
            pl.BlockSpec((TC, 1), const),        # bfin
            pl.BlockSpec((2 * C, C), const),     # wt12 (bf16)
            pl.BlockSpec((2 * C, 1), const),     # bt12
            pl.BlockSpec((C, C), const),         # wt3  (bf16)
        ],
        out_specs=pl.BlockSpec((1, TC, hw_t), lambda b, s: (b, 0, s)),
        compiler_params=pltpu.CompilerParams(
            dimension_semantics=("parallel", "parallel"),
            vmem_limit_bytes=32 * 1024 * 1024,
        ),
    )(x_r, params["wc12"], params["bc12"], params["wc3"], params["bfin"],
      params["wt12"], params["bt12"], params["wt3"])

    if HWp != HW:
        out_r = out_r[:, :, :HW]
    return out_r.reshape(B, T, C, H, W)


def _kron_identity(W, C):
    """(T,T) -> (T*C, T*C) block matrix with block[t, k] = W[t, k] * I_C."""
    T = W.shape[0]
    eye = jnp.eye(C, dtype=W.dtype)
    return (W[:, None, :, None] * eye[None, :, None, :]).reshape(T * C, T * C)


def init_params(key, T, C):
    """Deterministic synthetic weights for the 6 1x1x1 Conv3d layers, packed for the kernel."""
    ks = jax.random.split(key, 12)
    Wc = [jax.random.normal(ks[i], (T, T), jnp.float32) * 0.3 for i in range(3)]
    bc = [jax.random.normal(ks[3 + i], (T,), jnp.float32) * 0.1 for i in range(3)]
    Wt = [jax.random.normal(ks[6 + i], (C, C), jnp.float32) / jnp.sqrt(C) for i in range(3)]
    bt = [jax.random.normal(ks[9 + i], (C,), jnp.float32) * 0.1 for i in range(3)]

    TC = T * C
    params = dict(
        # channel branch: block-Kronecker weights, bf16 for single-pass MXU
        wc12=jnp.concatenate([_kron_identity(Wc[0], C),
                              _kron_identity(Wc[1], C)], axis=0).astype(jnp.bfloat16),
        bc12=jnp.concatenate([jnp.repeat(bc[0], C),
                              jnp.repeat(bc[1], C)]).reshape(2 * TC, 1),
        wc3=_kron_identity(Wc[2], C).astype(jnp.bfloat16),
        # both final-conv biases folded into one vector: bc3[t] + bt3[c]
        bfin=(jnp.repeat(bc[2], C) + jnp.tile(bt[2], T)).reshape(TC, 1),
        # temporal branch
        wt12=jnp.concatenate([Wt[0], Wt[1]], axis=0).astype(jnp.bfloat16),
        bt12=jnp.concatenate([bt[0], bt[1]]).reshape(2 * C, 1),
        wt3=Wt[2].astype(jnp.bfloat16),
    )
    raw = dict(Wc=Wc, bc=bc, Wt=Wt, bt=bt)
    return params, raw


def epab_ref(x, raw):
    """Pure-JAX reference matching the PyTorch forward exactly (f32 matmuls)."""
    def cconv(z, W, b):   # 1x1x1 conv over the T ("channel") axis
        return (jnp.einsum("btchw,st->bschw", z, W, precision="highest")
                + b[None, :, None, None, None])

    def tconv(z, W, b):   # 1x1x1 conv over the C ("nf") axis
        return (jnp.einsum("btchw,dc->btdhw", z, W, precision="highest")
                + b[None, None, :, None, None])

    Wc, bc, Wt, bt = raw["Wc"], raw["bc"], raw["Wt"], raw["bt"]
    xa = jax.nn.sigmoid(cconv(x, Wc[0], bc[0]))
    xb = cconv(x, Wc[1], bc[1]) * xa
    channel = cconv(xb, Wc[2], bc[2]) + x
    ya = jax.nn.sigmoid(tconv(x, Wt[0], bt[0]))
    yb = tconv(x, Wt[1], bt[1]) * ya
    temporal = tconv(yb, Wt[2], bt[2]) + x
    return channel + temporal + x


if __name__ == "__main__":
    key = jax.random.PRNGKey(0)
    kx, kp = jax.random.split(key)

    # Small shapes consistent with EPAB: (B, num_frames, nf, H, W)
    B, T, C, H, W = 2, 7, 32, 16, 16
    x = jax.random.normal(kx, (B, T, C, H, W), jnp.float32)
    params, raw = init_params(kp, T, C)

    out = jax.jit(epab_pallas)(x, params)
    out = jax.block_until_ready(out)

    ref = epab_ref(x, raw)
    assert out.shape == x.shape
    err = float(jnp.max(jnp.abs(out - ref)))
    # MXU operands are bf16 (single-pass), elementwise math is f32; the f32-exact reference
    # therefore differs by a few 1e-2 worst-case.  A wrong kernel would be off by O(1).
    assert jnp.allclose(out, ref, atol=4e-2, rtol=3e-2), f"max abs err = {err}"
    print("KERNEL_OK")
</pallas_src>

<mosaic_0001>
module attributes {stable_mosaic.version = 11 : i64} {
  func.func @_epab_kernel(%arg0: i32, %arg1: i32, %arg2: memref<1x224x128xf32, #tpu.memory_space<vmem>>, %arg3: memref<448x224xbf16, #tpu.memory_space<vmem>>, %arg4: memref<448x1xf32, #tpu.memory_space<vmem>>, %arg5: memref<224x224xbf16, #tpu.memory_space<vmem>>, %arg6: memref<224x1xf32, #tpu.memory_space<vmem>>, %arg7: memref<64x32xbf16, #tpu.memory_space<vmem>>, %arg8: memref<64x1xf32, #tpu.memory_space<vmem>>, %arg9: memref<32x32xbf16, #tpu.memory_space<vmem>>, %arg10: memref<1x224x128xf32, #tpu.memory_space<vmem>>) attributes {dimension_semantics = [#tpu.dimension_semantics<parallel>, #tpu.dimension_semantics<parallel>], iteration_bounds = array<i64: 2, 2>, scalar_prefetch = 0 : i64, scratch_operands = 0 : i64, tpu.core_type = #tpu.core_type<tc>, window_params = [{transform_indices = @transform_0, window_bounds = array<i64: 1, 224, 128>}, {pipeline_mode = #tpu.pipeline_mode<synchronous>, transform_indices = @transform_1, window_bounds = array<i64: 448, 224>}, {pipeline_mode = #tpu.pipeline_mode<synchronous>, transform_indices = @transform_2, window_bounds = array<i64: 448, 1>}, {pipeline_mode = #tpu.pipeline_mode<synchronous>, transform_indices = @transform_3, window_bounds = array<i64: 224, 224>}, {pipeline_mode = #tpu.pipeline_mode<synchronous>, transform_indices = @transform_4, window_bounds = array<i64: 224, 1>}, {pipeline_mode = #tpu.pipeline_mode<synchronous>, transform_indices = @transform_5, window_bounds = array<i64: 64, 32>}, {pipeline_mode = #tpu.pipeline_mode<synchronous>, transform_indices = @transform_6, window_bounds = array<i64: 64, 1>}, {pipeline_mode = #tpu.pipeline_mode<synchronous>, transform_indices = @transform_7, window_bounds = array<i64: 32, 32>}, {transform_indices = @transform_8, window_bounds = array<i64: 1, 224, 128>}]} {
    %c0 = arith.constant 0 : index
    %c0_0 = arith.constant 0 : index
    %c0_1 = arith.constant 0 : index
    %0 = vector.load %arg2[%c0, %c0_0, %c0_1] : memref<1x224x128xf32, #tpu.memory_space<vmem>>, vector<1x224x128xf32>
    %1 = vector.shape_cast %0 : vector<1x224x128xf32> to vector<224x128xf32>
    %2 = arith.truncf %1 : vector<224x128xf32> to vector<224x128xbf16>
    %c0_2 = arith.constant 0 : index
    %c0_3 = arith.constant 0 : index
    %3 = vector.load %arg3[%c0_2, %c0_3] : memref<448x224xbf16, #tpu.memory_space<vmem>>, vector<448x224xbf16>
    %cst = arith.constant dense<0.000000e+00> : vector<448x128xf32>
    %4 = tpu.matmul %3, %2, %cst {dimension_numbers = #tpu.dot_dimension_numbers<[1], [0], [0], [1], [0, 0, 1, 1], [], []>} : vector<448x224xbf16>, vector<224x128xbf16>, vector<448x128xf32> -> vector<448x128xf32>
    %c0_4 = arith.constant 0 : index
    %c0_5 = arith.constant 0 : index
    %5 = vector.load %arg4[%c0_4, %c0_5] : memref<448x1xf32, #tpu.memory_space<vmem>>, vector<448x1xf32>
    %6 = vector.broadcast %5 : vector<448x1xf32> to vector<448x128xf32>
    %7 = arith.addf %4, %6 : vector<448x128xf32>
    %8 = vector.extract_strided_slice %7 {offsets = [0, 0], sizes = [224, 128], strides = [1, 1]} : vector<448x128xf32> to vector<224x128xf32>
    %9 = arith.negf %8 : vector<224x128xf32>
    %10 = math.exp %9 : vector<224x128xf32>
    %cst_6 = arith.constant 1.000000e+00 : f32
    %11 = vector.broadcast %cst_6 : f32 to vector<224x128xf32>
    %12 = arith.addf %11, %10 : vector<224x128xf32>
    %13 = arith.divf %11, %12 : vector<224x128xf32>
    %14 = vector.extract_strided_slice %7 {offsets = [224, 0], sizes = [224, 128], strides = [1, 1]} : vector<448x128xf32> to vector<224x128xf32>
    %15 = arith.mulf %13, %14 : vector<224x128xf32>
    %c0_7 = arith.constant 0 : index
    %c0_8 = arith.constant 0 : index
    %16 = vector.load %arg5[%c0_7, %c0_8] : memref<224x224xbf16, #tpu.memory_space<vmem>>, vector<224x224xbf16>
    %17 = arith.truncf %15 : vector<224x128xf32> to vector<224x128xbf16>
    %cst_9 = arith.constant dense<0.000000e+00> : vector<224x128xf32>
    %18 = tpu.matmul %16, %17, %cst_9 {dimension_numbers = #tpu.dot_dimension_numbers<[1], [0], [0], [1], [0, 0, 1, 1], [], []>} : vector<224x224xbf16>, vector<224x128xbf16>, vector<224x128xf32> -> vector<224x128xf32>
    %c0_10 = arith.constant 0 : index
    %c0_11 = arith.constant 0 : index
    %19 = vector.load %arg6[%c0_10, %c0_11] : memref<224x1xf32, #tpu.memory_space<vmem>>, vector<224x1xf32>
    %20 = vector.broadcast %19 : vector<224x1xf32> to vector<224x128xf32>
    %21 = arith.addf %18, %20 : vector<224x128xf32>
    %cst_12 = arith.constant 3.000000e+00 : f32
    %22 = vector.broadcast %cst_12 : f32 to vector<224x128xf32>
    %23 = arith.mulf %22, %1 : vector<224x128xf32>
    %24 = arith.addf %21, %23 : vector<224x128xf32>
    %c0_13 = arith.constant 0 : index
    %c0_14 = arith.constant 0 : index
    %25 = vector.load %arg7[%c0_13, %c0_14] : memref<64x32xbf16, #tpu.memory_space<vmem>>, vector<64x32xbf16>
    %c0_15 = arith.constant 0 : index
    %c0_16 = arith.constant 0 : index
    %26 = vector.load %arg9[%c0_15, %c0_16] : memref<32x32xbf16, #tpu.memory_space<vmem>>, vector<32x32xbf16>
    %c0_17 = arith.constant 0 : index
    %c0_18 = arith.constant 0 : index
    %27 = vector.load %arg8[%c0_17, %c0_18] : memref<64x1xf32, #tpu.memory_space<vmem>>, vector<64x1xf32>
    %28 = vector.shape_cast %27 : vector<64x1xf32> to vector<64x1xf32>
    %29 = vector.broadcast %28 : vector<64x1xf32> to vector<64x128xf32>
    %30 = vector.extract_strided_slice %2 {offsets = [0, 0], sizes = [32, 128], strides = [1, 1]} : vector<224x128xbf16> to vector<32x128xbf16>
    %cst_19 = arith.constant dense<0.000000e+00> : vector<64x128xf32>
    %31 = tpu.matmul %25, %30, %cst_19 {dimension_numbers = #tpu.dot_dimension_numbers<[1], [0], [0], [1], [0, 0, 1, 1], [], []>} : vector<64x32xbf16>, vector<32x128xbf16>, vector<64x128xf32> -> vector<64x128xf32>
    %32 = arith.addf %31, %29 : vector<64x128xf32>
    %33 = vector.extract_strided_slice %32 {offsets = [0, 0], sizes = [32, 128], strides = [1, 1]} : vector<64x128xf32> to vector<32x128xf32>
    %34 = arith.negf %33 : vector<32x128xf32>
    %35 = math.exp %34 : vector<32x128xf32>
    %cst_20 = arith.constant 1.000000e+00 : f32
    %36 = vector.broadcast %cst_20 : f32 to vector<32x128xf32>
    %37 = arith.addf %36, %35 : vector<32x128xf32>
    %38 = arith.divf %36, %37 : vector<32x128xf32>
    %39 = vector.extract_strided_slice %32 {offsets = [32, 0], sizes = [32, 128], strides = [1, 1]} : vector<64x128xf32> to vector<32x128xf32>
    %40 = arith.mulf %38, %39 : vector<32x128xf32>
    %41 = arith.truncf %40 : vector<32x128xf32> to vector<32x128xbf16>
    %cst_21 = arith.constant dense<0.000000e+00> : vector<32x128xf32>
    %42 = tpu.matmul %26, %41, %cst_21 {dimension_numbers = #tpu.dot_dimension_numbers<[1], [0], [0], [1], [0, 0, 1, 1], [], []>} : vector<32x32xbf16>, vector<32x128xbf16>, vector<32x128xf32> -> vector<32x128xf32>
    %43 = vector.extract_strided_slice %24 {offsets = [0, 0], sizes = [32, 128], strides = [1, 1]} : vector<224x128xf32> to vector<32x128xf32>
    %44 = arith.addf %42, %43 : vector<32x128xf32>
    %c0_22 = arith.constant 0 : index
    %c0_23 = arith.constant 0 : index
    %c0_24 = arith.constant 0 : index
    %45 = vector.load %arg10[%c0_22, %c0_23, %c0_24] : memref<1x224x128xf32, #tpu.memory_space<vmem>>, vector<1x32x128xf32>
    %46 = vector.shape_cast %45 : vector<1x32x128xf32> to vector<32x128xf32>
    %47 = vector.shape_cast %44 : vector<32x128xf32> to vector<1x32x128xf32>
    tpu.vector_store %arg10[%c0_22, %c0_23, %c0_24], %47 {strides = array<i32>} : memref<1x224x128xf32, #tpu.memory_space<vmem>>, vector<1x32x128xf32>,
    %48 = vector.extract_strided_slice %2 {offsets = [32, 0], sizes = [32, 128], strides = [1, 1]} : vector<224x128xbf16> to vector<32x128xbf16>
    %cst_25 = arith.constant dense<0.000000e+00> : vector<64x128xf32>
    %49 = tpu.matmul %25, %48, %cst_25 {dimension_numbers = #tpu.dot_dimension_numbers<[1], [0], [0], [1], [0, 0, 1, 1], [], []>} : vector<64x32xbf16>, vector<32x128xbf16>, vector<64x128xf32> -> vector<64x128xf32>
    %50 = arith.addf %49, %29 : vector<64x128xf32>
    %51 = vector.extract_strided_slice %50 {offsets = [0, 0], sizes = [32, 128], strides = [1, 1]} : vector<64x128xf32> to vector<32x128xf32>
    %52 = arith.negf %51 : vector<32x128xf32>
    %53 = math.exp %52 : vector<32x128xf32>
    %cst_26 = arith.constant 1.000000e+00 : f32
    %54 = vector.broadcast %cst_26 : f32 to vector<32x128xf32>
    %55 = arith.addf %54, %53 : vector<32x128xf32>
    %56 = arith.divf %54, %55 : vector<32x128xf32>
    %57 = vector.extract_strided_slice %50 {offsets = [32, 0], sizes = [32, 128], strides = [1, 1]} : vector<64x128xf32> to vector<32x128xf32>
    %58 = arith.mulf %56, %57 : vector<32x128xf32>
    %59 = arith.truncf %58 : vector<32x128xf32> to vector<32x128xbf16>
    %cst_27 = arith.constant dense<0.000000e+00> : vector<32x128xf32>
    %60 = tpu.matmul %26, %59, %cst_27 {dimension_numbers = #tpu.dot_dimension_numbers<[1], [0], [0], [1], [0, 0, 1, 1], [], []>} : vector<32x32xbf16>, vector<32x128xbf16>, vector<32x128xf32> -> vector<32x128xf32>
    %61 = vector.extract_strided_slice %24 {offsets = [32, 0], sizes = [32, 128], strides = [1, 1]} : vector<224x128xf32> to vector<32x128xf32>
    %62 = arith.addf %60, %61 : vector<32x128xf32>
    %c0_28 = arith.constant 0 : index
    %c32 = arith.constant 32 : index
    %c0_29 = arith.constant 0 : index
    %63 = vector.load %arg10[%c0_28, %c32, %c0_29] : memref<1x224x128xf32, #tpu.memory_space<vmem>>, vector<1x32x128xf32>
    %64 = vector.shape_cast %63 : vector<1x32x128xf32> to vector<32x128xf32>
    %65 = vector.shape_cast %62 : vector<32x128xf32> to vector<1x32x128xf32>
    tpu.vector_store %arg10[%c0_28, %c32, %c0_29], %65 {strides = array<i32>} : memref<1x224x128xf32, #tpu.memory_space<vmem>>, vector<1x32x128xf32>,
    %66 = vector.extract_strided_slice %2 {offsets = [64, 0], sizes = [32, 128], strides = [1, 1]} : vector<224x128xbf16> to vector<32x128xbf16>
    %cst_30 = arith.constant dense<0.000000e+00> : vector<64x128xf32>
    %67 = tpu.matmul %25, %66, %cst_30 {dimension_numbers = #tpu.dot_dimension_numbers<[1], [0], [0], [1], [0, 0, 1, 1], [], []>} : vector<64x32xbf16>, vector<32x128xbf16>, vector<64x128xf32> -> vector<64x128xf32>
    %68 = arith.addf %67, %29 : vector<64x128xf32>
    %69 = vector.extract_strided_slice %68 {offsets = [0, 0], sizes = [32, 128], strides = [1, 1]} : vector<64x128xf32> to vector<32x128xf32>
    %70 = arith.negf %69 : vector<32x128xf32>
    %71 = math.exp %70 : vector<32x128xf32>
    %cst_31 = arith.constant 1.000000e+00 : f32
    %72 = vector.broadcast %cst_31 : f32 to vector<32x128xf32>
    %73 = arith.addf %72, %71 : vector<32x128xf32>
    %74 = arith.divf %72, %73 : vector<32x128xf32>
    %75 = vector.extract_strided_slice %68 {offsets = [32, 0], sizes = [32, 128], strides = [1, 1]} : vector<64x128xf32> to vector<32x128xf32>
    %76 = arith.mulf %74, %75 : vector<32x128xf32>
    %77 = arith.truncf %76 : vector<32x128xf32> to vector<32x128xbf16>
    %cst_32 = arith.constant dense<0.000000e+00> : vector<32x128xf32>
    %78 = tpu.matmul %26, %77, %cst_32 {dimension_numbers = #tpu.dot_dimension_numbers<[1], [0], [0], [1], [0, 0, 1, 1], [], []>} : vector<32x32xbf16>, vector<32x128xbf16>, vector<32x128xf32> -> vector<32x128xf32>
    %79 = vector.extract_strided_slice %24 {offsets = [64, 0], sizes = [32, 128], strides = [1, 1]} : vector<224x128xf32> to vector<32x128xf32>
    %80 = arith.addf %78, %79 : vector<32x128xf32>
    %c0_33 = arith.constant 0 : index
    %c64 = arith.constant 64 : index
    %c0_34 = arith.constant 0 : index
    %81 = vector.load %arg10[%c0_33, %c64, %c0_34] : memref<1x224x128xf32, #tpu.memory_space<vmem>>, vector<1x32x128xf32>
    %82 = vector.shape_cast %81 : vector<1x32x128xf32> to vector<32x128xf32>
    %83 = vector.shape_cast %80 : vector<32x128xf32> to vector<1x32x128xf32>
    tpu.vector_store %arg10[%c0_33, %c64, %c0_34], %83 {strides = array<i32>} : memref<1x224x128xf32, #tpu.memory_space<vmem>>, vector<1x32x128xf32>,
    %84 = vector.extract_strided_slice %2 {offsets = [96, 0], sizes = [32, 128], strides = [1, 1]} : vector<224x128xbf16> to vector<32x128xbf16>
    %cst_35 = arith.constant dense<0.000000e+00> : vector<64x128xf32>
    %85 = tpu.matmul %25, %84, %cst_35 {dimension_numbers = #tpu.dot_dimension_numbers<[1], [0], [0], [1], [0, 0, 1, 1], [], []>} : vector<64x32xbf16>, vector<32x128xbf16>, vector<64x128xf32> -> vector<64x128xf32>
    %86 = arith.addf %85, %29 : vector<64x128xf32>
    %87 = vector.extract_strided_slice %86 {offsets = [0, 0], sizes = [32, 128], strides = [1, 1]} : vector<64x128xf32> to vector<32x128xf32>
    %88 = arith.negf %87 : vector<32x128xf32>
    %89 = math.exp %88 : vector<32x128xf32>
    %cst_36 = arith.constant 1.000000e+00 : f32
    %90 = vector.broadcast %cst_36 : f32 to vector<32x128xf32>
    %91 = arith.addf %90, %89 : vector<32x128xf32>
    %92 = arith.divf %90, %91 : vector<32x128xf32>
    %93 = vector.extract_strided_slice %86 {offsets = [32, 0], sizes = [32, 128], strides = [1, 1]} : vector<64x128xf32> to vector<32x128xf32>
    %94 = arith.mulf %92, %93 : vector<32x128xf32>
    %95 = arith.truncf %94 : vector<32x128xf32> to vector<32x128xbf16>
    %cst_37 = arith.constant dense<0.000000e+00> : vector<32x128xf32>
    %96 = tpu.matmul %26, %95, %cst_37 {dimension_numbers = #tpu.dot_dimension_numbers<[1], [0], [0], [1], [0, 0, 1, 1], [], []>} : vector<32x32xbf16>, vector<32x128xbf16>, vector<32x128xf32> -> vector<32x128xf32>
    %97 = vector.extract_strided_slice %24 {offsets = [96, 0], sizes = [32, 128], strides = [1, 1]} : vector<224x128xf32> to vector<32x128xf32>
    %98 = arith.addf %96, %97 : vector<32x128xf32>
    %c0_38 = arith.constant 0 : index
    %c96 = arith.constant 96 : index
    %c0_39 = arith.constant 0 : index
    %99 = vector.load %arg10[%c0_38, %c96, %c0_39] : memref<1x224x128xf32, #tpu.memory_space<vmem>>, vector<1x32x128xf32>
    %100 = vector.shape_cast %99 : vector<1x32x128xf32> to vector<32x128xf32>
    %101 = vector.shape_cast %98 : vector<32x128xf32> to vector<1x32x128xf32>
    tpu.vector_store %arg10[%c0_38, %c96, %c0_39], %101 {strides = array<i32>} : memref<1x224x128xf32, #tpu.memory_space<vmem>>, vector<1x32x128xf32>,
    %102 = vector.extract_strided_slice %2 {offsets = [128, 0], sizes = [32, 128], strides = [1, 1]} : vector<224x128xbf16> to vector<32x128xbf16>
    %cst_40 = arith.constant dense<0.000000e+00> : vector<64x128xf32>
    %103 = tpu.matmul %25, %102, %cst_40 {dimension_numbers = #tpu.dot_dimension_numbers<[1], [0], [0], [1], [0, 0, 1, 1], [], []>} : vector<64x32xbf16>, vector<32x128xbf16>, vector<64x128xf32> -> vector<64x128xf32>
    %104 = arith.addf %103, %29 : vector<64x128xf32>
    %105 = vector.extract_strided_slice %104 {offsets = [0, 0], sizes = [32, 128], strides = [1, 1]} : vector<64x128xf32> to vector<32x128xf32>
    %106 = arith.negf %105 : vector<32x128xf32>
    %107 = math.exp %106 : vector<32x128xf32>
    %cst_41 = arith.constant 1.000000e+00 : f32
    %108 = vector.broadcast %cst_41 : f32 to vector<32x128xf32>
    %109 = arith.addf %108, %107 : vector<32x128xf32>
    %110 = arith.divf %108, %109 : vector<32x128xf32>
    %111 = vector.extract_strided_slice %104 {offsets = [32, 0], sizes = [32, 128], strides = [1, 1]} : vector<64x128xf32> to vector<32x128xf32>
    %112 = arith.mulf %110, %111 : vector<32x128xf32>
    %113 = arith.truncf %112 : vector<32x128xf32> to vector<32x128xbf16>
    %cst_42 = arith.constant dense<0.000000e+00> : vector<32x128xf32>
    %114 = tpu.matmul %26, %113, %cst_42 {dimension_numbers = #tpu.dot_dimension_numbers<[1], [0], [0], [1], [0, 0, 1, 1], [], []>} : vector<32x32xbf16>, vector<32x128xbf16>, vector<32x128xf32> -> vector<32x128xf32>
    %115 = vector.extract_strided_slice %24 {offsets = [128, 0], sizes = [32, 128], strides = [1, 1]} : vector<224x128xf32> to vector<32x128xf32>
    %116 = arith.addf %114, %115 : vector<32x128xf32>
    %c0_43 = arith.constant 0 : index
    %c128 = arith.constant 128 : index
    %c0_44 = arith.constant 0 : index
    %117 = vector.load %arg10[%c0_43, %c128, %c0_44] : memref<1x224x128xf32, #tpu.memory_space<vmem>>, vector<1x32x128xf32>
    %118 = vector.shape_cast %117 : vector<1x32x128xf32> to vector<32x128xf32>
    %119 = vector.shape_cast %116 : vector<32x128xf32> to vector<1x32x128xf32>
    tpu.vector_store %arg10[%c0_43, %c128, %c0_44], %119 {strides = array<i32>} : memref<1x224x128xf32, #tpu.memory_space<vmem>>, vector<1x32x128xf32>,
    %120 = vector.extract_strided_slice %2 {offsets = [160, 0], sizes = [32, 128], strides = [1, 1]} : vector<224x128xbf16> to vector<32x128xbf16>
    %cst_45 = arith.constant dense<0.000000e+00> : vector<64x128xf32>
    %121 = tpu.matmul %25, %120, %cst_45 {dimension_numbers = #tpu.dot_dimension_numbers<[1], [0], [0], [1], [0, 0, 1, 1], [], []>} : vector<64x32xbf16>, vector<32x128xbf16>, vector<64x128xf32> -> vector<64x128xf32>
    %122 = arith.addf %121, %29 : vector<64x128xf32>
    %123 = vector.extract_strided_slice %122 {offsets = [0, 0], sizes = [32, 128], strides = [1, 1]} : vector<64x128xf32> to vector<32x128xf32>
    %124 = arith.negf %123 : vector<32x128xf32>
    %125 = math.exp %124 : vector<32x128xf32>
    %cst_46 = arith.constant 1.000000e+00 : f32
    %126 = vector.broadcast %cst_46 : f32 to vector<32x128xf32>
    %127 = arith.addf %126, %125 : vector<32x128xf32>
    %128 = arith.divf %126, %127 : vector<32x128xf32>
    %129 = vector.extract_strided_slice %122 {offsets = [32, 0], sizes = [32, 128], strides = [1, 1]} : vector<64x128xf32> to vector<32x128xf32>
    %130 = arith.mulf %128, %129 : vector<32x128xf32>
    %131 = arith.truncf %130 : vector<32x128xf32> to vector<32x128xbf16>
    %cst_47 = arith.constant dense<0.000000e+00> : vector<32x128xf32>
    %132 = tpu.matmul %26, %131, %cst_47 {dimension_numbers = #tpu.dot_dimension_numbers<[1], [0], [0], [1], [0, 0, 1, 1], [], []>} : vector<32x32xbf16>, vector<32x128xbf16>, vector<32x128xf32> -> vector<32x128xf32>
    %133 = vector.extract_strided_slice %24 {offsets = [160, 0], sizes = [32, 128], strides = [1, 1]} : vector<224x128xf32> to vector<32x128xf32>
    %134 = arith.addf %132, %133 : vector<32x128xf32>
    %c0_48 = arith.constant 0 : index
    %c160 = arith.constant 160 : index
    %c0_49 = arith.constant 0 : index
    %135 = vector.load %arg10[%c0_48, %c160, %c0_49] : memref<1x224x128xf32, #tpu.memory_space<vmem>>, vector<1x32x128xf32>
    %136 = vector.shape_cast %135 : vector<1x32x128xf32> to vector<32x128xf32>
    %137 = vector.shape_cast %134 : vector<32x128xf32> to vector<1x32x128xf32>
    tpu.vector_store %arg10[%c0_48, %c160, %c0_49], %137 {strides = array<i32>} : memref<1x224x128xf32, #tpu.memory_space<vmem>>, vector<1x32x128xf32>,
    %138 = vector.extract_strided_slice %2 {offsets = [192, 0], sizes = [32, 128], strides = [1, 1]} : vector<224x128xbf16> to vector<32x128xbf16>
    %cst_50 = arith.constant dense<0.000000e+00> : vector<64x128xf32>
    %139 = tpu.matmul %25, %138, %cst_50 {dimension_numbers = #tpu.dot_dimension_numbers<[1], [0], [0], [1], [0, 0, 1, 1], [], []>} : vector<64x32xbf16>, vector<32x128xbf16>, vector<64x128xf32> -> vector<64x128xf32>
    %140 = arith.addf %139, %29 : vector<64x128xf32>
    %141 = vector.extract_strided_slice %140 {offsets = [0, 0], sizes = [32, 128], strides = [1, 1]} : vector<64x128xf32> to vector<32x128xf32>
    %142 = arith.negf %141 : vector<32x128xf32>
    %143 = math.exp %142 : vector<32x128xf32>
    %cst_51 = arith.constant 1.000000e+00 : f32
    %144 = vector.broadcast %cst_51 : f32 to vector<32x128xf32>
    %145 = arith.addf %144, %143 : vector<32x128xf32>
    %146 = arith.divf %144, %145 : vector<32x128xf32>
    %147 = vector.extract_strided_slice %140 {offsets = [32, 0], sizes = [32, 128], strides = [1, 1]} : vector<64x128xf32> to vector<32x128xf32>
    %148 = arith.mulf %146, %147 : vector<32x128xf32>
    %149 = arith.truncf %148 : vector<32x128xf32> to vector<32x128xbf16>
    %cst_52 = arith.constant dense<0.000000e+00> : vector<32x128xf32>
    %150 = tpu.matmul %26, %149, %cst_52 {dimension_numbers = #tpu.dot_dimension_numbers<[1], [0], [0], [1], [0, 0, 1, 1], [], []>} : vector<32x32xbf16>, vector<32x128xbf16>, vector<32x128xf32> -> vector<32x128xf32>
    %151 = vector.extract_strided_slice %24 {offsets = [192, 0], sizes = [32, 128], strides = [1, 1]} : vector<224x128xf32> to vector<32x128xf32>
    %152 = arith.addf %150, %151 : vector<32x128xf32>
    %c0_53 = arith.constant 0 : index
    %c192 = arith.constant 192 : index
    %c0_54 = arith.constant 0 : index
    %153 = vector.load %arg10[%c0_53, %c192, %c0_54] : memref<1x224x128xf32, #tpu.memory_space<vmem>>, vector<1x32x128xf32>
    %154 = vector.shape_cast %153 : vector<1x32x128xf32> to vector<32x128xf32>
    %155 = vector.shape_cast %152 : vector<32x128xf32> to vector<1x32x128xf32>
    tpu.vector_store %arg10[%c0_53, %c192, %c0_54], %155 {strides = array<i32>} : memref<1x224x128xf32, #tpu.memory_space<vmem>>, vector<1x32x128xf32>,
    return
  }
  func.func @transform_0(%arg0: i32, %arg1: i32) -> (i32, i32, i32) {
    %c0_i32 = arith.constant 0 : i32
    %c0_i32_0 = arith.constant 0 : i32
    return %arg0, %c0_i32, %arg1 : i32, i32, i32
  }
  func.func @transform_1(%arg0: i32, %arg1: i32) -> (i32, i32) {
    %c0_i32 = arith.constant 0 : i32
    %c0_i32_0 = arith.constant 0 : i32
    %c0_i32_1 = arith.constant 0 : i32
    return %c0_i32, %c0_i32_0 : i32, i32
  }
  func.func @transform_2(%arg0: i32, %arg1: i32) -> (i32, i32) {
    %c0_i32 = arith.constant 0 : i32
    %c0_i32_0 = arith.constant 0 : i32
    %c0_i32_1 = arith.constant 0 : i32
    return %c0_i32, %c0_i32_0 : i32, i32
  }
  func.func @transform_3(%arg0: i32, %arg1: i32) -> (i32, i32) {
    %c0_i32 = arith.constant 0 : i32
    %c0_i32_0 = arith.constant 0 : i32
    %c0_i32_1 = arith.constant 0 : i32
    return %c0_i32, %c0_i32_0 : i32, i32
  }
  func.func @transform_4(%arg0: i32, %arg1: i32) -> (i32, i32) {
    %c0_i32 = arith.constant 0 : i32
    %c0_i32_0 = arith.constant 0 : i32
    %c0_i32_1 = arith.constant 0 : i32
    return %c0_i32, %c0_i32_0 : i32, i32
  }
  func.func @transform_5(%arg0: i32, %arg1: i32) -> (i32, i32) {
    %c0_i32 = arith.constant 0 : i32
    %c0_i32_0 = arith.constant 0 : i32
    %c0_i32_1 = arith.constant 0 : i32
    return %c0_i32, %c0_i32_0 : i32, i32
  }
  func.func @transform_6(%arg0: i32, %arg1: i32) -> (i32, i32) {
    %c0_i32 = arith.constant 0 : i32
    %c0_i32_0 = arith.constant 0 : i32
    %c0_i32_1 = arith.constant 0 : i32
    return %c0_i32, %c0_i32_0 : i32, i32
  }
  func.func @transform_7(%arg0: i32, %arg1: i32) -> (i32, i32) {
    %c0_i32 = arith.constant 0 : i32
    %c0_i32_0 = arith.constant 0 : i32
    %c0_i32_1 = arith.constant 0 : i32
    return %c0_i32, %c0_i32_0 : i32, i32
  }
  func.func @transform_8(%arg0: i32, %arg1: i32) -> (i32, i32, i32) {
    %c0_i32 = arith.constant 0 : i32
    %c0_i32_0 = arith.constant 0 : i32
    return %arg0, %c0_i32, %arg1 : i32, i32, i32
  }
}

</mosaic_0001>

<llo_original>
// kernel: epab_pallas.1
$region0: #{epab_pallas.1}
  #allocation0 [shape = 'u32[]', space=smem, size = 0x4, offset = 0x4, fixed_abs, tag = 'smem constant byte address 0x4 - core index']
  #allocation1 [shape = 'u32[144,128]{1,0:T(1,128)}', space=vmem, size = 0x12000, scoped, tag = 'internal scratch']
  %s0 = inlined_call_operand.vmem [shape: f32[2,224,256], index: 0, kind: input, shape index: {}]
  %s1 = inlined_call_operand.vmem [shape: bf16[448,224], index: 1, kind: input, shape index: {}]
  %s2 = inlined_call_operand.vmem [shape: f32[448,1], index: 2, kind: input, shape index: {}]
  %s3 = inlined_call_operand.vmem [shape: bf16[224,224], index: 3, kind: input, shape index: {}]
  %s4 = inlined_call_operand.vmem [shape: f32[224,1], index: 4, kind: input, shape index: {}]
  %s5 = inlined_call_operand.vmem [shape: bf16[64,32], index: 5, kind: input, shape index: {}]
  %s6 = inlined_call_operand.vmem [shape: f32[64,1], index: 6, kind: input, shape index: {}]
  %s7 = inlined_call_operand.vmem [shape: bf16[32,32], index: 7, kind: input, shape index: {}]
  %s8 = inlined_call_operand.vmem [shape: f32[2,224,256], index: 8, kind: output, shape index: {}]
  %s9 = sld [smem:[#allocation0]]
  $region137: #{epab_pallas.1} parent=0
    _
  %s11 = ssub.s32 1, %s9
  %s12 = scalar_select 0, %s11, %s9
  $region1: #{epab_pallas.1} parent=0
    #allocation2 [shape = 'u8[229376]{0}', space=vmem, size = 0x38000, scoped, tag = 'input window, operand 0']
    #allocation3 [shape = 'u8[229376]{0}', space=vmem, size = 0x38000, scoped, tag = 'output window, operand 0']
    loop: start=0, step=1, limit=6
    $region2: #{epab_pallas.1} parent=1 // loop_pre_header
      _
    $region3: #{epab_pallas.1} parent=1 // loop_header
      %s14 = sphi 0, %s18
      %p15 = scmp.ge.s32.totalorder %s14, 6
      %s21 = sphi 0, %s33
      %s22 = sphi 0, %s29
      %s23 = sphi 0, %s21
      %s24 = sphi 0, %s22
      %s25 = sphi 0, %s23
      %s26 = sphi 0, %s24
      %s38 = sphi 0, %s40
      %s41 = sphi 0, %s38
      %s42 = sphi 0, %s41
      %s58 = sphi 0, %s42
      %s62 = sphi 0, %s62
      %s64 = sphi 0, %s62
      %s65 = sphi 0, %s64
      %s79 = sphi 0, %s65
      %s83 = sphi 0, %s83
      %s85 = sphi 0, %s83
      %s86 = sphi 0, %s85
      %s100 = sphi 0, %s86
      %s104 = sphi 0, %s104
      %s106 = sphi 0, %s104
      %s107 = sphi 0, %s106
      %s121 = sphi 0, %s107
      %s125 = sphi 0, %s125
      %s127 = sphi 0, %s125
      %s128 = sphi 0, %s127
      %s142 = sphi 0, %s128
      %s146 = sphi 0, %s146
      %s148 = sphi 0, %s146
      %s149 = sphi 0, %s148
      %s163 = sphi 0, %s149
      %s167 = sphi 0, %s167
      %s169 = sphi 0, %s167
      %s170 = sphi 0, %s169
      %s184 = sphi 0, %s170
      %s188 = sphi 0, %s188
      %s190 = sphi 0, %s188
      %s191 = sphi 0, %s190
      %s205 = sphi 0, %s191
      %s213 = sphi 0, %s215
      %s216 = sphi 0, %s213
      %s217 = sphi 0, %s216
      %s233 = sphi 0, %s217
    $region4: #{epab_pallas.1} parent=1 // loop_header_branch
      %17 = sbr.rel (%p15) target = $region8
    $region5: #{epab_pallas.1} parent=1 // loop_body
      %s19 = ssub.s32 %s14, 1
      %s20 = ssub.s32 %s14, 2
      %s27 = sadd.s32 1, %s22
      %p28 = scmp.ge.s32.totalorder %s27, 2
      %s29 = scalar_select %p28, 0, %s27
      %s30 = sadd.s32 1, %s21
      %s31 = scalar_select %p28, %s30, %s21
      %p32 = scmp.ge.s32.totalorder %s31, 2
      %s33 = scalar_select %p32, 0, %s31
      %s34 = ssub.s32 %s21, %s33
      %s35 = ssub.s32 %s22, %s29
      %s36 = sor.u32 %s34, %s35
      %p37 = scmp.eq.s32.totalorder %s36, 0
      %s39 = sadd.s32 %s38, 1
      %s40 = scalar_select %p37, %s38, %s39
      %p43 = pneg %p37
      %p44 = scmp.eq.s32.totalorder %s14, 3
      %p45 = por %p43, %p44
      %p46 = scmp.ne.s32.totalorder %s38, %s41
      %p47 = scmp.eq.s32.totalorder %s14, 0
      %p48 = por %p46, %p47
      %p49 = scmp.ne.s32.totalorder %s38, %s41
      %p50 = scmp.eq.s32.totalorder %s19, 3
      %p51 = por %p49, %p50
      %p52 = scmp.ne.s32.totalorder %s41, %s42
      %p53 = scmp.eq.s32.totalorder %s19, 0
      %p54 = por %p52, %p53
      %p55 = scmp.ne.s32.totalorder %s41, %s42
      %p56 = scmp.eq.s32.totalorder %s20, 3
      %p57 = por %p55, %p56
      %p59 = scmp.ne.s32.totalorder %s42, %s58
      %p60 = scmp.eq.s32.totalorder %s20, 0
      %p61 = por %p59, %p60
      %s63 = sadd.s32 %s62, 1
      %p66 = scmp.eq.s32.totalorder %s14, 3
      %p67 = scmp.ne.s32.totalorder %s62, %s64
      %p68 = scmp.eq.s32.totalorder %s14, 0
      %p69 = por %p67, %p68
      %p70 = scmp.ne.s32.totalorder %s62, %s64
      %p71 = scmp.eq.s32.totalorder %s19, 3
      %p72 = por %p70, %p71
      %p73 = scmp.ne.s32.totalorder %s64, %s65
      %p74 = scmp.eq.s32.totalorder %s19, 0
      %p75 = por %p73, %p74
      %p76 = scmp.ne.s32.totalorder %s64, %s65
      %p77 = scmp.eq.s32.totalorder %s20, 3
      %p78 = por %p76, %p77
      %p80 = scmp.ne.s32.totalorder %s65, %s79
      %p81 = scmp.eq.s32.totalorder %s20, 0
      %p82 = por %p80, %p81
      %s84 = sadd.s32 %s83, 1
      %p87 = scmp.eq.s32.totalorder %s14, 3
      %p88 = scmp.ne.s32.totalorder %s83, %s85
      %p89 = scmp.eq.s32.totalorder %s14, 0
      %p90 = por %p88, %p89
      %p91 = scmp.ne.s32.totalorder %s83, %s85
      %p92 = scmp.eq.s32.totalorder %s19, 3
      %p93 = por %p91, %p92
      %p94 = scmp.ne.s32.totalorder %s85, %s86
      %p95 = scmp.eq.s32.totalorder %s19, 0
      %p96 = por %p94, %p95
      %p97 = scmp.ne.s32.totalorder %s85, %s86
      %p98 = scmp.eq.s32.totalorder %s20, 3
      %p99 = por %p97, %p98
      %p101 = scmp.ne.s32.totalorder %s86, %s100
      %p102 = scmp.eq.s32.totalorder %s20, 0
      %p103 = por %p101, %p102
      %s105 = sadd.s32 %s104, 1
      %p108 = scmp.eq.s32.totalorder %s14, 3
      %p109 = scmp.ne.s32.totalorder %s104, %s106
      %p110 = scmp.eq.s32.totalorder %s14, 0
      %p111 = por %p109, %p110
      %p112 = scmp.ne.s32.totalorder %s104, %s106
      %p113 = scmp.eq.s32.totalorder %s19, 3
      %p114 = por %p112, %p113
      %p115 = scmp.ne.s32.totalorder %s106, %s107
      %p116 = scmp.eq.s32.totalorder %s19, 0
      %p117 = por %p115, %p116
      %p118 = scmp.ne.s32.totalorder %s106, %s107
      %p119 = scmp.eq.s32.totalorder %s20, 3
      %p120 = por %p118, %p119
      %p122 = scmp.ne.s32.totalorder %s107, %s121
      %p123 = scmp.eq.s32.totalorder %s20, 0
      %p124 = por %p122, %p123
      %s126 = sadd.s32 %s125, 1
      %p129 = scmp.eq.s32.totalorder %s14, 3
      %p130 = scmp.ne.s32.totalorder %s125, %s127
      %p131 = scmp.eq.s32.totalorder %s14, 0
      %p132 = por %p130, %p131
      %p133 = scmp.ne.s32.totalorder %s125, %s127
      %p134 = scmp.eq.s32.totalorder %s19, 3
      %p135 = por %p133, %p134
      %p136 = scmp.ne.s32.totalorder %s127, %s128
      %p137 = scmp.eq.s32.totalorder %s19, 0
      %p138 = por %p136, %p137
      %p139 = scmp.ne.s32.totalorder %s127, %s128
      %p140 = scmp.eq.s32.totalorder %s20, 3
      %p141 = por %p139, %p140
      %p143 = scmp.ne.s32.totalorder %s128, %s142
      %p144 = scmp.eq.s32.totalorder %s20, 0
      %p145 = por %p143, %p144
      %s147 = sadd.s32 %s146, 1
      %p150 = scmp.eq.s32.totalorder %s14, 3
      %p151 = scmp.ne.s32.totalorder %s146, %s148
      %p152 = scmp.eq.s32.totalorder %s14, 0
      %p153 = por %p151, %p152
      %p154 = scmp.ne.s32.totalorder %s146, %s148
      %p155 = scmp.eq.s32.totalorder %s19, 3
      %p156 = por %p154, %p155
      %p157 = scmp.ne.s32.totalorder %s148, %s149
      %p158 = scmp.eq.s32.totalorder %s19, 0
      %p159 = por %p157, %p158
      %p160 = scmp.ne.s32.totalorder %s148, %s149
      %p161 = scmp.eq.s32.totalorder %s20, 3
      %p162 = por %p160, %p161
      %p164 = scmp.ne.s32.totalorder %s149, %s163
      %p165 = scmp.eq.s32.totalorder %s20, 0
      %p166 = por %p164, %p165
      %s168 = sadd.s32 %s167, 1
      %p171 = scmp.eq.s32.totalorder %s14, 3
      %p172 = scmp.ne.s32.totalorder %s167, %s169
      %p173 = scmp.eq.s32.totalorder %s14, 0
      %p174 = por %p172, %p173
      %p175 = scmp.ne.s32.totalorder %s167, %s169
      %p176 = scmp.eq.s32.totalorder %s19, 3
      %p177 = por %p175, %p176
      %p178 = scmp.ne.s32.totalorder %s169, %s170
      %p179 = scmp.eq.s32.totalorder %s19, 0
      %p180 = por %p178, %p179
      %p181 = scmp.ne.s32.totalorder %s169, %s170
      %p182 = scmp.eq.s32.totalorder %s20, 3
      %p183 = por %p181, %p182
      %p185 = scmp.ne.s32.totalorder %s170, %s184
      %p186 = scmp.eq.s32.totalorder %s20, 0
      %p187 = por %p185, %p186
      %s189 = sadd.s32 %s188, 1
      %p192 = scmp.eq.s32.totalorder %s14, 3
      %p193 = scmp.ne.s32.totalorder %s188, %s190
      %p194 = scmp.eq.s32.totalorder %s14, 0
      %p195 = por %p193, %p194
      %p196 = scmp.ne.s32.totalorder %s188, %s190
      %p197 = scmp.eq.s32.totalorder %s19, 3
      %p198 = por %p196, %p197
      %p199 = scmp.ne.s32.totalorder %s190, %s191
      %p200 = scmp.eq.s32.totalorder %s19, 0
      %p201 = por %p199, %p200
      %p202 = scmp.ne.s32.totalorder %s190, %s191
      %p203 = scmp.eq.s32.totalorder %s20, 3
      %p204 = por %p202, %p203
      %p206 = scmp.ne.s32.totalorder %s191, %s205
      %p207 = scmp.eq.s32.totalorder %s20, 0
      %p208 = por %p206, %p207
      %s209 = ssub.s32 %s21, %s33
      %s210 = ssub.s32 %s22, %s29
      %s211 = sor.u32 %s209, %s210
      %p212 = scmp.eq.s32.totalorder %s211, 0
      %s214 = sadd.s32 %s213, 1
      %s215 = scalar_select %p212, %s213, %s214
      %p218 = pneg %p212
      %p219 = scmp.eq.s32.totalorder %s14, 3
      %p220 = por %p218, %p219
      %p221 = scmp.ne.s32.totalorder %s213, %s216
      %p222 = scmp.eq.s32.totalorder %s14, 0
      %p223 = por %p221, %p222
      %p224 = scmp.ne.s32.totalorder %s213, %s216
      %p225 = scmp.eq.s32.totalorder %s19, 3
      %p226 = por %p224, %p225
      %p227 = scmp.ne.s32.totalorder %s216, %s217
      %p228 = scmp.eq.s32.totalorder %s19, 0
      %p229 = por %p227, %p228
      %p230 = scmp.ne.s32.totalorder %s216, %s217
      %p231 = scmp.eq.s32.totalorder %s20, 3
      %p232 = por %p230, %p231
      %p234 = scmp.ne.s32.totalorder %s217, %s233
      %p235 = scmp.eq.s32.totalorder %s20, 0
      %p236 = por %p234, %p235
      %p237 = scmp.le.s32.totalorder 1, %s14
      %p238 = scmp.lt.s32.totalorder %s14, 5
      %p239 = pnand %p237, %p238
      %p240 = pneg %p239
      // Predicated region
      $region9: #{epab_pallas.1} parent=5 // pred_check
        _
      $region10: #{epab_pallas.1} parent=5 // pred_check_branch
        %242 = sbr.rel (%p239) target = $region12
      $region11: #{epab_pallas.1} parent=5 // pred_region
        %s243 = ssub.s32 %s14, 1
        // Predicated region
        $region13: #{epab_pallas.1} parent=11 // pred_check
          %p244 = pneg %p75
        $region14: #{epab_pallas.1} parent=11 // pred_check_branch
          %246 = sbr.rel (%p244) target = $region16
        $region15: #{epab_pallas.1} parent=11 // pred_region
          _
        $region16: #{epab_pallas.1} parent=11 // pred_fallthru
          _
        // Predicated region
        $region17: #{epab_pallas.1} parent=11 // pred_check
          %p247 = pneg %p96
        $region18: #{epab_pallas.1} parent=11 // pred_check_branch
          %249 = sbr.rel (%p247) target = $region20
        $region19: #{epab_pallas.1} parent=11 // pred_region
          _
        $region20: #{epab_pallas.1} parent=11 // pred_fallthru
          _
        // Predicated region
        $region21: #{epab_pallas.1} parent=11 // pred_check
          %p250 = pneg %p117
        $region22: #{epab_pallas.1} parent=11 // pred_check_branch
          %252 = sbr.rel (%p250) target = $region24
        $region23: #{epab_pallas.1} parent=11 // pred_region
          _
        $region24: #{epab_pallas.1} parent=11 // pred_fallthru
          _
        // Predicated region
        $region25: #{epab_pallas.1} parent=11 // pred_check
          %p253 = pneg %p138
        $region26: #{epab_pallas.1} parent=11 // pred_check_branch
          %255 = sbr.rel (%p253) target = $region28
        $region27: #{epab_pallas.1} parent=11 // pred_region
          _
        $region28: #{epab_pallas.1} parent=11 // pred_fallthru
          _
        // Predicated region
        $region29: #{epab_pallas.1} parent=11 // pred_check
          %p256 = pneg %p159
        $region30: #{epab_pallas.1} parent=11 // pred_check_branch
          %258 = sbr.rel (%p256) target = $region32
        $region31: #{epab_pallas.1} parent=11 // pred_region
          _
        $region32: #{epab_pallas.1} parent=11 // pred_fallthru
          _
        // Predicated region
        $region33: #{epab_pallas.1} parent=11 // pred_check
          %p259 = pneg %p180
        $region34: #{epab_pallas.1} parent=11 // pred_check_branch
          %261 = sbr.rel (%p259) target = $region36
        $region35: #{epab_pallas.1} parent=11 // pred_region
          _
        $region36: #{epab_pallas.1} parent=11 // pred_fallthru
          _
        // Predicated region
        $region37: #{epab_pallas.1} parent=11 // pred_check
          %p262 = pneg %p201
        $region38: #{epab_pallas.1} parent=11 // pred_check_branch
          %264 = sbr.rel (%p262) target = $region40
        $region39: #{epab_pallas.1} parent=11 // pred_region
          _
        $region40: #{epab_pallas.1} parent=11 // pred_fallthru
          _
      $region12: #{epab_pallas.1} parent=5 // pred_fallthru
        _
      %p265 = scmp.lt.s32.totalorder %s14, 4
      // Predicated region
      $region41: #{epab_pallas.1} parent=5 // pred_check
        %p266 = pneg %p265
      $region42: #{epab_pallas.1} parent=5 // pred_check_branch
        %268 = sbr.rel (%p266) target = $region44
      $region43: #{epab_pallas.1} parent=5 // pred_region
        // Predicated region
        $region45: #{epab_pallas.1} parent=43 // pred_check
          %p269 = pneg %p48
        $region46: #{epab_pallas.1} parent=43 // pred_check_branch
          %271 = sbr.rel (%p269) target = $region48
        $region47: #{epab_pallas.1} parent=43 // pred_region
          %s272 = sand.u32 %s38, 1
          %s273 = sand.u32 %s38, 1
          %s274 = smul.addr %s273, 224
          %s275 = scalar_lea.vmem [#allocation2], %s274
          %s276 = smul.addr %s21, 56
          %s277 = sadd.s32 %s22, %s276
          %s278 = smul.addr %s277, 8
          %s279 = scalar_lea.vmem %s0, %s278
          // Predicated region
          $region49: #{epab_pallas.1} parent=47 // pred_check
            _
          $region50: #{epab_pallas.1} parent=47 // pred_check_branch
            %281 = sbr.rel (0) target = $region52
          $region51: #{epab_pallas.1} parent=47 // pred_region
            // Predicated region
            $region53: #{epab_pallas.1} parent=51 // pred_check
              _
            $region54: #{epab_pallas.1} parent=51 // pred_check_branch
              %283 = sbr.rel (0) target = $region56
            $region55: #{epab_pallas.1} parent=51 // pred_region
              // Predicated region
              $region68: #{epab_pallas.1} parent=55 // pred_check
                _
              $region69: #{epab_pallas.1} parent=55 // pred_check_branch
                %352 = sbr.rel (0) target = $region71
              $region70: #{epab_pallas.1} parent=55 // pred_region
                loop: start=0, step=1, limit=1
                $region72: #{epab_pallas.1} parent=70 // loop_pre_header
                  _
                $region73: #{epab_pallas.1} parent=70 // loop_header
                  %s354 = sphi 0, %s358
                  %p355 = scmp.ge.s32.totalorder %s354, 1
                  %s359 = sphi %s279, %s279
                  %s360 = sphi %s275, %s275
                $region74: #{epab_pallas.1} parent=70 // loop_header_branch
                  %357 = sbr.rel (%p355) target = $region78
                $region75: #{epab_pallas.1} parent=70 // loop_body
                  %v361 = vld [vmem:[%s359] sm:$0xff]
                  %362 = vst [vmem:[%s360] sm:$0xff] %v361
                  %v363 = vld [vmem:[%s359 + $0x10] sm:$0xff]
                  %364 = vst [vmem:[%s360 + $0x8] sm:$0xff] %v363
                  %v365 = vld [vmem:[%s359 + $0x20] sm:$0xff]
                  %366 = vst [vmem:[%s360 + $0x10] sm:$0xff] %v365
                  %v367 = vld [vmem:[%s359 + $0x30] sm:$0xff]
                  %368 = vst [vmem:[%s360 + $0x18] sm:$0xff] %v367
                  %v369 = vld [vmem:[%s359 + $0x40] sm:$0xff]
                  %370 = vst [vmem:[%s360 + $0x20] sm:$0xff] %v369
                  %v371 = vld [vmem:[%s359 + $0x50] sm:$0xff]
                  %372 = vst [vmem:[%s360 + $0x28] sm:$0xff] %v371
                  %v373 = vld [vmem:[%s359 + $0x60] sm:$0xff]
                  %374 = vst [vmem:[%s360 + $0x30] sm:$0xff] %v373
                  %v375 = vld [vmem:[%s359 + $0x70] sm:$0xff]
                  %376 = vst [vmem:[%s360 + $0x38] sm:$0xff] %v375
                  %v377 = vld [vmem:[%s359 + $0x80] sm:$0xff]
                  %378 = vst [vmem:[%s360 + $0x40] sm:$0xff] %v377
                  %v379 = vld [vmem:[%s359 + $0x90] sm:$0xff]
                  %380 = vst [vmem:[%s360 + $0x48] sm:$0xff] %v379
                  %v381 = vld [vmem:[%s359 + $0xa0] sm:$0xff]
                  %382 = vst [vmem:[%s360 + $0x50] sm:$0xff] %v381
                  %v383 = vld [vmem:[%s359 + $0xb0] sm:$0xff]
                  %384 = vst [vmem:[%s360 + $0x58] sm:$0xff] %v383
                  %v385 = vld [vmem:[%s359 + $0xc0] sm:$0xff]
                  %386 = vst [vmem:[%s360 + $0x60] sm:$0xff] %v385
                  %v387 = vld [vmem:[%s359 + $0xd0] sm:$0xff]
                  %388 = vst [vmem:[%s360 + $0x68] sm:$0xff] %v387
                  %v389 = vld [vmem:[%s359 + $0xe0] sm:$0xff]
                  %390 = vst [vmem:[%s360 + $0x70] sm:$0xff] %v389
                  %v391 = vld [vmem:[%s359 + $0xf0] sm:$0xff]
                  %392 = vst [vmem:[%s360 + $0x78] sm:$0xff] %v391
                  %v393 = vld [vmem:[%s359 + $0x100] sm:$0xff]
                  %394 = vst [vmem:[%s360 + $0x80] sm:$0xff] %v393
                  %v395 = vld [vmem:[%s359 + $0x110] sm:$0xff]
                  %396 = vst [vmem:[%s360 + $0x88] sm:$0xff] %v395
                  %v397 = vld [vmem:[%s359 + $0x120] sm:$0xff]
                  %398 = vst [vmem:[%s360 + $0x90] sm:$0xff] %v397
                  %v399 = vld [vmem:[%s359 + $0x130] sm:$0xff]
                  %400 = vst [vmem:[%s360 + $0x98] sm:$0xff] %v399
                  %v401 = vld [vmem:[%s359 + $0x140] sm:$0xff]
                  %402 = vst [vmem:[%s360 + $0xa0] sm:$0xff] %v401
                  %v403 = vld [vmem:[%s359 + $0x150] sm:$0xff]
                  %404 = vst [vmem:[%s360 + $0xa8] sm:$0xff] %v403
                  %v405 = vld [vmem:[%s359 + $0x160] sm:$0xff]
                  %406 = vst [vmem:[%s360 + $0xb0] sm:$0xff] %v405
                  %v407 = vld [vmem:[%s359 + $0x170] sm:$0xff]
                  %408 = vst [vmem:[%s360 + $0xb8] sm:$0xff] %v407
                  %v409 = vld [vmem:[%s359 + $0x180] sm:$0xff]
                  %410 = vst [vmem:[%s360 + $0xc0] sm:$0xff] %v409
                  %v411 = vld [vmem:[%s359 + $0x190] sm:$0xff]
                  %412 = vst [vmem:[%s360 + $0xc8] sm:$0xff] %v411
                  %v413 = vld [vmem:[%s359 + $0x1a0] sm:$0xff]
                  %414 = vst [vmem:[%s360 + $0xd0] sm:$0xff] %v413
                  %v415 = vld [vmem:[%s359 + $0x1b0] sm:$0xff]
                  %416 = vst [vmem:[%s360 + $0xd8] sm:$0xff] %v415
                $region76: #{epab_pallas.1} parent=70 // loop_footer
                  %s358 = sadd.s32 1, %s354
                $region77: #{epab_pallas.1} parent=70 // loop_footer_branch
                  %353 = sbr.rel target = $region73
                $region78: #{epab_pallas.1} parent=70 // loop_exit
                  _
              $region71: #{epab_pallas.1} parent=55 // pred_fallthru
                _
              // Predicated region
              $region79: #{epab_pallas.1} parent=55 // pred_check
                _
              $region80: #{epab_pallas.1} parent=55 // pred_check_branch
                %418 = sbr.rel target = $region82
              $region81: #{epab_pallas.1} parent=55 // pred_region
                _
              $region82: #{epab_pallas.1} parent=55 // pred_fallthru
                _
            $region56: #{epab_pallas.1} parent=51 // pred_fallthru
              _
            // Predicated region
            $region57: #{epab_pallas.1} parent=51 // pred_check
              _
            $region58: #{epab_pallas.1} parent=51 // pred_check_branch
              %285 = sbr.rel target = $region60
            $region59: #{epab_pallas.1} parent=51 // pred_region
              loop: start=0, step=1, limit=1
              $region61: #{epab_pallas.1} parent=59 // loop_pre_header
                _
              $region62: #{epab_pallas.1} parent=59 // loop_header
                %s288 = sphi 0, %s292
                %p289 = scmp.ge.s32.totalorder %s288, 1
                %s293 = sphi %s279, %s279
                %s294 = sphi %s275, %s275
              $region63: #{epab_pallas.1} parent=59 // loop_header_branch
                %291 = sbr.rel (%p289) target = $region67
              $region64: #{epab_pallas.1} parent=59 // loop_body
                %v295 = vld [vmem:[%s293] sm:$0xff]
                %296 = vst [vmem:[%s294] sm:$0xff] %v295
                %v297 = vld [vmem:[%s293 + $0x10] sm:$0xff]
                %298 = vst [vmem:[%s294 + $0x8] sm:$0xff] %v297
                %v299 = vld [vmem:[%s293 + $0x20] sm:$0xff]
                %300 = vst [vmem:[%s294 + $0x10] sm:$0xff] %v299
                %v301 = vld [vmem:[%s293 + $0x30] sm:$0xff]
                %302 = vst [vmem:[%s294 + $0x18] sm:$0xff] %v301
                %v303 = vld [vmem:[%s293 + $0x40] sm:$0xff]
                %304 = vst [vmem:[%s294 + $0x20] sm:$0xff] %v303
                %v305 = vld [vmem:[%s293 + $0x50] sm:$0xff]
                %306 = vst [vmem:[%s294 + $0x28] sm:$0xff] %v305
                %v307 = vld [vmem:[%s293 + $0x60] sm:$0xff]
                %308 = vst [vmem:[%s294 + $0x30] sm:$0xff] %v307
                %v309 = vld [vmem:[%s293 + $0x70] sm:$0xff]
                %310 = vst [vmem:[%s294 + $0x38] sm:$0xff] %v309
                %v311 = vld [vmem:[%s293 + $0x80] sm:$0xff]
                %312 = vst [vmem:[%s294 + $0x40] sm:$0xff] %v311
                %v313 = vld [vmem:[%s293 + $0x90] sm:$0xff]
                %314 = vst [vmem:[%s294 + $0x48] sm:$0xff] %v313
                %v315 = vld [vmem:[%s293 + $0xa0] sm:$0xff]
                %316 = vst [vmem:[%s294 + $0x50] sm:$0xff] %v315
                %v317 = vld [vmem:[%s293 + $0xb0] sm:$0xff]
                %318 = vst [vmem:[%s294 + $0x58] sm:$0xff] %v317
                %v319 = vld [vmem:[%s293 + $0xc0] sm:$0xff]
                %320 = vst [vmem:[%s294 + $0x60] sm:$0xff] %v319
                %v321 = vld [vmem:[%s293 + $0xd0] sm:$0xff]
                %322 = vst [vmem:[%s294 + $0x68] sm:$0xff] %v321
                %v323 = vld [vmem:[%s293 + $0xe0] sm:$0xff]
                %324 = vst [vmem:[%s294 + $0x70] sm:$0xff] %v323
                %v325 = vld [vmem:[%s293 + $0xf0] sm:$0xff]
                %326 = vst [vmem:[%s294 + $0x78] sm:$0xff] %v325
                %v327 = vld [vmem:[%s293 + $0x100] sm:$0xff]
                %328 = vst [vmem:[%s294 + $0x80] sm:$0xff] %v327
                %v329 = vld [vmem:[%s293 + $0x110] sm:$0xff]
                %330 = vst [vmem:[%s294 + $0x88] sm:$0xff] %v329
                %v331 = vld [vmem:[%s293 + $0x120] sm:$0xff]
                %332 = vst [vmem:[%s294 + $0x90] sm:$0xff] %v331
                %v333 = vld [vmem:[%s293 + $0x130] sm:$0xff]
                %334 = vst [vmem:[%s294 + $0x98] sm:$0xff] %v333
                %v335 = vld [vmem:[%s293 + $0x140] sm:$0xff]
                %336 = vst [vmem:[%s294 + $0xa0] sm:$0xff] %v335
                %v337 = vld [vmem:[%s293 + $0x150] sm:$0xff]
                %338 = vst [vmem:[%s294 + $0xa8] sm:$0xff] %v337
                %v339 = vld [vmem:[%s293 + $0x160] sm:$0xff]
                %340 = vst [vmem:[%s294 + $0xb0] sm:$0xff] %v339
                %v341 = vld [vmem:[%s293 + $0x170] sm:$0xff]
                %342 = vst [vmem:[%s294 + $0xb8] sm:$0xff] %v341
                %v343 = vld [vmem:[%s293 + $0x180] sm:$0xff]
                %344 = vst [vmem:[%s294 + $0xc0] sm:$0xff] %v343
                %v345 = vld [vmem:[%s293 + $0x190] sm:$0xff]
                %346 = vst [vmem:[%s294 + $0xc8] sm:$0xff] %v345
                %v347 = vld [vmem:[%s293 + $0x1a0] sm:$0xff]
                %348 = vst [vmem:[%s294 + $0xd0] sm:$0xff] %v347
                %v349 = vld [vmem:[%s293 + $0x1b0] sm:$0xff]
                %350 = vst [vmem:[%s294 + $0xd8] sm:$0xff] %v349
              $region65: #{epab_pallas.1} parent=59 // loop_footer
                %s292 = sadd.s32 1, %s288
              $region66: #{epab_pallas.1} parent=59 // loop_footer_branch
                %287 = sbr.rel target = $region62
              $region67: #{epab_pallas.1} parent=59 // loop_exit
                _
            $region60: #{epab_pallas.1} parent=51 // pred_fallthru
              _
          $region52: #{epab_pallas.1} parent=47 // pred_fallthru
            _
          %419 = vnop
        $region48: #{epab_pallas.1} parent=43 // pred_fallthru
          _
      $region44: #{epab_pallas.1} parent=5 // pred_fallthru
        _
      %p420 = scmp.le.s32.totalorder 1, %s14
      %p421 = scmp.lt.s32.totalorder %s14, 5
      %p422 = pnand %p420, %p421
      %p423 = pneg %p422
      // Predicated region
      $region83: #{epab_pallas.1} parent=5 // pred_check
        _
      $region84: #{epab_pallas.1} parent=5 // pred_check_branch
        %425 = sbr.rel (%p422) target = $region86
      $region85: #{epab_pallas.1} parent=5 // pred_region
        %s426 = ssub.s32 %s14, 1
        %s427 = sand.u32 %s41, 1
        %s428 = sand.u32 %s41, 1
        %s429 = smul.addr %s428, 224
        %s430 = scalar_lea.vmem [#allocation2], %s429
        // Predicated region
        $region87: #{epab_pallas.1} parent=85 // pred_check
          %p431 = pneg %p54
        $region88: #{epab_pallas.1} parent=85 // pred_check_branch
          %433 = sbr.rel (%p431) target = $region90
        $region89: #{epab_pallas.1} parent=85 // pred_region
          _
        $region90: #{epab_pallas.1} parent=85 // pred_fallthru
          _
        %s434 = sand.u32 %s41, 1
        %s435 = sand.u32 %s41, 1
        %s436 = smul.addr %s435, 224
        %s437 = scalar_lea.vmem [#allocation2], %s436
        %p438 = pneg %p54
        %p439 = pneg %p51
        %p440 = pneg %p75
        %p441 = pneg %p72
        %p442 = pneg %p96
        %p443 = pneg %p93
        %p444 = pneg %p117
        %p445 = pneg %p114
        %p446 = pneg %p138
        %p447 = pneg %p135
        %p448 = pneg %p159
        %p449 = pneg %p156
        %p450 = pneg %p180
        %p451 = pneg %p177
        %p452 = pneg %p201
        %p453 = pneg %p198
        %p454 = pneg %p229
        %p455 = pneg %p226
        %s456 = sand.u32 %s216, 1
        %s457 = sand.u32 %s216, 1
        %s458 = smul.addr %s457, 224
        %s459 = scalar_lea.vmem [#allocation3], %s458
        %v461 = vld [vmem:[%s430] sm:$0xff]
        %v462 = vld [vmem:[%s430 + $0x8] sm:$0xff]
        %v463 = vld [vmem:[%s430 + $0x10] sm:$0xff]
        %v464 = vld [vmem:[%s430 + $0x18] sm:$0xff]
        %v465 = vld [vmem:[%s430 + $0x20] sm:$0xff]
        %v466 = vld [vmem:[%s430 + $0x28] sm:$0xff]
        %v467 = vld [vmem:[%s430 + $0x30] sm:$0xff]
        %v468 = vld [vmem:[%s430 + $0x38] sm:$0xff]
        %v469 = vld [vmem:[%s430 + $0x40] sm:$0xff]
        %v470 = vld [vmem:[%s430 + $0x48] sm:$0xff]
        %v471 = vld [vmem:[%s430 + $0x50] sm:$0xff]
        %v472 = vld [vmem:[%s430 + $0x58] sm:$0xff]
        %v473 = vld [vmem:[%s430 + $0x60] sm:$0xff]
        %v474 = vld [vmem:[%s430 + $0x68] sm:$0xff]
        %v475 = vld [vmem:[%s430 + $0x70] sm:$0xff]
        %v476 = vld [vmem:[%s430 + $0x78] sm:$0xff]
        %v477 = vld [vmem:[%s430 + $0x80] sm:$0xff]
        %v478 = vld [vmem:[%s430 + $0x88] sm:$0xff]
        %v479 = vld [vmem:[%s430 + $0x90] sm:$0xff]
        %v480 = vld [vmem:[%s430 + $0x98] sm:$0xff]
        %v481 = vld [vmem:[%s430 + $0xa0] sm:$0xff]
        %v482 = vld [vmem:[%s430 + $0xa8] sm:$0xff]
        %v483 = vld [vmem:[%s430 + $0xb0] sm:$0xff]
        %v484 = vld [vmem:[%s430 + $0xb8] sm:$0xff]
        %v485 = vld [vmem:[%s430 + $0xc0] sm:$0xff]
        %v486 = vld [vmem:[%s430 + $0xc8] sm:$0xff]
        %v487 = vld [vmem:[%s430 + $0xd0] sm:$0xff]
        %v488 = vld [vmem:[%s430 + $0xd8] sm:$0xff]
        %v489 = vpack.c.bf16 %v462, %v461
        %v490 = vpack.c.bf16 %v464, %v463
        %v491 = vpack.c.bf16 %v466, %v465
        %v492 = vpack.c.bf16 %v468, %v467
        %v493 = vpack.c.bf16 %v470, %v469
        %v494 = vpack.c.bf16 %v472, %v471
        %v495 = vpack.c.bf16 %v474, %v473
        %v496 = vpack.c.bf16 %v476, %v475
        %v497 = vpack.c.bf16 %v478, %v477
        %v498 = vpack.c.bf16 %v480, %v479
        %v499 = vpack.c.bf16 %v482, %v481
        %v500 = vpack.c.bf16 %v484, %v483
        %v501 = vpack.c.bf16 %v486, %v485
        %v502 = vpack.c.bf16 %v488, %v487
        %v503 = vld [vmem:[%s1] sm:$0xff]
        %v504 = vld [vmem:[%s1 + $0x8] sm:$0xff]
        %v505 = vld [vmem:[%s1 + $0x10] sm:$0xff]
        %v506 = vld [vmem:[%s1 + $0x18] sm:$0xff]
        %v507 = vld [vmem:[%s1 + $0x20] sm:$0xff]
        %v508 = vld [vmem:[%s1 + $0x28] sm:$0xff]
        %v509 = vld [vmem:[%s1 + $0x30] sm:$0xff]
        %v510 = vld [vmem:[%s1 + $0x38] sm:$0xff]
        %v511 = vld [vmem:[%s1 + $0x40] sm:$0xff]
        %v512 = vld [vmem:[%s1 + $0x48] sm:$0xff]
        %v513 = vld [vmem:[%s1 + $0x50] sm:$0xff]
        %v514 = vld [vmem:[%s1 + $0x58] sm:$0xff]
        %v515 = vld [vmem:[%s1 + $0x60] sm:$0xff]
        %v516 = vld [vmem:[%s1 + $0x68] sm:$0xff]
        %v517 = vld [vmem:[%s1 + $0x70] sm:$0xff]
        %v518 = vld [vmem:[%s1 + $0x78] sm:$0xff]
        %v519 = vld [vmem:[%s1 + $0x80] sm:$0xff]
        %v520 = vld [vmem:[%s1 + $0x88] sm:$0xff]
        %v521 = vld [vmem:[%s1 + $0x90] sm:$0xff]
        %v522 = vld [vmem:[%s1 + $0x98] sm:$0xff]
        %v523 = vld [vmem:[%s1 + $0xa0] sm:$0xff]
        %v524 = vld [vmem:[%s1 + $0xa8] sm:$0xff]
        %v525 = vld [vmem:[%s1 + $0xb0] sm:$0xff]
        %v526 = vld [vmem:[%s1 + $0xb8] sm:$0xff]
        %v527 = vld [vmem:[%s1 + $0xc0] sm:$0xff]
        %v528 = vld [vmem:[%s1 + $0xc8] sm:$0xff]
        %v529 = vld [vmem:[%s1 + $0xd0] sm:$0xff]
        %v530 = vld [vmem:[%s1 + $0xd8] sm:$0xff]
        %v531 = vld [vmem:[%s1 + $0xe0] sm:$0xff]
        %v532 = vld [vmem:[%s1 + $0xe8] sm:$0xff]
        %v533 = vld [vmem:[%s1 + $0xf0] sm:$0xff]
        %v534 = vld [vmem:[%s1 + $0xf8] sm:$0xff]
        %v535 = vld [vmem:[%s1 + $0x100] sm:$0xff]
        %v536 = vld [vmem:[%s1 + $0x108] sm:$0xff]
        %v537 = vld [vmem:[%s1 + $0x110] sm:$0xff]
        %v538 = vld [vmem:[%s1 + $0x118] sm:$0xff]
        %v539 = vld [vmem:[%s1 + $0x120] sm:$0xff]
        %v540 = vld [vmem:[%s1 + $0x128] sm:$0xff]
        %v541 = vld [vmem:[%s1 + $0x130] sm:$0xff]
        %v542 = vld [vmem:[%s1 + $0x138] sm:$0xff]
        %v543 = vld [vmem:[%s1 + $0x140] sm:$0xff]
        %v544 = vld [vmem:[%s1 + $0x148] sm:$0xff]
        %v545 = vld [vmem:[%s1 + $0x150] sm:$0xff]
        %v546 = vld [vmem:[%s1 + $0x158] sm:$0xff]
        %v547 = vld [vmem:[%s1 + $0x160] sm:$0xff]
        %v548 = vld [vmem:[%s1 + $0x168] sm:$0xff]
        %v549 = vld [vmem:[%s1 + $0x170] sm:$0xff]
        %v550 = vld [vmem:[%s1 + $0x178] sm:$0xff]
        %v551 = vld [vmem:[%s1 + $0x180] sm:$0xff]
        %v552 = vld [vmem:[%s1 + $0x188] sm:$0xff]
        %v553 = vld [vmem:[%s1 + $0x190] sm:$0xff]
        %v554 = vld [vmem:[%s1 + $0x198] sm:$0xff]
        %v555 = vld [vmem:[%s1 + $0x1a0] sm:$0xff]
        %v556 = vld [vmem:[%s1 + $0x1a8] sm:$0xff]
        %v557 = vld [vmem:[%s1 + $0x1b0] sm:$0xff]
        %v558 = vld [vmem:[%s1 + $0x1b8] sm:$0xff]
        %v559 = vld [vmem:[%s2] sm:$0xff]
        %v560 = vld [vmem:[%s2 + $0x8] sm:$0xff]
        %v561 = vld [vmem:[%s2 + $0x10] sm:$0xff]
        %v562 = vld [vmem:[%s2 + $0x18] sm:$0xff]
        %v563 = vld [vmem:[%s2 + $0x20] sm:$0xff]
        %v564 = vld [vmem:[%s2 + $0x28] sm:$0xff]
        %v565 = vld [vmem:[%s2 + $0x30] sm:$0xff]
        %v566 = vld [vmem:[%s2 + $0x38] sm:$0xff]
        %v567 = vld [vmem:[%s2 + $0x40] sm:$0xff]
        %v568 = vld [vmem:[%s2 + $0x48] sm:$0xff]
        %v569 = vld [vmem:[%s2 + $0x50] sm:$0xff]
        %v570 = vld [vmem:[%s2 + $0x58] sm:$0xff]
        %v571 = vld [vmem:[%s2 + $0x60] sm:$0xff]
        %v572 = vld [vmem:[%s2 + $0x68] sm:$0xff]
        %v573 = vld [vmem:[%s2 + $0x70] sm:$0xff]
        %v574 = vld [vmem:[%s2 + $0x78] sm:$0xff]
        %v575 = vld [vmem:[%s2 + $0x80] sm:$0xff]
        %v576 = vld [vmem:[%s2 + $0x88] sm:$0xff]
        %v577 = vld [vmem:[%s2 + $0x90] sm:$0xff]
        %v578 = vld [vmem:[%s2 + $0x98] sm:$0xff]
        %v579 = vld [vmem:[%s2 + $0xa0] sm:$0xff]
        %v580 = vld [vmem:[%s2 + $0xa8] sm:$0xff]
        %v581 = vld [vmem:[%s2 + $0xb0] sm:$0xff]
        %v582 = vld [vmem:[%s2 + $0xb8] sm:$0xff]
        %v583 = vld [vmem:[%s2 + $0xc0] sm:$0xff]
        %v584 = vld [vmem:[%s2 + $0xc8] sm:$0xff]
        %v585 = vld [vmem:[%s2 + $0xd0] sm:$0xff]
        %v586 = vld [vmem:[%s2 + $0xd8] sm:$0xff]
        %v587 = vld [vmem:[%s2 + $0xe0] sm:$0xff]
        %v588 = vld [vmem:[%s2 + $0xe8] sm:$0xff]
        %v589 = vld [vmem:[%s2 + $0xf0] sm:$0xff]
        %v590 = vld [vmem:[%s2 + $0xf8] sm:$0xff]
        %v591 = vld [vmem:[%s2 + $0x100] sm:$0xff]
        %v592 = vld [vmem:[%s2 + $0x108] sm:$0xff]
        %v593 = vld [vmem:[%s2 + $0x110] sm:$0xff]
        %v594 = vld [vmem:[%s2 + $0x118] sm:$0xff]
        %v595 = vld [vmem:[%s2 + $0x120] sm:$0xff]
        %v596 = vld [vmem:[%s2 + $0x128] sm:$0xff]
        %v597 = vld [vmem:[%s2 + $0x130] sm:$0xff]
        %v598 = vld [vmem:[%s2 + $0x138] sm:$0xff]
        %v599 = vld [vmem:[%s2 + $0x140] sm:$0xff]
        %v600 = vld [vmem:[%s2 + $0x148] sm:$0xff]
        %v601 = vld [vmem:[%s2 + $0x150] sm:$0xff]
        %v602 = vld [vmem:[%s2 + $0x158] sm:$0xff]
        %v603 = vld [vmem:[%s2 + $0x160] sm:$0xff]
        %v604 = vld [vmem:[%s2 + $0x168] sm:$0xff]
        %v605 = vld [vmem:[%s2 + $0x170] sm:$0xff]
        %v606 = vld [vmem:[%s2 + $0x178] sm:$0xff]
        %v607 = vld [vmem:[%s2 + $0x180] sm:$0xff]
        %v608 = vld [vmem:[%s2 + $0x188] sm:$0xff]
        %v609 = vld [vmem:[%s2 + $0x190] sm:$0xff]
        %v610 = vld [vmem:[%s2 + $0x198] sm:$0xff]
        %v611 = vld [vmem:[%s2 + $0x1a0] sm:$0xff]
        %v612 = vld [vmem:[%s2 + $0x1a8] sm:$0xff]
        %v613 = vld [vmem:[%s2 + $0x1b0] sm:$0xff]
        %v614 = vld [vmem:[%s2 + $0x1b8] sm:$0xff]
        %616 = vset.pattern.permute.xlu0 0
        %617 = vperm.xlu0 %616, %v559
        %v618 = vpop.permute.xlu0 %617
        %621 = vset.pattern.permute.xlu0 0
        %622 = vperm.xlu0 %621, %v560
        %v623 = vpop.permute.xlu0 %622
        %626 = vset.pattern.permute.xlu0 0
        %627 = vperm.xlu0 %626, %v561
        %v628 = vpop.permute.xlu0 %627
        %631 = vset.pattern.permute.xlu0 0
        %632 = vperm.xlu0 %631, %v562
        %v633 = vpop.permute.xlu0 %632
        %636 = vset.pattern.permute.xlu0 0
        %637 = vperm.xlu0 %636, %v563
        %v638 = vpop.permute.xlu0 %637
        %641 = vset.pattern.permute.xlu0 0
        %642 = vperm.xlu0 %641, %v564
        %v643 = vpop.permute.xlu0 %642
        %646 = vset.pattern.permute.xlu0 0
        %647 = vperm.xlu0 %646, %v565
        %v648 = vpop.permute.xlu0 %647
        %651 = vset.pattern.permute.xlu0 0
        %652 = vperm.xlu0 %651, %v566
        %v653 = vpop.permute.xlu0 %652
        %656 = vset.pattern.permute.xlu0 0
        %657 = vperm.xlu0 %656, %v567
        %v658 = vpop.permute.xlu0 %657
        %661 = vset.pattern.permute.xlu0 0
        %662 = vperm.xlu0 %661, %v568
        %v663 = vpop.permute.xlu0 %662
        %666 = vset.pattern.permute.xlu0 0
        %667 = vperm.xlu0 %666, %v569
        %v668 = vpop.permute.xlu0 %667
        %671 = vset.pattern.permute.xlu0 0
        %672 = vperm.xlu0 %671, %v570
        %v673 = vpop.permute.xlu0 %672
        %676 = vset.pattern.permute.xlu0 0
        %677 = vperm.xlu0 %676, %v571
        %v678 = vpop.permute.xlu0 %677
        %681 = vset.pattern.permute.xlu0 0
        %682 = vperm.xlu0 %681, %v572
        %v683 = vpop.permute.xlu0 %682
        %686 = vset.pattern.permute.xlu0 0
        %687 = vperm.xlu0 %686, %v573
        %v688 = vpop.permute.xlu0 %687
        %691 = vset.pattern.permute.xlu0 0
        %692 = vperm.xlu0 %691, %v574
        %v693 = vpop.permute.xlu0 %692
        %696 = vset.pattern.permute.xlu0 0
        %697 = vperm.xlu0 %696, %v575
        %v698 = vpop.permute.xlu0 %697
        %701 = vset.pattern.permute.xlu0 0
        %702 = vperm.xlu0 %701, %v576
        %v703 = vpop.permute.xlu0 %702
        %706 = vset.pattern.permute.xlu0 0
        %707 = vperm.xlu0 %706, %v577
        %v708 = vpop.permute.xlu0 %707
        %711 = vset.pattern.permute.xlu0 0
        %712 = vperm.xlu0 %711, %v578
        %v713 = vpop.permute.xlu0 %712
        %716 = vset.pattern.permute.xlu0 0
        %717 = vperm.xlu0 %716, %v579
        %v718 = vpop.permute.xlu0 %717
        %721 = vset.pattern.permute.xlu0 0
        %722 = vperm.xlu0 %721, %v580
        %v723 = vpop.permute.xlu0 %722
        %726 = vset.pattern.permute.xlu0 0
        %727 = vperm.xlu0 %726, %v581
        %v728 = vpop.permute.xlu0 %727
        %731 = vset.pattern.permute.xlu0 0
        %732 = vperm.xlu0 %731, %v582
        %v733 = vpop.permute.xlu0 %732
        %736 = vset.pattern.permute.xlu0 0
        %737 = vperm.xlu0 %736, %v583
        %v738 = vpop.permute.xlu0 %737
        %741 = vset.pattern.permute.xlu0 0
        %742 = vperm.xlu0 %741, %v584
        %v743 = vpop.permute.xlu0 %742
        %746 = vset.pattern.permute.xlu0 0
        %747 = vperm.xlu0 %746, %v585
        %v748 = vpop.permute.xlu0 %747
        %751 = vset.pattern.permute.xlu0 0
        %752 = vperm.xlu0 %751, %v586
        %v753 = vpop.permute.xlu0 %752
        %756 = vset.pattern.permute.xlu0 0
        %757 = vperm.xlu0 %756, %v587
        %v758 = vpop.permute.xlu0 %757
        %761 = vset.pattern.permute.xlu0 0
        %762 = vperm.xlu0 %761, %v588
        %v763 = vpop.permute.xlu0 %762
        %766 = vset.pattern.permute.xlu0 0
        %767 = vperm.xlu0 %766, %v589
        %v768 = vpop.permute.xlu0 %767
        %771 = vset.pattern.permute.xlu0 0
        %772 = vperm.xlu0 %771, %v590
        %v773 = vpop.permute.xlu0 %772
        %776 = vset.pattern.permute.xlu0 0
        %777 = vperm.xlu0 %776, %v591
        %v778 = vpop.permute.xlu0 %777
        %781 = vset.pattern.permute.xlu0 0
        %782 = vperm.xlu0 %781, %v592
        %v783 = vpop.permute.xlu0 %782
        %786 = vset.pattern.permute.xlu0 0
        %787 = vperm.xlu0 %786, %v593
        %v788 = vpop.permute.xlu0 %787
        %791 = vset.pattern.permute.xlu0 0
        %792 = vperm.xlu0 %791, %v594
        %v793 = vpop.permute.xlu0 %792
        %796 = vset.pattern.permute.xlu0 0
        %797 = vperm.xlu0 %796, %v595
        %v798 = vpop.permute.xlu0 %797
        %801 = vset.pattern.permute.xlu0 0
        %802 = vperm.xlu0 %801, %v596
        %v803 = vpop.permute.xlu0 %802
        %806 = vset.pattern.permute.xlu0 0
        %807 = vperm.xlu0 %806, %v597
        %v808 = vpop.permute.xlu0 %807
        %811 = vset.pattern.permute.xlu0 0
        %812 = vperm.xlu0 %811, %v598
        %v813 = vpop.permute.xlu0 %812
        %816 = vset.pattern.permute.xlu0 0
        %817 = vperm.xlu0 %816, %v599
        %v818 = vpop.permute.xlu0 %817
        %821 = vset.pattern.permute.xlu0 0
        %822 = vperm.xlu0 %821, %v600
        %v823 = vpop.permute.xlu0 %822
        %826 = vset.pattern.permute.xlu0 0
        %827 = vperm.xlu0 %826, %v601
        %v828 = vpop.permute.xlu0 %827
        %831 = vset.pattern.permute.xlu0 0
        %832 = vperm.xlu0 %831, %v602
        %v833 = vpop.permute.xlu0 %832
        %836 = vset.pattern.permute.xlu0 0
        %837 = vperm.xlu0 %836, %v603
        %v838 = vpop.permute.xlu0 %837
        %841 = vset.pattern.permute.xlu0 0
        %842 = vperm.xlu0 %841, %v604
        %v843 = vpop.permute.xlu0 %842
        %846 = vset.pattern.permute.xlu0 0
        %847 = vperm.xlu0 %846, %v605
        %v848 = vpop.permute.xlu0 %847
        %851 = vset.pattern.permute.xlu0 0
        %852 = vperm.xlu0 %851, %v606
        %v853 = vpop.permute.xlu0 %852
        %856 = vset.pattern.permute.xlu0 0
        %857 = vperm.xlu0 %856, %v607
        %v858 = vpop.permute.xlu0 %857
        %861 = vset.pattern.permute.xlu0 0
        %862 = vperm.xlu0 %861, %v608
        %v863 = vpop.permute.xlu0 %862
        %866 = vset.pattern.permute.xlu0 0
        %867 = vperm.xlu0 %866, %v609
        %v868 = vpop.permute.xlu0 %867
        %871 = vset.pattern.permute.xlu0 0
        %872 = vperm.xlu0 %871, %v610
        %v873 = vpop.permute.xlu0 %872
        %876 = vset.pattern.permute.xlu0 0
        %877 = vperm.xlu0 %876, %v611
        %v878 = vpop.permute.xlu0 %877
        %881 = vset.pattern.permute.xlu0 0
        %882 = vperm.xlu0 %881, %v612
        %v883 = vpop.permute.xlu0 %882
        %886 = vset.pattern.permute.xlu0 0
        %887 = vperm.xlu0 %886, %v613
        %v888 = vpop.permute.xlu0 %887
        %891 = vset.pattern.permute.xlu0 0
        %892 = vperm.xlu0 %891, %v614
        %v893 = vpop.permute.xlu0 %892
        %v951 = vunpack.c.l.b16 %v503
        %v952 = vunpack.c.h.b16 %v503
        %v953 = vunpack.c.l.b16 %v504
        %v954 = vunpack.c.h.b16 %v504
        %v955 = vunpack.c.l.b16 %v505
        %v956 = vunpack.c.h.b16 %v505
        %v957 = vunpack.c.l.b16 %v506
        %v958 = vunpack.c.h.b16 %v506
        %v959 = vunpack.c.l.b16 %v507
        %v960 = vunpack.c.h.b16 %v507
        %v961 = vunpack.c.l.b16 %v508
        %v962 = vunpack.c.h.b16 %v508
        %v963 = vunpack.c.l.b16 %v509
        %v964 = vunpack.c.h.b16 %v509
        %v965 = vunpack.c.l.b16 %v510
        %v966 = vunpack.c.h.b16 %v510
        %v967 = vunpack.c.l.b16 %v511
        %v968 = vunpack.c.h.b16 %v511
        %v969 = vunpack.c.l.b16 %v512
        %v970 = vunpack.c.h.b16 %v512
        %v971 = vunpack.c.l.b16 %v513
        %v972 = vunpack.c.h.b16 %v513
        %v973 = vunpack.c.l.b16 %v514
        %v974 = vunpack.c.h.b16 %v514
        %v975 = vunpack.c.l.b16 %v515
        %v976 = vunpack.c.h.b16 %v515
        %v977 = vunpack.c.l.b16 %v516
        %v978 = vunpack.c.h.b16 %v516
        %v979 = vunpack.c.l.b16 %v517
        %v980 = vunpack.c.h.b16 %v517
        %v981 = vunpack.c.l.b16 %v518
        %v982 = vunpack.c.h.b16 %v518
        %v983 = vunpack.c.l.b16 %v519
        %v984 = vunpack.c.h.b16 %v519
        %v985 = vunpack.c.l.b16 %v520
        %v986 = vunpack.c.h.b16 %v520
        %v987 = vunpack.c.l.b16 %v521
        %v988 = vunpack.c.h.b16 %v521
        %v989 = vunpack.c.l.b16 %v522
        %v990 = vunpack.c.h.b16 %v522
        %v991 = vunpack.c.l.b16 %v523
        %v992 = vunpack.c.h.b16 %v523
        %v993 = vunpack.c.l.b16 %v524
        %v994 = vunpack.c.h.b16 %v524
        %v995 = vunpack.c.l.b16 %v525
        %v996 = vunpack.c.h.b16 %v525
        %v997 = vunpack.c.l.b16 %v526
        %v998 = vunpack.c.h.b16 %v526
        %v999 = vunpack.c.l.b16 %v527
        %v1000 = vunpack.c.h.b16 %v527
        %v1001 = vunpack.c.l.b16 %v528
        %v1002 = vunpack.c.h.b16 %v528
        %v1003 = vunpack.c.l.b16 %v529
        %v1004 = vunpack.c.h.b16 %v529
        %v1005 = vunpack.c.l.b16 %v530
        %v1006 = vunpack.c.h.b16 %v530
        %v1007 = vunpack.c.l.b16 %v531
        %v1008 = vunpack.c.h.b16 %v531
        %v1009 = vunpack.c.l.b16 %v532
        %v1010 = vunpack.c.h.b16 %v532
        %v1011 = vunpack.c.l.b16 %v533
        %v1012 = vunpack.c.h.b16 %v533
        %v1013 = vunpack.c.l.b16 %v534
        %v1014 = vunpack.c.h.b16 %v534
        %v1015 = vunpack.c.l.b16 %v535
        %v1016 = vunpack.c.h.b16 %v535
        %v1017 = vunpack.c.l.b16 %v536
        %v1018 = vunpack.c.h.b16 %v536
        %v1019 = vunpack.c.l.b16 %v537
        %v1020 = vunpack.c.h.b16 %v537
        %v1021 = vunpack.c.l.b16 %v538
        %v1022 = vunpack.c.h.b16 %v538
        %v1023 = vunpack.c.l.b16 %v539
        %v1024 = vunpack.c.h.b16 %v539
        %v1025 = vunpack.c.l.b16 %v540
        %v1026 = vunpack.c.h.b16 %v540
        %v1027 = vunpack.c.l.b16 %v541
        %v1028 = vunpack.c.h.b16 %v541
        %v1029 = vunpack.c.l.b16 %v542
        %v1030 = vunpack.c.h.b16 %v542
        %v1031 = vunpack.c.l.b16 %v543
        %v1032 = vunpack.c.h.b16 %v543
        %v1033 = vunpack.c.l.b16 %v544
        %v1034 = vunpack.c.h.b16 %v544
        %v1035 = vunpack.c.l.b16 %v545
        %v1036 = vunpack.c.h.b16 %v545
        %v1037 = vunpack.c.l.b16 %v546
        %v1038 = vunpack.c.h.b16 %v546
        %v1039 = vunpack.c.l.b16 %v547
        %v1040 = vunpack.c.h.b16 %v547
        %v1041 = vunpack.c.l.b16 %v548
        %v1042 = vunpack.c.h.b16 %v548
        %v1043 = vunpack.c.l.b16 %v549
        %v1044 = vunpack.c.h.b16 %v549
        %v1045 = vunpack.c.l.b16 %v550
        %v1046 = vunpack.c.h.b16 %v550
        %v1047 = vunpack.c.l.b16 %v551
        %v1048 = vunpack.c.h.b16 %v551
        %v1049 = vunpack.c.l.b16 %v552
        %v1050 = vunpack.c.h.b16 %v552
        %v1051 = vunpack.c.l.b16 %v553
        %v1052 = vunpack.c.h.b16 %v553
        %v1053 = vunpack.c.l.b16 %v554
        %v1054 = vunpack.c.h.b16 %v554
        %v1055 = vunpack.c.l.b16 %v555
        %v1056 = vunpack.c.h.b16 %v555
        %v1057 = vunpack.c.l.b16 %v556
        %v1058 = vunpack.c.h.b16 %v556
        %v1059 = vunpack.c.l.b16 %v557
        %v1060 = vunpack.c.h.b16 %v557
        %v1061 = vunpack.c.l.b16 %v558
        %v1062 = vunpack.c.h.b16 %v558
        %v1063 = vpack.c.b16 %v953, %v951
        %v1064 = vpack.c.b16 %v954, %v952
        %v1065 = vpack.c.b16 %v957, %v955
        %v1066 = vpack.c.b16 %v958, %v956
        %v1067 = vpack.c.b16 %v961, %v959
        %v1068 = vpack.c.b16 %v962, %v960
        %v1069 = vpack.c.b16 %v965, %v963
        %v1070 = vpack.c.b16 %v966, %v964
        %v1071 = vpack.c.b16 %v969, %v967
        %v1072 = vpack.c.b16 %v970, %v968
        %v1073 = vpack.c.b16 %v973, %v971
        %v1074 = vpack.c.b16 %v974, %v972
        %v1075 = vpack.c.b16 %v977, %v975
        %v1076 = vpack.c.b16 %v978, %v976
        %v1077 = vpack.c.b16 %v981, %v979
        %v1078 = vpack.c.b16 %v982, %v980
        %v1079 = vpack.c.b16 %v985, %v983
        %v1080 = vpack.c.b16 %v986, %v984
        %v1081 = vpack.c.b16 %v989, %v987
        %v1082 = vpack.c.b16 %v990, %v988
        %v1083 = vpack.c.b16 %v993, %v991
        %v1084 = vpack.c.b16 %v994, %v992
        %v1085 = vpack.c.b16 %v997, %v995
        %v1086 = vpack.c.b16 %v998, %v996
        %v1087 = vpack.c.b16 %v1001, %v999
        %v1088 = vpack.c.b16 %v1002, %v1000
        %v1089 = vpack.c.b16 %v1005, %v1003
        %v1090 = vpack.c.b16 %v1006, %v1004
        %v1091 = vpack.c.b16 %v1009, %v1007
        %v1092 = vpack.c.b16 %v1010, %v1008
        %v1093 = vpack.c.b16 %v1013, %v1011
        %v1094 = vpack.c.b16 %v1014, %v1012
        %v1095 = vpack.c.b16 %v1017, %v1015
        %v1096 = vpack.c.b16 %v1018, %v1016
        %v1097 = vpack.c.b16 %v1021, %v1019
        %v1098 = vpack.c.b16 %v1022, %v1020
        %v1099 = vpack.c.b16 %v1025, %v1023
        %v1100 = vpack.c.b16 %v1026, %v1024
        %v1101 = vpack.c.b16 %v1029, %v1027
        %v1102 = vpack.c.b16 %v1030, %v1028
        %v1103 = vpack.c.b16 %v1033, %v1031
        %v1104 = vpack.c.b16 %v1034, %v1032
        %v1105 = vpack.c.b16 %v1037, %v1035
        %v1106 = vpack.c.b16 %v1038, %v1036
        %v1107 = vpack.c.b16 %v1041, %v1039
        %v1108 = vpack.c.b16 %v1042, %v1040
        %v1109 = vpack.c.b16 %v1045, %v1043
        %v1110 = vpack.c.b16 %v1046, %v1044
        %v1111 = vpack.c.b16 %v1049, %v1047
        %v1112 = vpack.c.b16 %v1050, %v1048
        %v1113 = vpack.c.b16 %v1053, %v1051
        %v1114 = vpack.c.b16 %v1054, %v1052
        %v1115 = vpack.c.b16 %v1057, %v1055
        %v1116 = vpack.c.b16 %v1058, %v1056
        %v1117 = vpack.c.b16 %v1061, %v1059
        %v1118 = vpack.c.b16 %v1062, %v1060
        %vm1147 = vcmask 785408
        %v1149 = vsel %vm1147, %v1064, 0
        %v1152 = vsel %vm1147, %v1066, 0
        %v1155 = vsel %vm1147, %v1068, 0
        %v1158 = vsel %vm1147, %v1070, 0
        %v1161 = vsel %vm1147, %v1072, 0
        %v1164 = vsel %vm1147, %v1074, 0
        %v1167 = vsel %vm1147, %v1076, 0
        %v1170 = vsel %vm1147, %v1078, 0
        %v1173 = vsel %vm1147, %v1080, 0
        %v1176 = vsel %vm1147, %v1082, 0
        %v1179 = vsel %vm1147, %v1084, 0
        %v1182 = vsel %vm1147, %v1086, 0
        %v1185 = vsel %vm1147, %v1088, 0
        %v1188 = vsel %vm1147, %v1090, 0
        %v1191 = vsel %vm1147, %v1092, 0
        %v1194 = vsel %vm1147, %v1094, 0
        %v1197 = vsel %vm1147, %v1096, 0
        %v1200 = vsel %vm1147, %v1098, 0
        %v1203 = vsel %vm1147, %v1100, 0
        %v1206 = vsel %vm1147, %v1102, 0
        %v1209 = vsel %vm1147, %v1104, 0
        %v1212 = vsel %vm1147, %v1106, 0
        %v1215 = vsel %vm1147, %v1108, 0
        %v1218 = vsel %vm1147, %v1110, 0
        %v1221 = vsel %vm1147, %v1112, 0
        %v1224 = vsel %vm1147, %v1114, 0
        %v1227 = vsel %vm1147, %v1116, 0
        %v1230 = vsel %vm1147, %v1118, 0
        %1232 = vmatprep.subr.bf16.mxu0 0
        %1233 = vmatpush1.bf16.msra.mxu0 %v489
        %1234 = vmatprep.subr.bf16.mxu0 0
        %1235 = vmatpush1.bf16.msra.mxu0 %v490
        %1236 = vmatprep.subr.bf16.mxu0 0
        %1237 = vmatpush1.bf16.msra.mxu0 %v491
        %1238 = vmatprep.subr.bf16.mxu0 0
        %1239 = vmatpush1.bf16.msra.mxu0 %v492
        %1240 = vmatprep.subr.bf16.mxu0 0
        %1241 = vmatpush1.bf16.msra.mxu0 %v493
        %1242 = vmatprep.subr.bf16.mxu0 0
        %1243 = vmatpush1.bf16.msra.mxu0 %v494
        %1244 = vmatprep.subr.bf16.mxu0 0
        %1245 = vmatpush1.bf16.msra.mxu0 %v495
        %1246 = vmatprep.subr.bf16.mxu0 0
        %1247 = vmatpush1.bf16.msra.mxu0 %v496
        %1248 = vmatprep.subr.bf16.mxu0 0
        %1249 = vmatpush1.bf16.msra.mxu0 %v497
        %1250 = vmatprep.subr.bf16.mxu0 0
        %1251 = vmatpush1.bf16.msra.mxu0 %v498
        %1252 = vmatprep.subr.bf16.mxu0 0
        %1253 = vmatpush1.bf16.msra.mxu0 %v499
        %1254 = vmatprep.subr.bf16.mxu0 0
        %1255 = vmatpush1.bf16.msra.mxu0 %v500
        %1256 = vmatprep.subr.bf16.mxu0 0
        %1257 = vmatpush1.bf16.msra.mxu0 %v501
        %1258 = vmatprep.subr.bf16.mxu0 0
        %1259 = vmatpush1.bf16.msra.mxu0 %v502
        %1260 = vmatprep.subr.bf16.mxu0 0
        %1261 = vmatpush1.bf16.msra.mxu0 0
        %1262 = vmatprep.subr.bf16.mxu0 0
        %1263 = vmatpush1.bf16.msra.mxu0 0
        %1264 = vmatprep.mubr.bf16.mxu0 %v1149
        %1265 = vmatmul.mubr.bf16.gmra.mrb[0].mxu0 %v1063
        %v1266 = vpop.f32.mrb[0].mxu0
        %v1267 = vadd.f32 %v618, %v1266
        %v1268 = vpop.f32.mrb[0].mxu0
        %v1269 = vpop.f32.mrb[0].mxu0
        %v1270 = vadd.f32 %v623, %v1269
        %v1271 = vpop.f32.mrb[0].mxu0
        %1272 = vmatprep.mubr.bf16.mxu0 %v1152
        %1273 = vmatmul.mubr.bf16.gmra.mrb[0].mxu0 %v1065
        %v1274 = vpop.f32.mrb[0].mxu0
        %v1275 = vadd.f32 %v628, %v1274
        %v1276 = vpop.f32.mrb[0].mxu0
        %v1277 = vpop.f32.mrb[0].mxu0
        %v1278 = vadd.f32 %v633, %v1277
        %v1279 = vpop.f32.mrb[0].mxu0
        %1280 = vmatprep.mubr.bf16.mxu0 %v1155
        %1281 = vmatmul.mubr.bf16.gmra.mrb[0].mxu0 %v1067
        %v1282 = vpop.f32.mrb[0].mxu0
        %v1283 = vadd.f32 %v638, %v1282
        %v1284 = vpop.f32.mrb[0].mxu0
        %v1285 = vpop.f32.mrb[0].mxu0
        %v1286 = vadd.f32 %v643, %v1285
        %v1287 = vpop.f32.mrb[0].mxu0
        %1288 = vmatprep.mubr.bf16.mxu0 %v1158
        %1289 = vmatmul.mubr.bf16.gmra.mrb[0].mxu0 %v1069
        %v1290 = vpop.f32.mrb[0].mxu0
        %v1291 = vadd.f32 %v648, %v1290
        %v1292 = vpop.f32.mrb[0].mxu0
        %v1293 = vpop.f32.mrb[0].mxu0
        %v1294 = vadd.f32 %v653, %v1293
        %v1295 = vpop.f32.mrb[0].mxu0
        %1296 = vmatprep.mubr.bf16.mxu0 %v1161
        %1297 = vmatmul.mubr.bf16.gmra.mrb[0].mxu0 %v1071
        %v1298 = vpop.f32.mrb[0].mxu0
        %v1299 = vadd.f32 %v658, %v1298
        %v1300 = vpop.f32.mrb[0].mxu0
        %v1301 = vpop.f32.mrb[0].mxu0
        %v1302 = vadd.f32 %v663, %v1301
        %v1303 = vpop.f32.mrb[0].mxu0
        %1304 = vmatprep.mubr.bf16.mxu0 %v1164
        %1305 = vmatmul.mubr.bf16.gmra.mrb[0].mxu0 %v1073
        %v1306 = vpop.f32.mrb[0].mxu0
        %v1307 = vadd.f32 %v668, %v1306
        %v1308 = vpop.f32.mrb[0].mxu0
        %v1309 = vpop.f32.mrb[0].mxu0
        %v1310 = vadd.f32 %v673, %v1309
        %v1311 = vpop.f32.mrb[0].mxu0
        %1312 = vmatprep.mubr.bf16.mxu0 %v1167
        %1313 = vmatmul.mubr.bf16.gmra.mrb[0].mxu0 %v1075
        %v1314 = vpop.f32.mrb[0].mxu0
        %v1315 = vadd.f32 %v678, %v1314
        %v1316 = vpop.f32.mrb[0].mxu0
        %v1317 = vpop.f32.mrb[0].mxu0
        %v1318 = vadd.f32 %v683, %v1317
        %v1319 = vpop.f32.mrb[0].mxu0
        %1320 = vmatprep.mubr.bf16.mxu0 %v1170
        %1321 = vmatmul.mubr.bf16.gmra.mrb[0].mxu0 %v1077
        %v1322 = vpop.f32.mrb[0].mxu0
        %v1323 = vadd.f32 %v688, %v1322
        %v1324 = vpop.f32.mrb[0].mxu0
        %v1325 = vpop.f32.mrb[0].mxu0
        %v1326 = vadd.f32 %v693, %v1325
        %v1327 = vpop.f32.mrb[0].mxu0
        %1328 = vmatprep.mubr.bf16.mxu0 %v1173
        %1329 = vmatmul.mubr.bf16.gmra.mrb[0].mxu0 %v1079
        %v1330 = vpop.f32.mrb[0].mxu0
        %v1331 = vadd.f32 %v698, %v1330
        %v1332 = vpop.f32.mrb[0].mxu0
        %v1333 = vpop.f32.mrb[0].mxu0
        %v1334 = vadd.f32 %v703, %v1333
        %v1335 = vpop.f32.mrb[0].mxu0
        %1336 = vmatprep.mubr.bf16.mxu0 %v1176
        %1337 = vmatmul.mubr.bf16.gmra.mrb[0].mxu0 %v1081
        %v1338 = vpop.f32.mrb[0].mxu0
        %v1339 = vadd.f32 %v708, %v1338
        %v1340 = vpop.f32.mrb[0].mxu0
        %v1341 = vpop.f32.mrb[0].mxu0
        %v1342 = vadd.f32 %v713, %v1341
        %v1343 = vpop.f32.mrb[0].mxu0
        %1344 = vmatprep.mubr.bf16.mxu0 %v1179
        %1345 = vmatmul.mubr.bf16.gmra.mrb[0].mxu0 %v1083
        %v1346 = vpop.f32.mrb[0].mxu0
        %v1347 = vadd.f32 %v718, %v1346
        %v1348 = vpop.f32.mrb[0].mxu0
        %v1349 = vpop.f32.mrb[0].mxu0
        %v1350 = vadd.f32 %v723, %v1349
        %v1351 = vpop.f32.mrb[0].mxu0
        %1352 = vmatprep.mubr.bf16.mxu0 %v1182
        %1353 = vmatmul.mubr.bf16.gmra.mrb[0].mxu0 %v1085
        %v1354 = vpop.f32.mrb[0].mxu0
        %v1355 = vadd.f32 %v728, %v1354
        %v1356 = vpop.f32.mrb[0].mxu0
        %v1357 = vpop.f32.mrb[0].mxu0
        %v1358 = vadd.f32 %v733, %v1357
        %v1359 = vpop.f32.mrb[0].mxu0
        %1360 = vmatprep.mubr.bf16.mxu0 %v1185
        %1361 = vmatmul.mubr.bf16.gmra.mrb[0].mxu0 %v1087
        %v1362 = vpop.f32.mrb[0].mxu0
        %v1363 = vadd.f32 %v738, %v1362
        %v1364 = vpop.f32.mrb[0].mxu0
        %v1365 = vpop.f32.mrb[0].mxu0
        %v1366 = vadd.f32 %v743, %v1365
        %v1367 = vpop.f32.mrb[0].mxu0
        %1368 = vmatprep.mubr.bf16.mxu0 %v1188
        %1369 = vmatmul.mubr.bf16.gmra.mrb[0].mxu0 %v1089
        %v1370 = vpop.f32.mrb[0].mxu0
        %v1371 = vadd.f32 %v748, %v1370
        %v1372 = vpop.f32.mrb[0].mxu0
        %v1373 = vpop.f32.mrb[0].mxu0
        %v1374 = vadd.f32 %v753, %v1373
        %v1375 = vpop.f32.mrb[0].mxu0
        %1376 = vmatprep.mubr.bf16.mxu0 %v1191
        %1377 = vmatmul.mubr.bf16.gmra.mrb[0].mxu0 %v1091
        %v1378 = vpop.f32.mrb[0].mxu0
        %v1379 = vadd.f32 %v758, %v1378
        %v1380 = vpop.f32.mrb[0].mxu0
        %v1381 = vpop.f32.mrb[0].mxu0
        %v1382 = vadd.f32 %v763, %v1381
        %v1383 = vpop.f32.mrb[0].mxu0
        %1384 = vmatprep.mubr.bf16.mxu0 %v1194
        %1385 = vmatmul.mubr.bf16.gmra.mrb[0].mxu0 %v1093
        %v1386 = vpop.f32.mrb[0].mxu0
        %v1387 = vadd.f32 %v768, %v1386
        %v1388 = vpop.f32.mrb[0].mxu0
        %v1389 = vpop.f32.mrb[0].mxu0
        %v1390 = vadd.f32 %v773, %v1389
        %v1391 = vpop.f32.mrb[0].mxu0
        %1392 = vmatprep.mubr.bf16.mxu0 %v1197
        %1393 = vmatmul.mubr.bf16.gmra.mrb[0].mxu0 %v1095
        %v1394 = vpop.f32.mrb[0].mxu0
        %v1395 = vadd.f32 %v778, %v1394
        %v1396 = vpop.f32.mrb[0].mxu0
        %v1397 = vpop.f32.mrb[0].mxu0
        %v1398 = vadd.f32 %v783, %v1397
        %v1399 = vpop.f32.mrb[0].mxu0
        %1400 = vmatprep.mubr.bf16.mxu0 %v1200
        %1401 = vmatmul.mubr.bf16.gmra.mrb[0].mxu0 %v1097
        %v1402 = vpop.f32.mrb[0].mxu0
        %v1403 = vadd.f32 %v788, %v1402
        %v1404 = vpop.f32.mrb[0].mxu0
        %v1405 = vpop.f32.mrb[0].mxu0
        %v1406 = vadd.f32 %v793, %v1405
        %v1407 = vpop.f32.mrb[0].mxu0
        %1408 = vmatprep.mubr.bf16.mxu0 %v1203
        %1409 = vmatmul.mubr.bf16.gmra.mrb[0].mxu0 %v1099
        %v1410 = vpop.f32.mrb[0].mxu0
        %v1411 = vadd.f32 %v798, %v1410
        %v1412 = vpop.f32.mrb[0].mxu0
        %v1413 = vpop.f32.mrb[0].mxu0
        %v1414 = vadd.f32 %v803, %v1413
        %v1415 = vpop.f32.mrb[0].mxu0
        %1416 = vmatprep.mubr.bf16.mxu0 %v1206
        %1417 = vmatmul.mubr.bf16.gmra.mrb[0].mxu0 %v1101
        %v1418 = vpop.f32.mrb[0].mxu0
        %v1419 = vadd.f32 %v808, %v1418
        %v1420 = vpop.f32.mrb[0].mxu0
        %v1421 = vpop.f32.mrb[0].mxu0
        %v1422 = vadd.f32 %v813, %v1421
        %v1423 = vpop.f32.mrb[0].mxu0
        %1424 = vmatprep.mubr.bf16.mxu0 %v1209
        %1425 = vmatmul.mubr.bf16.gmra.mrb[0].mxu0 %v1103
        %v1426 = vpop.f32.mrb[0].mxu0
        %v1427 = vadd.f32 %v818, %v1426
        %v1428 = vpop.f32.mrb[0].mxu0
        %v1429 = vpop.f32.mrb[0].mxu0
        %v1430 = vadd.f32 %v823, %v1429
        %v1431 = vpop.f32.mrb[0].mxu0
        %1432 = vmatprep.mubr.bf16.mxu0 %v1212
        %1433 = vmatmul.mubr.bf16.gmra.mrb[0].mxu0 %v1105
        %v1434 = vpop.f32.mrb[0].mxu0
        %v1435 = vadd.f32 %v828, %v1434
        %v1436 = vpop.f32.mrb[0].mxu0
        %v1437 = vpop.f32.mrb[0].mxu0
        %v1438 = vadd.f32 %v833, %v1437
        %v1439 = vpop.f32.mrb[0].mxu0
        %1440 = vmatprep.mubr.bf16.mxu0 %v1215
        %1441 = vmatmul.mubr.bf16.gmra.mrb[0].mxu0 %v1107
        %v1442 = vpop.f32.mrb[0].mxu0
        %v1443 = vadd.f32 %v838, %v1442
        %v1444 = vpop.f32.mrb[0].mxu0
        %v1445 = vpop.f32.mrb[0].mxu0
        %v1446 = vadd.f32 %v843, %v1445
        %v1447 = vpop.f32.mrb[0].mxu0
        %1448 = vmatprep.mubr.bf16.mxu0 %v1218
        %1449 = vmatmul.mubr.bf16.gmra.mrb[0].mxu0 %v1109
        %v1450 = vpop.f32.mrb[0].mxu0
        %v1451 = vadd.f32 %v848, %v1450
        %v1452 = vpop.f32.mrb[0].mxu0
        %v1453 = vpop.f32.mrb[0].mxu0
        %v1454 = vadd.f32 %v853, %v1453
        %v1455 = vpop.f32.mrb[0].mxu0
        %1456 = vmatprep.mubr.bf16.mxu0 %v1221
        %1457 = vmatmul.mubr.bf16.gmra.mrb[0].mxu0 %v1111
        %v1458 = vpop.f32.mrb[0].mxu0
        %v1459 = vadd.f32 %v858, %v1458
        %v1460 = vpop.f32.mrb[0].mxu0
        %v1461 = vpop.f32.mrb[0].mxu0
        %v1462 = vadd.f32 %v863, %v1461
        %v1463 = vpop.f32.mrb[0].mxu0
        %1464 = vmatprep.mubr.bf16.mxu0 %v1224
        %1465 = vmatmul.mubr.bf16.gmra.mrb[0].mxu0 %v1113
        %v1466 = vpop.f32.mrb[0].mxu0
        %v1467 = vadd.f32 %v868, %v1466
        %v1468 = vpop.f32.mrb[0].mxu0
        %v1469 = vpop.f32.mrb[0].mxu0
        %v1470 = vadd.f32 %v873, %v1469
        %v1471 = vpop.f32.mrb[0].mxu0
        %1472 = vmatprep.mubr.bf16.mxu0 %v1227
        %1473 = vmatmul.mubr.bf16.gmra.mrb[0].mxu0 %v1115
        %v1474 = vpop.f32.mrb[0].mxu0
        %v1475 = vadd.f32 %v878, %v1474
        %v1476 = vpop.f32.mrb[0].mxu0
        %v1477 = vpop.f32.mrb[0].mxu0
        %v1478 = vadd.f32 %v883, %v1477
        %v1479 = vpop.f32.mrb[0].mxu0
        %1480 = vmatprep.mubr.bf16.mxu0 %v1230
        %1481 = vmatmul.mubr.bf16.gmra.mrb[0].mxu0 %v1117
        %v1482 = vpop.f32.mrb[0].mxu0
        %v1483 = vadd.f32 %v888, %v1482
        %v1484 = vpop.f32.mrb[0].mxu0
        %v1485 = vpop.f32.mrb[0].mxu0
        %v1486 = vadd.f32 %v893, %v1485
        %v1487 = vpop.f32.mrb[0].mxu0
        %1488 = vdwg.mxu0
        %v1489 = vxor.u32 %v1267, 2147483648
        %v1490 = vxor.u32 %v1270, 2147483648
        %v1491 = vxor.u32 %v1275, 2147483648
        %v1492 = vxor.u32 %v1278, 2147483648
        %v1493 = vxor.u32 %v1283, 2147483648
        %v1494 = vxor.u32 %v1286, 2147483648
        %v1495 = vxor.u32 %v1291, 2147483648
        %v1496 = vxor.u32 %v1294, 2147483648
        %v1497 = vxor.u32 %v1299, 2147483648
        %v1498 = vxor.u32 %v1302, 2147483648
        %v1499 = vxor.u32 %v1307, 2147483648
        %v1500 = vxor.u32 %v1310, 2147483648
        %v1501 = vxor.u32 %v1315, 2147483648
        %v1502 = vxor.u32 %v1318, 2147483648
        %v1503 = vxor.u32 %v1323, 2147483648
        %v1504 = vxor.u32 %v1326, 2147483648
        %v1505 = vxor.u32 %v1331, 2147483648
        %v1506 = vxor.u32 %v1334, 2147483648
        %v1507 = vxor.u32 %v1339, 2147483648
        %v1508 = vxor.u32 %v1342, 2147483648
        %v1509 = vxor.u32 %v1347, 2147483648
        %v1510 = vxor.u32 %v1350, 2147483648
        %v1511 = vxor.u32 %v1355, 2147483648
        %v1512 = vxor.u32 %v1358, 2147483648
        %v1513 = vxor.u32 %v1363, 2147483648
        %v1514 = vxor.u32 %v1366, 2147483648
        %v1515 = vxor.u32 %v1371, 2147483648
        %v1516 = vxor.u32 %v1374, 2147483648
        %v1517 = vmul.f32 %v1489, 1.442695
        %v1518 = vpow.pop %v1517
        %v1519 = vmul.f32 %v1490, 1.442695
        %v1520 = vpow.pop %v1519
        %v1521 = vmul.f32 %v1491, 1.442695
        %v1522 = vpow.pop %v1521
        %v1523 = vmul.f32 %v1492, 1.442695
        %v1524 = vpow.pop %v1523
        %v1525 = vmul.f32 %v1493, 1.442695
        %v1526 = vpow.pop %v1525
        %v1527 = vmul.f32 %v1494, 1.442695
        %v1528 = vpow.pop %v1527
        %v1529 = vmul.f32 %v1495, 1.442695
        %v1530 = vpow.pop %v1529
        %v1531 = vmul.f32 %v1496, 1.442695
        %v1532 = vpow.pop %v1531
        %v1533 = vmul.f32 %v1497, 1.442695
        %v1534 = vpow.pop %v1533
        %v1535 = vmul.f32 %v1498, 1.442695
        %v1536 = vpow.pop %v1535
        %v1537 = vmul.f32 %v1499, 1.442695
        %v1538 = vpow.pop %v1537
        %v1539 = vmul.f32 %v1500, 1.442695
        %v1540 = vpow.pop %v1539
        %v1541 = vmul.f32 %v1501, 1.442695
        %v1542 = vpow.pop %v1541
        %v1543 = vmul.f32 %v1502, 1.442695
        %v1544 = vpow.pop %v1543
        %v1545 = vmul.f32 %v1503, 1.442695
        %v1546 = vpow.pop %v1545
        %v1547 = vmul.f32 %v1504, 1.442695
        %v1548 = vpow.pop %v1547
        %v1549 = vmul.f32 %v1505, 1.442695
        %v1550 = vpow.pop %v1549
        %v1551 = vmul.f32 %v1506, 1.442695
        %v1552 = vpow.pop %v1551
        %v1553 = vmul.f32 %v1507, 1.442695
        %v1554 = vpow.pop %v1553
        %v1555 = vmul.f32 %v1508, 1.442695
        %v1556 = vpow.pop %v1555
        %v1557 = vmul.f32 %v1509, 1.442695
        %v1558 = vpow.pop %v1557
        %v1559 = vmul.f32 %v1510, 1.442695
        %v1560 = vpow.pop %v1559
        %v1561 = vmul.f32 %v1511, 1.442695
        %v1562 = vpow.pop %v1561
        %v1563 = vmul.f32 %v1512, 1.442695
        %v1564 = vpow.pop %v1563
        %v1565 = vmul.f32 %v1513, 1.442695
        %v1566 = vpow.pop %v1565
        %v1567 = vmul.f32 %v1514, 1.442695
        %v1568 = vpow.pop %v1567
        %v1569 = vmul.f32 %v1515, 1.442695
        %v1570 = vpow.pop %v1569
        %v1571 = vmul.f32 %v1516, 1.442695
        %v1572 = vpow.pop %v1571
        %v1573 = vadd.f32 %v1518, 1.0
        %v1574 = vadd.f32 %v1520, 1.0
        %v1575 = vadd.f32 %v1522, 1.0
        %v1576 = vadd.f32 %v1524, 1.0
        %v1577 = vadd.f32 %v1526, 1.0
        %v1578 = vadd.f32 %v1528, 1.0
        %v1579 = vadd.f32 %v1530, 1.0
        %v1580 = vadd.f32 %v1532, 1.0
        %v1581 = vadd.f32 %v1534, 1.0
        %v1582 = vadd.f32 %v1536, 1.0
        %v1583 = vadd.f32 %v1538, 1.0
        %v1584 = vadd.f32 %v1540, 1.0
        %v1585 = vadd.f32 %v1542, 1.0
        %v1586 = vadd.f32 %v1544, 1.0
        %v1587 = vadd.f32 %v1546, 1.0
        %v1588 = vadd.f32 %v1548, 1.0
        %v1589 = vadd.f32 %v1550, 1.0
        %v1590 = vadd.f32 %v1552, 1.0
        %v1591 = vadd.f32 %v1554, 1.0
        %v1592 = vadd.f32 %v1556, 1.0
        %v1593 = vadd.f32 %v1558, 1.0
        %v1594 = vadd.f32 %v1560, 1.0
        %v1595 = vadd.f32 %v1562, 1.0
        %v1596 = vadd.f32 %v1564, 1.0
        %v1597 = vadd.f32 %v1566, 1.0
        %v1598 = vadd.f32 %v1568, 1.0
        %v1599 = vadd.f32 %v1570, 1.0
        %v1600 = vadd.f32 %v1572, 1.0
        %v1601 = vrcp.pop %v1573
        %v1602 = vmul.f32 1.0, %v1601
        %v1603 = vrcp.pop %v1574
        %v1604 = vmul.f32 1.0, %v1603
        %v1605 = vrcp.pop %v1575
        %v1606 = vmul.f32 1.0, %v1605
        %v1607 = vrcp.pop %v1576
        %v1608 = vmul.f32 1.0, %v1607
        %v1609 = vrcp.pop %v1577
        %v1610 = vmul.f32 1.0, %v1609
        %v1611 = vrcp.pop %v1578
        %v1612 = vmul.f32 1.0, %v1611
        %v1613 = vrcp.pop %v1579
        %v1614 = vmul.f32 1.0, %v1613
        %v1615 = vrcp.pop %v1580
        %v1616 = vmul.f32 1.0, %v1615
        %v1617 = vrcp.pop %v1581
        %v1618 = vmul.f32 1.0, %v1617
        %v1619 = vrcp.pop %v1582
        %v1620 = vmul.f32 1.0, %v1619
        %v1621 = vrcp.pop %v1583
        %v1622 = vmul.f32 1.0, %v1621
        %v1623 = vrcp.pop %v1584
        %v1624 = vmul.f32 1.0, %v1623
        %v1625 = vrcp.pop %v1585
        %v1626 = vmul.f32 1.0, %v1625
        %v1627 = vrcp.pop %v1586
        %v1628 = vmul.f32 1.0, %v1627
        %v1629 = vrcp.pop %v1587
        %v1630 = vmul.f32 1.0, %v1629
        %v1631 = vrcp.pop %v1588
        %v1632 = vmul.f32 1.0, %v1631
        %v1633 = vrcp.pop %v1589
        %v1634 = vmul.f32 1.0, %v1633
        %v1635 = vrcp.pop %v1590
        %v1636 = vmul.f32 1.0, %v1635
        %v1637 = vrcp.pop %v1591
        %v1638 = vmul.f32 1.0, %v1637
        %v1639 = vrcp.pop %v1592
        %v1640 = vmul.f32 1.0, %v1639
        %v1641 = vrcp.pop %v1593
        %v1642 = vmul.f32 1.0, %v1641
        %v1643 = vrcp.pop %v1594
        %v1644 = vmul.f32 1.0, %v1643
        %v1645 = vrcp.pop %v1595
        %v1646 = vmul.f32 1.0, %v1645
        %v1647 = vrcp.pop %v1596
        %v1648 = vmul.f32 1.0, %v1647
        %v1649 = vrcp.pop %v1597
        %v1650 = vmul.f32 1.0, %v1649
        %v1651 = vrcp.pop %v1598
        %v1652 = vmul.f32 1.0, %v1651
        %v1653 = vrcp.pop %v1599
        %v1654 = vmul.f32 1.0, %v1653
        %v1655 = vrcp.pop %v1600
        %v1656 = vmul.f32 1.0, %v1655
        %v1657 = vmul.f32 %v1602, %v1379
        %v1658 = vmul.f32 %v1604, %v1382
        %v1659 = vmul.f32 %v1606, %v1387
        %v1660 = vmul.f32 %v1608, %v1390
        %v1661 = vmul.f32 %v1610, %v1395
        %v1662 = vmul.f32 %v1612, %v1398
        %v1663 = vmul.f32 %v1614, %v1403
        %v1664 = vmul.f32 %v1616, %v1406
        %v1665 = vmul.f32 %v1618, %v1411
        %v1666 = vmul.f32 %v1620, %v1414
        %v1667 = vmul.f32 %v1622, %v1419
        %v1668 = vmul.f32 %v1624, %v1422
        %v1669 = vmul.f32 %v1626, %v1427
        %v1670 = vmul.f32 %v1628, %v1430
        %v1671 = vmul.f32 %v1630, %v1435
        %v1672 = vmul.f32 %v1632, %v1438
        %v1673 = vmul.f32 %v1634, %v1443
        %v1674 = vmul.f32 %v1636, %v1446
        %v1675 = vmul.f32 %v1638, %v1451
        %v1676 = vmul.f32 %v1640, %v1454
        %v1677 = vmul.f32 %v1642, %v1459
        %v1678 = vmul.f32 %v1644, %v1462
        %v1679 = vmul.f32 %v1646, %v1467
        %v1680 = vmul.f32 %v1648, %v1470
        %v1681 = vmul.f32 %v1650, %v1475
        %v1682 = vmul.f32 %v1652, %v1478
        %v1683 = vmul.f32 %v1654, %v1483
        %v1684 = vmul.f32 %v1656, %v1486
        %v1685 = vld [vmem:[%s3] sm:$0xff]
        %v1686 = vld [vmem:[%s3 + $0x8] sm:$0xff]
        %v1687 = vld [vmem:[%s3 + $0x10] sm:$0xff]
        %v1688 = vld [vmem:[%s3 + $0x18] sm:$0xff]
        %v1689 = vld [vmem:[%s3 + $0x20] sm:$0xff]
        %v1690 = vld [vmem:[%s3 + $0x28] sm:$0xff]
        %v1691 = vld [vmem:[%s3 + $0x30] sm:$0xff]
        %v1692 = vld [vmem:[%s3 + $0x38] sm:$0xff]
        %v1693 = vld [vmem:[%s3 + $0x40] sm:$0xff]
        %v1694 = vld [vmem:[%s3 + $0x48] sm:$0xff]
        %v1695 = vld [vmem:[%s3 + $0x50] sm:$0xff]
        %v1696 = vld [vmem:[%s3 + $0x58] sm:$0xff]
        %v1697 = vld [vmem:[%s3 + $0x60] sm:$0xff]
        %v1698 = vld [vmem:[%s3 + $0x68] sm:$0xff]
        %v1699 = vld [vmem:[%s3 + $0x70] sm:$0xff]
        %v1700 = vld [vmem:[%s3 + $0x78] sm:$0xff]
        %v1701 = vld [vmem:[%s3 + $0x80] sm:$0xff]
        %v1702 = vld [vmem:[%s3 + $0x88] sm:$0xff]
        %v1703 = vld [vmem:[%s3 + $0x90] sm:$0xff]
        %v1704 = vld [vmem:[%s3 + $0x98] sm:$0xff]
        %v1705 = vld [vmem:[%s3 + $0xa0] sm:$0xff]
        %v1706 = vld [vmem:[%s3 + $0xa8] sm:$0xff]
        %v1707 = vld [vmem:[%s3 + $0xb0] sm:$0xff]
        %v1708 = vld [vmem:[%s3 + $0xb8] sm:$0xff]
        %v1709 = vld [vmem:[%s3 + $0xc0] sm:$0xff]
        %v1710 = vld [vmem:[%s3 + $0xc8] sm:$0xff]
        %v1711 = vld [vmem:[%s3 + $0xd0] sm:$0xff]
        %v1712 = vld [vmem:[%s3 + $0xd8] sm:$0xff]
        %v1713 = vpack.c.bf16 %v1658, %v1657
        %v1714 = vpack.c.bf16 %v1660, %v1659
        %v1715 = vpack.c.bf16 %v1662, %v1661
        %v1716 = vpack.c.bf16 %v1664, %v1663
        %v1717 = vpack.c.bf16 %v1666, %v1665
        %v1718 = vpack.c.bf16 %v1668, %v1667
        %v1719 = vpack.c.bf16 %v1670, %v1669
        %v1720 = vpack.c.bf16 %v1672, %v1671
        %v1721 = vpack.c.bf16 %v1674, %v1673
        %v1722 = vpack.c.bf16 %v1676, %v1675
        %v1723 = vpack.c.bf16 %v1678, %v1677
        %v1724 = vpack.c.bf16 %v1680, %v1679
        %v1725 = vpack.c.bf16 %v1682, %v1681
        %v1726 = vpack.c.bf16 %v1684, %v1683
        %v1727 = vld [vmem:[%s4] sm:$0xff]
        %v1728 = vld [vmem:[%s4 + $0x8] sm:$0xff]
        %v1729 = vld [vmem:[%s4 + $0x10] sm:$0xff]
        %v1730 = vld [vmem:[%s4 + $0x18] sm:$0xff]
        %v1731 = vld [vmem:[%s4 + $0x20] sm:$0xff]
        %v1732 = vld [vmem:[%s4 + $0x28] sm:$0xff]
        %v1733 = vld [vmem:[%s4 + $0x30] sm:$0xff]
        %v1734 = vld [vmem:[%s4 + $0x38] sm:$0xff]
        %v1735 = vld [vmem:[%s4 + $0x40] sm:$0xff]
        %v1736 = vld [vmem:[%s4 + $0x48] sm:$0xff]
        %v1737 = vld [vmem:[%s4 + $0x50] sm:$0xff]
        %v1738 = vld [vmem:[%s4 + $0x58] sm:$0xff]
        %v1739 = vld [vmem:[%s4 + $0x60] sm:$0xff]
        %v1740 = vld [vmem:[%s4 + $0x68] sm:$0xff]
        %v1741 = vld [vmem:[%s4 + $0x70] sm:$0xff]
        %v1742 = vld [vmem:[%s4 + $0x78] sm:$0xff]
        %v1743 = vld [vmem:[%s4 + $0x80] sm:$0xff]
        %v1744 = vld [vmem:[%s4 + $0x88] sm:$0xff]
        %v1745 = vld [vmem:[%s4 + $0x90] sm:$0xff]
        %v1746 = vld [vmem:[%s4 + $0x98] sm:$0xff]
        %v1747 = vld [vmem:[%s4 + $0xa0] sm:$0xff]
        %v1748 = vld [vmem:[%s4 + $0xa8] sm:$0xff]
        %v1749 = vld [vmem:[%s4 + $0xb0] sm:$0xff]
        %v1750 = vld [vmem:[%s4 + $0xb8] sm:$0xff]
        %v1751 = vld [vmem:[%s4 + $0xc0] sm:$0xff]
        %v1752 = vld [vmem:[%s4 + $0xc8] sm:$0xff]
        %v1753 = vld [vmem:[%s4 + $0xd0] sm:$0xff]
        %v1754 = vld [vmem:[%s4 + $0xd8] sm:$0xff]
        %1756 = vset.pattern.permute.xlu0 0
        %1757 = vperm.xlu0 %1756, %v1727
        %v1758 = vpop.permute.xlu0 %1757
        %1761 = vset.pattern.permute.xlu0 0
        %1762 = vperm.xlu0 %1761, %v1728
        %v1763 = vpop.permute.xlu0 %1762
        %1766 = vset.pattern.permute.xlu0 0
        %1767 = vperm.xlu0 %1766, %v1729
        %v1768 = vpop.permute.xlu0 %1767
        %1771 = vset.pattern.permute.xlu0 0
        %1772 = vperm.xlu0 %1771, %v1730
        %v1773 = vpop.permute.xlu0 %1772
        %1776 = vset.pattern.permute.xlu0 0
        %1777 = vperm.xlu0 %1776, %v1731
        %v1778 = vpop.permute.xlu0 %1777
        %1781 = vset.pattern.permute.xlu0 0
        %1782 = vperm.xlu0 %1781, %v1732
        %v1783 = vpop.permute.xlu0 %1782
        %1786 = vset.pattern.permute.xlu0 0
        %1787 = vperm.xlu0 %1786, %v1733
        %v1788 = vpop.permute.xlu0 %1787
        %1791 = vset.pattern.permute.xlu0 0
        %1792 = vperm.xlu0 %1791, %v1734
        %v1793 = vpop.permute.xlu0 %1792
        %1796 = vset.pattern.permute.xlu0 0
        %1797 = vperm.xlu0 %1796, %v1735
        %v1798 = vpop.permute.xlu0 %1797
        %1801 = vset.pattern.permute.xlu0 0
        %1802 = vperm.xlu0 %1801, %v1736
        %v1803 = vpop.permute.xlu0 %1802
        %1806 = vset.pattern.permute.xlu0 0
        %1807 = vperm.xlu0 %1806, %v1737
        %v1808 = vpop.permute.xlu0 %1807
        %1811 = vset.pattern.permute.xlu0 0
        %1812 = vperm.xlu0 %1811, %v1738
        %v1813 = vpop.permute.xlu0 %1812
        %1816 = vset.pattern.permute.xlu0 0
        %1817 = vperm.xlu0 %1816, %v1739
        %v1818 = vpop.permute.xlu0 %1817
        %1821 = vset.pattern.permute.xlu0 0
        %1822 = vperm.xlu0 %1821, %v1740
        %v1823 = vpop.permute.xlu0 %1822
        %1826 = vset.pattern.permute.xlu0 0
        %1827 = vperm.xlu0 %1826, %v1741
        %v1828 = vpop.permute.xlu0 %1827
        %1831 = vset.pattern.permute.xlu0 0
        %1832 = vperm.xlu0 %1831, %v1742
        %v1833 = vpop.permute.xlu0 %1832
        %1836 = vset.pattern.permute.xlu0 0
        %1837 = vperm.xlu0 %1836, %v1743
        %v1838 = vpop.permute.xlu0 %1837
        %1841 = vset.pattern.permute.xlu0 0
        %1842 = vperm.xlu0 %1841, %v1744
        %v1843 = vpop.permute.xlu0 %1842
        %1846 = vset.pattern.permute.xlu0 0
        %1847 = vperm.xlu0 %1846, %v1745
        %v1848 = vpop.permute.xlu0 %1847
        %1851 = vset.pattern.permute.xlu0 0
        %1852 = vperm.xlu0 %1851, %v1746
        %v1853 = vpop.permute.xlu0 %1852
        %1856 = vset.pattern.permute.xlu0 0
        %1857 = vperm.xlu0 %1856, %v1747
        %v1858 = vpop.permute.xlu0 %1857
        %1861 = vset.pattern.permute.xlu0 0
        %1862 = vperm.xlu0 %1861, %v1748
        %v1863 = vpop.permute.xlu0 %1862
        %1866 = vset.pattern.permute.xlu0 0
        %1867 = vperm.xlu0 %1866, %v1749
        %v1868 = vpop.permute.xlu0 %1867
        %1871 = vset.pattern.permute.xlu0 0
        %1872 = vperm.xlu0 %1871, %v1750
        %v1873 = vpop.permute.xlu0 %1872
        %1876 = vset.pattern.permute.xlu0 0
        %1877 = vperm.xlu0 %1876, %v1751
        %v1878 = vpop.permute.xlu0 %1877
        %1881 = vset.pattern.permute.xlu0 0
        %1882 = vperm.xlu0 %1881, %v1752
        %v1883 = vpop.permute.xlu0 %1882
        %1886 = vset.pattern.permute.xlu0 0
        %1887 = vperm.xlu0 %1886, %v1753
        %v1888 = vpop.permute.xlu0 %1887
        %1891 = vset.pattern.permute.xlu0 0
        %1892 = vperm.xlu0 %1891, %v1754
        %v1893 = vpop.permute.xlu0 %1892
        %v1923 = vunpack.c.l.b16 %v1685
        %v1924 = vunpack.c.h.b16 %v1685
        %v1925 = vunpack.c.l.b16 %v1686
        %v1926 = vunpack.c.h.b16 %v1686
        %v1927 = vunpack.c.l.b16 %v1687
        %v1928 = vunpack.c.h.b16 %v1687
        %v1929 = vunpack.c.l.b16 %v1688
        %v1930 = vunpack.c.h.b16 %v1688
        %v1931 = vunpack.c.l.b16 %v1689
        %v1932 = vunpack.c.h.b16 %v1689
        %v1933 = vunpack.c.l.b16 %v1690
        %v1934 = vunpack.c.h.b16 %v1690
        %v1935 = vunpack.c.l.b16 %v1691
        %v1936 = vunpack.c.h.b16 %v1691
        %v1937 = vunpack.c.l.b16 %v1692
        %v1938 = vunpack.c.h.b16 %v1692
        %v1939 = vunpack.c.l.b16 %v1693
        %v1940 = vunpack.c.h.b16 %v1693
        %v1941 = vunpack.c.l.b16 %v1694
        %v1942 = vunpack.c.h.b16 %v1694
        %v1943 = vunpack.c.l.b16 %v1695
        %v1944 = vunpack.c.h.b16 %v1695
        %v1945 = vunpack.c.l.b16 %v1696
        %v1946 = vunpack.c.h.b16 %v1696
        %v1947 = vunpack.c.l.b16 %v1697
        %v1948 = vunpack.c.h.b16 %v1697
        %v1949 = vunpack.c.l.b16 %v1698
        %v1950 = vunpack.c.h.b16 %v1698
        %v1951 = vunpack.c.l.b16 %v1699
        %v1952 = vunpack.c.h.b16 %v1699
        %v1953 = vunpack.c.l.b16 %v1700
        %v1954 = vunpack.c.h.b16 %v1700
        %v1955 = vunpack.c.l.b16 %v1701
        %v1956 = vunpack.c.h.b16 %v1701
        %v1957 = vunpack.c.l.b16 %v1702
        %v1958 = vunpack.c.h.b16 %v1702
        %v1959 = vunpack.c.l.b16 %v1703
        %v1960 = vunpack.c.h.b16 %v1703
        %v1961 = vunpack.c.l.b16 %v1704
        %v1962 = vunpack.c.h.b16 %v1704
        %v1963 = vunpack.c.l.b16 %v1705
        %v1964 = vunpack.c.h.b16 %v1705
        %v1965 = vunpack.c.l.b16 %v1706
        %v1966 = vunpack.c.h.b16 %v1706
        %v1967 = vunpack.c.l.b16 %v1707
        %v1968 = vunpack.c.h.b16 %v1707
        %v1969 = vunpack.c.l.b16 %v1708
        %v1970 = vunpack.c.h.b16 %v1708
        %v1971 = vunpack.c.l.b16 %v1709
        %v1972 = vunpack.c.h.b16 %v1709
        %v1973 = vunpack.c.l.b16 %v1710
        %v1974 = vunpack.c.h.b16 %v1710
        %v1975 = vunpack.c.l.b16 %v1711
        %v1976 = vunpack.c.h.b16 %v1711
        %v1977 = vunpack.c.l.b16 %v1712
        %v1978 = vunpack.c.h.b16 %v1712
        %v1979 = vpack.c.b16 %v1925, %v1923
        %v1980 = vpack.c.b16 %v1926, %v1924
        %v1981 = vpack.c.b16 %v1929, %v1927
        %v1982 = vpack.c.b16 %v1930, %v1928
        %v1983 = vpack.c.b16 %v1933, %v1931
        %v1984 = vpack.c.b16 %v1934, %v1932
        %v1985 = vpack.c.b16 %v1937, %v1935
        %v1986 = vpack.c.b16 %v1938, %v1936
        %v1987 = vpack.c.b16 %v1941, %v1939
        %v1988 = vpack.c.b16 %v1942, %v1940
        %v1989 = vpack.c.b16 %v1945, %v1943
        %v1990 = vpack.c.b16 %v1946, %v1944
        %v1991 = vpack.c.b16 %v1949, %v1947
        %v1992 = vpack.c.b16 %v1950, %v1948
        %v1993 = vpack.c.b16 %v1953, %v1951
        %v1994 = vpack.c.b16 %v1954, %v1952
        %v1995 = vpack.c.b16 %v1957, %v1955
        %v1996 = vpack.c.b16 %v1958, %v1956
        %v1997 = vpack.c.b16 %v1961, %v1959
        %v1998 = vpack.c.b16 %v1962, %v1960
        %v1999 = vpack.c.b16 %v1965, %v1963
        %v2000 = vpack.c.b16 %v1966, %v1964
        %v2001 = vpack.c.b16 %v1969, %v1967
        %v2002 = vpack.c.b16 %v1970, %v1968
        %v2003 = vpack.c.b16 %v1973, %v1971
        %v2004 = vpack.c.b16 %v1974, %v1972
        %v2005 = vpack.c.b16 %v1977, %v1975
        %v2006 = vpack.c.b16 %v1978, %v1976
        %v2022 = vsel %vm1147, %v1980, 0
        %v2025 = vsel %vm1147, %v1982, 0
        %v2028 = vsel %vm1147, %v1984, 0
        %v2031 = vsel %vm1147, %v1986, 0
        %v2034 = vsel %vm1147, %v1988, 0
        %v2037 = vsel %vm1147, %v1990, 0
        %v2040 = vsel %vm1147, %v1992, 0
        %v2043 = vsel %vm1147, %v1994, 0
        %v2046 = vsel %vm1147, %v1996, 0
        %v2049 = vsel %vm1147, %v1998, 0
        %v2052 = vsel %vm1147, %v2000, 0
        %v2055 = vsel %vm1147, %v2002, 0
        %v2058 = vsel %vm1147, %v2004, 0
        %v2061 = vsel %vm1147, %v2006, 0
        %2063 = vmatprep.subr.bf16.mxu0 0
        %2064 = vmatpush1.bf16.msra.mxu0 %v1713
        %2065 = vmatprep.subr.bf16.mxu0 0
        %2066 = vmatpush1.bf16.msra.mxu0 %v1714
        %2067 = vmatprep.subr.bf16.mxu0 0
        %2068 = vmatpush1.bf16.msra.mxu0 %v1715
        %2069 = vmatprep.subr.bf16.mxu0 0
        %2070 = vmatpush1.bf16.msra.mxu0 %v1716
        %2071 = vmatprep.subr.bf16.mxu0 0
        %2072 = vmatpush1.bf16.msra.mxu0 %v1717
        %2073 = vmatprep.subr.bf16.mxu0 0
        %2074 = vmatpush1.bf16.msra.mxu0 %v1718
        %2075 = vmatprep.subr.bf16.mxu0 0
        %2076 = vmatpush1.bf16.msra.mxu0 %v1719
        %2077 = vmatprep.subr.bf16.mxu0 0
        %2078 = vmatpush1.bf16.msra.mxu0 %v1720
        %2079 = vmatprep.subr.bf16.mxu0 0
        %2080 = vmatpush1.bf16.msra.mxu0 %v1721
        %2081 = vmatprep.subr.bf16.mxu0 0
        %2082 = vmatpush1.bf16.msra.mxu0 %v1722
        %2083 = vmatprep.subr.bf16.mxu0 0
        %2084 = vmatpush1.bf16.msra.mxu0 %v1723
        %2085 = vmatprep.subr.bf16.mxu0 0
        %2086 = vmatpush1.bf16.msra.mxu0 %v1724
        %2087 = vmatprep.subr.bf16.mxu0 0
        %2088 = vmatpush1.bf16.msra.mxu0 %v1725
        %2089 = vmatprep.subr.bf16.mxu0 0
        %2090 = vmatpush1.bf16.msra.mxu0 %v1726
        %2091 = vmatprep.subr.bf16.mxu0 0
        %2092 = vmatpush1.bf16.msra.mxu0 0
        %2093 = vmatprep.subr.bf16.mxu0 0
        %2094 = vmatpush1.bf16.msra.mxu0 0
        %2095 = vmatprep.mubr.bf16.mxu0 %v2022
        %2096 = vmatmul.mubr.bf16.gmra.mrb[0].mxu0 %v1979
        %v2097 = vpop.f32.mrb[0].mxu0
        %v2098 = vadd.f32 %v1758, %v2097
        %v2099 = vpop.f32.mrb[0].mxu0
        %v2100 = vpop.f32.mrb[0].mxu0
        %v2101 = vadd.f32 %v1763, %v2100
        %v2102 = vpop.f32.mrb[0].mxu0
        %2103 = vmatprep.mubr.bf16.mxu0 %v2025
        %2104 = vmatmul.mubr.bf16.gmra.mrb[0].mxu0 %v1981
        %v2105 = vpop.f32.mrb[0].mxu0
        %v2106 = vadd.f32 %v1768, %v2105
        %v2107 = vpop.f32.mrb[0].mxu0
        %v2108 = vpop.f32.mrb[0].mxu0
        %v2109 = vadd.f32 %v1773, %v2108
        %v2110 = vpop.f32.mrb[0].mxu0
        %2111 = vmatprep.mubr.bf16.mxu0 %v2028
        %2112 = vmatmul.mubr.bf16.gmra.mrb[0].mxu0 %v1983
        %v2113 = vpop.f32.mrb[0].mxu0
        %v2114 = vadd.f32 %v1778, %v2113
        %v2115 = vpop.f32.mrb[0].mxu0
        %v2116 = vpop.f32.mrb[0].mxu0
        %v2117 = vadd.f32 %v1783, %v2116
        %v2118 = vpop.f32.mrb[0].mxu0
        %2119 = vmatprep.mubr.bf16.mxu0 %v2031
        %2120 = vmatmul.mubr.bf16.gmra.mrb[0].mxu0 %v1985
        %v2121 = vpop.f32.mrb[0].mxu0
        %v2122 = vadd.f32 %v1788, %v2121
        %v2123 = vpop.f32.mrb[0].mxu0
        %v2124 = vpop.f32.mrb[0].mxu0
        %v2125 = vadd.f32 %v1793, %v2124
        %v2126 = vpop.f32.mrb[0].mxu0
        %2127 = vmatprep.mubr.bf16.mxu0 %v2034
        %2128 = vmatmul.mubr.bf16.gmra.mrb[0].mxu0 %v1987
        %v2129 = vpop.f32.mrb[0].mxu0
        %v2130 = vadd.f32 %v1798, %v2129
        %v2131 = vpop.f32.mrb[0].mxu0
        %v2132 = vpop.f32.mrb[0].mxu0
        %v2133 = vadd.f32 %v1803, %v2132
        %v2134 = vpop.f32.mrb[0].mxu0
        %2135 = vmatprep.mubr.bf16.mxu0 %v2037
        %2136 = vmatmul.mubr.bf16.gmra.mrb[0].mxu0 %v1989
        %v2137 = vpop.f32.mrb[0].mxu0
        %v2138 = vadd.f32 %v1808, %v2137
        %v2139 = vpop.f32.mrb[0].mxu0
        %v2140 = vpop.f32.mrb[0].mxu0
        %v2141 = vadd.f32 %v1813, %v2140
        %v2142 = vpop.f32.mrb[0].mxu0
        %2143 = vmatprep.mubr.bf16.mxu0 %v2040
        %2144 = vmatmul.mubr.bf16.gmra.mrb[0].mxu0 %v1991
        %v2145 = vpop.f32.mrb[0].mxu0
        %v2146 = vadd.f32 %v1818, %v2145
        %v2147 = vpop.f32.mrb[0].mxu0
        %v2148 = vpop.f32.mrb[0].mxu0
        %v2149 = vadd.f32 %v1823, %v2148
        %v2150 = vpop.f32.mrb[0].mxu0
        %2151 = vmatprep.mubr.bf16.mxu0 %v2043
        %2152 = vmatmul.mubr.bf16.gmra.mrb[0].mxu0 %v1993
        %v2153 = vpop.f32.mrb[0].mxu0
        %v2154 = vadd.f32 %v1828, %v2153
        %v2155 = vpop.f32.mrb[0].mxu0
        %v2156 = vpop.f32.mrb[0].mxu0
        %v2157 = vadd.f32 %v1833, %v2156
        %v2158 = vpop.f32.mrb[0].mxu0
        %2159 = vmatprep.mubr.bf16.mxu0 %v2046
        %2160 = vmatmul.mubr.bf16.gmra.mrb[0].mxu0 %v1995
        %v2161 = vpop.f32.mrb[0].mxu0
        %v2162 = vadd.f32 %v1838, %v2161
        %v2163 = vpop.f32.mrb[0].mxu0
        %v2164 = vpop.f32.mrb[0].mxu0
        %v2165 = vadd.f32 %v1843, %v2164
        %v2166 = vpop.f32.mrb[0].mxu0
        %2167 = vmatprep.mubr.bf16.mxu0 %v2049
        %2168 = vmatmul.mubr.bf16.gmra.mrb[0].mxu0 %v1997
        %v2169 = vpop.f32.mrb[0].mxu0
        %v2170 = vadd.f32 %v1848, %v2169
        %v2171 = vpop.f32.mrb[0].mxu0
        %v2172 = vpop.f32.mrb[0].mxu0
        %v2173 = vadd.f32 %v1853, %v2172
        %v2174 = vpop.f32.mrb[0].mxu0
        %2175 = vmatprep.mubr.bf16.mxu0 %v2052
        %2176 = vmatmul.mubr.bf16.gmra.mrb[0].mxu0 %v1999
        %v2177 = vpop.f32.mrb[0].mxu0
        %v2178 = vadd.f32 %v1858, %v2177
        %v2179 = vpop.f32.mrb[0].mxu0
        %v2180 = vpop.f32.mrb[0].mxu0
        %v2181 = vadd.f32 %v1863, %v2180
        %v2182 = vpop.f32.mrb[0].mxu0
        %2183 = vmatprep.mubr.bf16.mxu0 %v2055
        %2184 = vmatmul.mubr.bf16.gmra.mrb[0].mxu0 %v2001
        %v2185 = vpop.f32.mrb[0].mxu0
        %v2186 = vadd.f32 %v1868, %v2185
        %v2187 = vpop.f32.mrb[0].mxu0
        %v2188 = vpop.f32.mrb[0].mxu0
        %v2189 = vadd.f32 %v1873, %v2188
        %v2190 = vpop.f32.mrb[0].mxu0
        %2191 = vmatprep.mubr.bf16.mxu0 %v2058
        %2192 = vmatmul.mubr.bf16.gmra.mrb[0].mxu0 %v2003
        %v2193 = vpop.f32.mrb[0].mxu0
        %v2194 = vadd.f32 %v1878, %v2193
        %v2195 = vpop.f32.mrb[0].mxu0
        %v2196 = vpop.f32.mrb[0].mxu0
        %v2197 = vadd.f32 %v1883, %v2196
        %v2198 = vpop.f32.mrb[0].mxu0
        %2199 = vmatprep.mubr.bf16.mxu0 %v2061
        %2200 = vmatmul.mubr.bf16.gmra.mrb[0].mxu0 %v2005
        %v2201 = vpop.f32.mrb[0].mxu0
        %v2202 = vadd.f32 %v1888, %v2201
        %v2203 = vpop.f32.mrb[0].mxu0
        %v2204 = vpop.f32.mrb[0].mxu0
        %v2205 = vadd.f32 %v1893, %v2204
        %v2206 = vpop.f32.mrb[0].mxu0
        %2207 = vdwg.mxu0
        %v2208 = vmul.f32 %v461, 3.0
        %v2209 = vmul.f32 %v462, 3.0
        %v2210 = vmul.f32 %v463, 3.0
        %v2211 = vmul.f32 %v464, 3.0
        %v2212 = vmul.f32 %v465, 3.0
        %v2213 = vmul.f32 %v466, 3.0
        %v2214 = vmul.f32 %v467, 3.0
        %v2215 = vmul.f32 %v468, 3.0
        %v2216 = vmul.f32 %v469, 3.0
        %v2217 = vmul.f32 %v470, 3.0
        %v2218 = vmul.f32 %v471, 3.0
        %v2219 = vmul.f32 %v472, 3.0
        %v2220 = vmul.f32 %v473, 3.0
        %v2221 = vmul.f32 %v474, 3.0
        %v2222 = vmul.f32 %v475, 3.0
        %v2223 = vmul.f32 %v476, 3.0
        %v2224 = vmul.f32 %v477, 3.0
        %v2225 = vmul.f32 %v478, 3.0
        %v2226 = vmul.f32 %v479, 3.0
        %v2227 = vmul.f32 %v480, 3.0
        %v2228 = vmul.f32 %v481, 3.0
        %v2229 = vmul.f32 %v482, 3.0
        %v2230 = vmul.f32 %v483, 3.0
        %v2231 = vmul.f32 %v484, 3.0
        %v2232 = vmul.f32 %v485, 3.0
        %v2233 = vmul.f32 %v486, 3.0
        %v2234 = vmul.f32 %v487, 3.0
        %v2235 = vmul.f32 %v488, 3.0
        %v2236 = vadd.f32 %v2098, %v2208
        %v2237 = vadd.f32 %v2101, %v2209
        %v2238 = vadd.f32 %v2106, %v2210
        %v2239 = vadd.f32 %v2109, %v2211
        %v2240 = vadd.f32 %v2114, %v2212
        %v2241 = vadd.f32 %v2117, %v2213
        %v2242 = vadd.f32 %v2122, %v2214
        %v2243 = vadd.f32 %v2125, %v2215
        %v2244 = vadd.f32 %v2130, %v2216
        %v2245 = vadd.f32 %v2133, %v2217
        %v2246 = vadd.f32 %v2138, %v2218
        %v2247 = vadd.f32 %v2141, %v2219
        %v2248 = vadd.f32 %v2146, %v2220
        %v2249 = vadd.f32 %v2149, %v2221
        %v2250 = vadd.f32 %v2154, %v2222
        %v2251 = vadd.f32 %v2157, %v2223
        %v2252 = vadd.f32 %v2162, %v2224
        %v2253 = vadd.f32 %v2165, %v2225
        %v2254 = vadd.f32 %v2170, %v2226
        %v2255 = vadd.f32 %v2173, %v2227
        %v2256 = vadd.f32 %v2178, %v2228
        %v2257 = vadd.f32 %v2181, %v2229
        %v2258 = vadd.f32 %v2186, %v2230
        %v2259 = vadd.f32 %v2189, %v2231
        %v2260 = vadd.f32 %v2194, %v2232
        %v2261 = vadd.f32 %v2197, %v2233
        %v2262 = vadd.f32 %v2202, %v2234
        %v2263 = vadd.f32 %v2205, %v2235
        %v2264 = vld [vmem:[%s5] sm:$0xf]
        %v2265 = vld [vmem:[%s5 + $0x4] sm:$0xf]
        %v2266 = vld [vmem:[%s5 + $0x8] sm:$0xf]
        %v2267 = vld [vmem:[%s5 + $0xc] sm:$0xf]
        %v2268 = vld [vmem:[%s5 + $0x10] sm:$0xf]
        %v2269 = vld [vmem:[%s5 + $0x14] sm:$0xf]
        %v2270 = vld [vmem:[%s5 + $0x18] sm:$0xf]
        %v2271 = vld [vmem:[%s5 + $0x1c] sm:$0xf]
        %v2272 = vld [vmem:[%s7] sm:$0xf]
        %v2273 = vld [vmem:[%s7 + $0x4] sm:$0xf]
        %v2274 = vld [vmem:[%s7 + $0x8] sm:$0xf]
        %v2275 = vld [vmem:[%s7 + $0xc] sm:$0xf]
        %v2276 = vld [vmem:[%s6] sm:$0xff]
        %v2277 = vld [vmem:[%s6 + $0x8] sm:$0xff]
        %v2278 = vld [vmem:[%s6 + $0x10] sm:$0xff]
        %v2279 = vld [vmem:[%s6 + $0x18] sm:$0xff]
        %v2280 = vld [vmem:[%s6 + $0x20] sm:$0xff]
        %v2281 = vld [vmem:[%s6 + $0x28] sm:$0xff]
        %v2282 = vld [vmem:[%s6 + $0x30] sm:$0xff]
        %v2283 = vld [vmem:[%s6 + $0x38] sm:$0xff]
        %2285 = vset.pattern.permute.xlu0 0
        %2286 = vperm.xlu0 %2285, %v2276
        %v2287 = vpop.permute.xlu0 %2286
        %2290 = vset.pattern.permute.xlu0 0
        %2291 = vperm.xlu0 %2290, %v2277
        %v2292 = vpop.permute.xlu0 %2291
        %2295 = vset.pattern.permute.xlu0 0
        %2296 = vperm.xlu0 %2295, %v2278
        %v2297 = vpop.permute.xlu0 %2296
        %2300 = vset.pattern.permute.xlu0 0
        %2301 = vperm.xlu0 %2300, %v2279
        %v2302 = vpop.permute.xlu0 %2301
        %2305 = vset.pattern.permute.xlu0 0
        %2306 = vperm.xlu0 %2305, %v2280
        %v2307 = vpop.permute.xlu0 %2306
        %2310 = vset.pattern.permute.xlu0 0
        %2311 = vperm.xlu0 %2310, %v2281
        %v2312 = vpop.permute.xlu0 %2311
        %2315 = vset.pattern.permute.xlu0 0
        %2316 = vperm.xlu0 %2315, %v2282
        %v2317 = vpop.permute.xlu0 %2316
        %2320 = vset.pattern.permute.xlu0 0
        %2321 = vperm.xlu0 %2320, %v2283
        %v2322 = vpop.permute.xlu0 %2321
        %v2332 = vunpack.c.l.b16 %v2264
        %v2333 = vunpack.c.l.b16 %v2265
        %v2334 = vunpack.c.l.b16 %v2266
        %v2335 = vunpack.c.l.b16 %v2267
        %v2336 = vunpack.c.l.b16 %v2268
        %v2337 = vunpack.c.l.b16 %v2269
        %v2338 = vunpack.c.l.b16 %v2270
        %v2339 = vunpack.c.l.b16 %v2271
        %v2340 = vpack.c.b16 %v2333, %v2332
        %v2341 = vpack.c.b16 %v2335, %v2334
        %v2342 = vpack.c.b16 %v2337, %v2336
        %v2343 = vpack.c.b16 %v2339, %v2338
        %vm2344 = vcmask 261120
        %v2346 = vsel %vm2344, %v2340, 0
        %v2349 = vsel %vm2344, %v2341, 0
        %v2352 = vsel %vm2344, %v2342, 0
        %v2355 = vsel %vm2344, %v2343, 0
        %2357 = vmatprep.subr.bf16.mxu0 0
        %2358 = vmatpush1.bf16.msra.mxu0 %v489
        %2359 = vmatprep.subr.bf16.mxu0 0
        %2360 = vmatpush1.bf16.msra.mxu0 %v490
        %2361 = vmatprep.subr.bf16.mxu0 0
        %2362 = vmatpush1.bf16.msra.mxu0 0
        %2363 = vmatprep.subr.bf16.mxu0 0
        %2364 = vmatpush1.bf16.msra.mxu0 0
        %2365 = vmatprep.subr.bf16.mxu0 0
        %2366 = vmatpush1.bf16.msra.mxu0 0
        %2367 = vmatprep.subr.bf16.mxu0 0
        %2368 = vmatpush1.bf16.msra.mxu0 0
        %2369 = vmatprep.subr.bf16.mxu0 0
        %2370 = vmatpush1.bf16.msra.mxu0 0
        %2371 = vmatprep.subr.bf16.mxu0 0
        %2372 = vmatpush1.bf16.msra.mxu0 0
        %2373 = vmatprep.subr.bf16.mxu0 0
        %2374 = vmatpush1.bf16.msra.mxu0 0
        %2375 = vmatprep.subr.bf16.mxu0 0
        %2376 = vmatpush1.bf16.msra.mxu0 0
        %2377 = vmatprep.subr.bf16.mxu0 0
        %2378 = vmatpush1.bf16.msra.mxu0 0
        %2379 = vmatprep.subr.bf16.mxu0 0
        %2380 = vmatpush1.bf16.msra.mxu0 0
        %2381 = vmatprep.subr.bf16.mxu0 0
        %2382 = vmatpush1.bf16.msra.mxu0 0
        %2383 = vmatprep.subr.bf16.mxu0 0
        %2384 = vmatpush1.bf16.msra.mxu0 0
        %2385 = vmatprep.subr.bf16.mxu0 0
        %2386 = vmatpush1.bf16.msra.mxu0 0
        %2387 = vmatprep.subr.bf16.mxu0 0
        %2388 = vmatpush1.bf16.msra.mxu0 0
        %2389 = vmatprep.mubr.bf16.mxu0 0
        %2390 = vmatmul.mubr.bf16.gmra.mrb[0].mxu0 %v2346
        %v2391 = vpop.f32.mrb[0].mxu0
        %v2392 = vadd.f32 %v2287, %v2391
        %v2393 = vpop.f32.mrb[0].mxu0
        %v2394 = vpop.f32.mrb[0].mxu0
        %v2395 = vadd.f32 %v2292, %v2394
        %v2396 = vpop.f32.mrb[0].mxu0
        %2397 = vmatprep.mubr.bf16.mxu0 0
        %2398 = vmatmul.mubr.bf16.gmra.mrb[0].mxu0 %v2349
        %v2399 = vpop.f32.mrb[0].mxu0
        %v2400 = vadd.f32 %v2297, %v2399
        %v2401 = vpop.f32.mrb[0].mxu0
        %v2402 = vpop.f32.mrb[0].mxu0
        %v2403 = vadd.f32 %v2302, %v2402
        %v2404 = vpop.f32.mrb[0].mxu0
        %2405 = vmatprep.mubr.bf16.mxu0 0
        %2406 = vmatmul.mubr.bf16.gmra.mrb[0].mxu0 %v2352
        %v2407 = vpop.f32.mrb[0].mxu0
        %v2408 = vadd.f32 %v2307, %v2407
        %v2409 = vpop.f32.mrb[0].mxu0
        %v2410 = vpop.f32.mrb[0].mxu0
        %v2411 = vadd.f32 %v2312, %v2410
        %v2412 = vpop.f32.mrb[0].mxu0
        %2413 = vmatprep.mubr.bf16.mxu0 0
        %2414 = vmatmul.mubr.bf16.gmra.mrb[0].mxu0 %v2355
        %v2415 = vpop.f32.mrb[0].mxu0
        %v2416 = vadd.f32 %v2317, %v2415
        %v2417 = vpop.f32.mrb[0].mxu0
        %v2418 = vpop.f32.mrb[0].mxu0
        %v2419 = vadd.f32 %v2322, %v2418
        %v2420 = vpop.f32.mrb[0].mxu0
        %2421 = vdwg.mxu0
        %v2422 = vxor.u32 %v2392, 2147483648
        %v2423 = vxor.u32 %v2395, 2147483648
        %v2424 = vxor.u32 %v2400, 2147483648
        %v2425 = vxor.u32 %v2403, 2147483648
        %v2426 = vmul.f32 %v2422, 1.442695
        %v2427 = vpow.pop %v2426
        %v2428 = vmul.f32 %v2423, 1.442695
        %v2429 = vpow.pop %v2428
        %v2430 = vmul.f32 %v2424, 1.442695
        %v2431 = vpow.pop %v2430
        %v2432 = vmul.f32 %v2425, 1.442695
        %v2433 = vpow.pop %v2432
        %v2434 = vadd.f32 %v2427, 1.0
        %v2435 = vadd.f32 %v2429, 1.0
        %v2436 = vadd.f32 %v2431, 1.0
        %v2437 = vadd.f32 %v2433, 1.0
        %v2438 = vrcp.pop %v2434
        %v2439 = vmul.f32 1.0, %v2438
        %v2440 = vrcp.pop %v2435
        %v2441 = vmul.f32 1.0, %v2440
        %v2442 = vrcp.pop %v2436
        %v2443 = vmul.f32 1.0, %v2442
        %v2444 = vrcp.pop %v2437
        %v2445 = vmul.f32 1.0, %v2444
        %v2446 = vmul.f32 %v2439, %v2408
        %v2447 = vmul.f32 %v2441, %v2411
        %v2448 = vmul.f32 %v2443, %v2416
        %v2449 = vmul.f32 %v2445, %v2419
        %v2450 = vpack.c.bf16 %v2447, %v2446
        %v2451 = vpack.c.bf16 %v2449, %v2448
        %v2456 = vunpack.c.l.b16 %v2272
        %v2457 = vunpack.c.l.b16 %v2273
        %v2458 = vunpack.c.l.b16 %v2274
        %v2459 = vunpack.c.l.b16 %v2275
        %v2460 = vpack.c.b16 %v2457, %v2456
        %v2461 = vpack.c.b16 %v2459, %v2458
        %v2463 = vsel %vm2344, %v2460, 0
        %v2466 = vsel %vm2344, %v2461, 0
        %2468 = vmatprep.subr.bf16.mxu0 0
        %2469 = vmatpush1.bf16.msra.mxu0 %v2450
        %2470 = vmatprep.subr.bf16.mxu0 0
        %2471 = vmatpush1.bf16.msra.mxu0 %v2451
        %2472 = vmatprep.subr.bf16.mxu0 0
        %2473 = vmatpush1.bf16.msra.mxu0 0
        %2474 = vmatprep.subr.bf16.mxu0 0
        %2475 = vmatpush1.bf16.msra.mxu0 0
        %2476 = vmatprep.subr.bf16.mxu0 0
        %2477 = vmatpush1.bf16.msra.mxu0 0
        %2478 = vmatprep.subr.bf16.mxu0 0
        %2479 = vmatpush1.bf16.msra.mxu0 0
        %2480 = vmatprep.subr.bf16.mxu0 0
        %2481 = vmatpush1.bf16.msra.mxu0 0
        %2482 = vmatprep.subr.bf16.mxu0 0
        %2483 = vmatpush1.bf16.msra.mxu0 0
        %2484 = vmatprep.subr.bf16.mxu0 0
        %2485 = vmatpush1.bf16.msra.mxu0 0
        %2486 = vmatprep.subr.bf16.mxu0 0
        %2487 = vmatpush1.bf16.msra.mxu0 0
        %2488 = vmatprep.subr.bf16.mxu0 0
        %2489 = vmatpush1.bf16.msra.mxu0 0
        %2490 = vmatprep.subr.bf16.mxu0 0
        %2491 = vmatpush1.bf16.msra.mxu0 0
        %2492 = vmatprep.subr.bf16.mxu0 0
        %2493 = vmatpush1.bf16.msra.mxu0 0
        %2494 = vmatprep.subr.bf16.mxu0 0
        %2495 = vmatpush1.bf16.msra.mxu0 0
        %2496 = vmatprep.subr.bf16.mxu0 0
        %2497 = vmatpush1.bf16.msra.mxu0 0
        %2498 = vmatprep.subr.bf16.mxu0 0
        %2499 = vmatpush1.bf16.msra.mxu0 0
        %2500 = vmatprep.mubr.bf16.mxu0 0
        %2501 = vmatmul.mubr.bf16.gmra.mrb[0].mxu0 %v2463
        %v2502 = vpop.f32.mrb[0].mxu0
        %v2503 = vadd.f32 %v2236, %v2502
        %v2504 = vpop.f32.mrb[0].mxu0
        %v2505 = vpop.f32.mrb[0].mxu0
        %v2506 = vadd.f32 %v2237, %v2505
        %v2507 = vpop.f32.mrb[0].mxu0
        %2508 = vmatprep.mubr.bf16.mxu0 0
        %2509 = vmatmul.mubr.bf16.gmra.mrb[0].mxu0 %v2466
        %v2510 = vpop.f32.mrb[0].mxu0
        %v2511 = vadd.f32 %v2238, %v2510
        %v2512 = vpop.f32.mrb[0].mxu0
        %v2513 = vpop.f32.mrb[0].mxu0
        %v2514 = vadd.f32 %v2239, %v2513
        %v2515 = vpop.f32.mrb[0].mxu0
        %2516 = vdwg.mxu0
        %2517 = vst [vmem:[%s459] sm:$0xff] %v2503
        %2518 = vst [vmem:[%s459 + $0x8] sm:$0xff] %v2506
        %2519 = vst [vmem:[%s459 + $0x10] sm:$0xff] %v2511
        %2520 = vst [vmem:[%s459 + $0x18] sm:$0xff] %v2514
        %2521 = vmatprep.subr.bf16.mxu0 0
        %2522 = vmatpush1.bf16.msra.mxu0 %v491
        %2523 = vmatprep.subr.bf16.mxu0 0
        %2524 = vmatpush1.bf16.msra.mxu0 %v492
        %2525 = vmatprep.subr.bf16.mxu0 0
        %2526 = vmatpush1.bf16.msra.mxu0 0
        %2527 = vmatprep.subr.bf16.mxu0 0
        %2528 = vmatpush1.bf16.msra.mxu0 0
        %2529 = vmatprep.subr.bf16.mxu0 0
        %2530 = vmatpush1.bf16.msra.mxu0 0
        %2531 = vmatprep.subr.bf16.mxu0 0
        %2532 = vmatpush1.bf16.msra.mxu0 0
        %2533 = vmatprep.subr.bf16.mxu0 0
        %2534 = vmatpush1.bf16.msra.mxu0 0
        %2535 = vmatprep.subr.bf16.mxu0 0
        %2536 = vmatpush1.bf16.msra.mxu0 0
        %2537 = vmatprep.subr.bf16.mxu0 0
        %2538 = vmatpush1.bf16.msra.mxu0 0
        %2539 = vmatprep.subr.bf16.mxu0 0
        %2540 = vmatpush1.bf16.msra.mxu0 0
        %2541 = vmatprep.subr.bf16.mxu0 0
        %2542 = vmatpush1.bf16.msra.mxu0 0
        %2543 = vmatprep.subr.bf16.mxu0 0
        %2544 = vmatpush1.bf16.msra.mxu0 0
        %2545 = vmatprep.subr.bf16.mxu0 0
        %2546 = vmatpush1.bf16.msra.mxu0 0
        %2547 = vmatprep.subr.bf16.mxu0 0
        %2548 = vmatpush1.bf16.msra.mxu0 0
        %2549 = vmatprep.subr.bf16.mxu0 0
        %2550 = vmatpush1.bf16.msra.mxu0 0
        %2551 = vmatprep.subr.bf16.mxu0 0
        %2552 = vmatpush1.bf16.msra.mxu0 0
        %2553 = vmatprep.mubr.bf16.mxu0 0
        %2554 = vmatmul.mubr.bf16.gmra.mrb[0].mxu0 %v2346
        %v2555 = vpop.f32.mrb[0].mxu0
        %v2556 = vadd.f32 %v2287, %v2555
        %v2557 = vpop.f32.mrb[0].mxu0
        %v2558 = vpop.f32.mrb[0].mxu0
        %v2559 = vadd.f32 %v2292, %v2558
        %v2560 = vpop.f32.mrb[0].mxu0
        %2561 = vmatprep.mubr.bf16.mxu0 0
        %2562 = vmatmul.mubr.bf16.gmra.mrb[0].mxu0 %v2349
        %v2563 = vpop.f32.mrb[0].mxu0
        %v2564 = vadd.f32 %v2297, %v2563
        %v2565 = vpop.f32.mrb[0].mxu0
        %v2566 = vpop.f32.mrb[0].mxu0
        %v2567 = vadd.f32 %v2302, %v2566
        %v2568 = vpop.f32.mrb[0].mxu0
        %2569 = vmatprep.mubr.bf16.mxu0 0
        %2570 = vmatmul.mubr.bf16.gmra.mrb[0].mxu0 %v2352
        %v2571 = vpop.f32.mrb[0].mxu0
        %v2572 = vadd.f32 %v2307, %v2571
        %v2573 = vpop.f32.mrb[0].mxu0
        %v2574 = vpop.f32.mrb[0].mxu0
        %v2575 = vadd.f32 %v2312, %v2574
        %v2576 = vpop.f32.mrb[0].mxu0
        %2577 = vmatprep.mubr.bf16.mxu0 0
        %2578 = vmatmul.mubr.bf16.gmra.mrb[0].mxu0 %v2355
        %v2579 = vpop.f32.mrb[0].mxu0
        %v2580 = vadd.f32 %v2317, %v2579
        %v2581 = vpop.f32.mrb[0].mxu0
        %v2582 = vpop.f32.mrb[0].mxu0
        %v2583 = vadd.f32 %v2322, %v2582
        %v2584 = vpop.f32.mrb[0].mxu0
        %2585 = vdwg.mxu0
        %v2586 = vxor.u32 %v2556, 2147483648
        %v2587 = vxor.u32 %v2559, 2147483648
        %v2588 = vxor.u32 %v2564, 2147483648
        %v2589 = vxor.u32 %v2567, 2147483648
        %v2590 = vmul.f32 %v2586, 1.442695
        %v2591 = vpow.pop %v2590
        %v2592 = vmul.f32 %v2587, 1.442695
        %v2593 = vpow.pop %v2592
        %v2594 = vmul.f32 %v2588, 1.442695
        %v2595 = vpow.pop %v2594
        %v2596 = vmul.f32 %v2589, 1.442695
        %v2597 = vpow.pop %v2596
        %v2598 = vadd.f32 %v2591, 1.0
        %v2599 = vadd.f32 %v2593, 1.0
        %v2600 = vadd.f32 %v2595, 1.0
        %v2601 = vadd.f32 %v2597, 1.0
        %v2602 = vrcp.pop %v2598
        %v2603 = vmul.f32 1.0, %v2602
        %v2604 = vrcp.pop %v2599
        %v2605 = vmul.f32 1.0, %v2604
        %v2606 = vrcp.pop %v2600
        %v2607 = vmul.f32 1.0, %v2606
        %v2608 = vrcp.pop %v2601
        %v2609 = vmul.f32 1.0, %v2608
        %v2610 = vmul.f32 %v2603, %v2572
        %v2611 = vmul.f32 %v2605, %v2575
        %v2612 = vmul.f32 %v2607, %v2580
        %v2613 = vmul.f32 %v2609, %v2583
        %v2614 = vpack.c.bf16 %v2611, %v2610
        %v2615 = vpack.c.bf16 %v2613, %v2612
        %2616 = vmatprep.subr.bf16.mxu0 0
        %2617 = vmatpush1.bf16.msra.mxu0 %v2614
        %2618 = vmatprep.subr.bf16.mxu0 0
        %2619 = vmatpush1.bf16.msra.mxu0 %v2615
        %2620 = vmatprep.subr.bf16.mxu0 0
        %2621 = vmatpush1.bf16.msra.mxu0 0
        %2622 = vmatprep.subr.bf16.mxu0 0
        %2623 = vmatpush1.bf16.msra.mxu0 0
        %2624 = vmatprep.subr.bf16.mxu0 0
        %2625 = vmatpush1.bf16.msra.mxu0 0
        %2626 = vmatprep.subr.bf16.mxu0 0
        %2627 = vmatpush1.bf16.msra.mxu0 0
        %2628 = vmatprep.subr.bf16.mxu0 0
        %2629 = vmatpush1.bf16.msra.mxu0 0
        %2630 = vmatprep.subr.bf16.mxu0 0
        %2631 = vmatpush1.bf16.msra.mxu0 0
        %2632 = vmatprep.subr.bf16.mxu0 0
        %2633 = vmatpush1.bf16.msra.mxu0 0
        %2634 = vmatprep.subr.bf16.mxu0 0
        %2635 = vmatpush1.bf16.msra.mxu0 0
        %2636 = vmatprep.subr.bf16.mxu0 0
        %2637 = vmatpush1.bf16.msra.mxu0 0
        %2638 = vmatprep.subr.bf16.mxu0 0
        %2639 = vmatpush1.bf16.msra.mxu0 0
        %2640 = vmatprep.subr.bf16.mxu0 0
        %2641 = vmatpush1.bf16.msra.mxu0 0
        %2642 = vmatprep.subr.bf16.mxu0 0
        %2643 = vmatpush1.bf16.msra.mxu0 0
        %2644 = vmatprep.subr.bf16.mxu0 0
        %2645 = vmatpush1.bf16.msra.mxu0 0
        %2646 = vmatprep.subr.bf16.mxu0 0
        %2647 = vmatpush1.bf16.msra.mxu0 0
        %2648 = vmatprep.mubr.bf16.mxu0 0
        %2649 = vmatmul.mubr.bf16.gmra.mrb[0].mxu0 %v2463
        %v2650 = vpop.f32.mrb[0].mxu0
        %v2651 = vadd.f32 %v2240, %v2650
        %v2652 = vpop.f32.mrb[0].mxu0
        %v2653 = vpop.f32.mrb[0].mxu0
        %v2654 = vadd.f32 %v2241, %v2653
        %v2655 = vpop.f32.mrb[0].mxu0
        %2656 = vmatprep.mubr.bf16.mxu0 0
        %2657 = vmatmul.mubr.bf16.gmra.mrb[0].mxu0 %v2466
        %v2658 = vpop.f32.mrb[0].mxu0
        %v2659 = vadd.f32 %v2242, %v2658
        %v2660 = vpop.f32.mrb[0].mxu0
        %v2661 = vpop.f32.mrb[0].mxu0
        %v2662 = vadd.f32 %v2243, %v2661
        %v2663 = vpop.f32.mrb[0].mxu0
        %2664 = vdwg.mxu0
        %2665 = vst [vmem:[%s459 + $0x20] sm:$0xff] %v2651
        %2666 = vst [vmem:[%s459 + $0x28] sm:$0xff] %v2654
        %2667 = vst [vmem:[%s459 + $0x30] sm:$0xff] %v2659
        %2668 = vst [vmem:[%s459 + $0x38] sm:$0xff] %v2662
        %2669 = vmatprep.subr.bf16.mxu0 0
        %2670 = vmatpush1.bf16.msra.mxu0 %v493
        %2671 = vmatprep.subr.bf16.mxu0 0
        %2672 = vmatpush1.bf16.msra.mxu0 %v494
        %2673 = vmatprep.subr.bf16.mxu0 0
        %2674 = vmatpush1.bf16.msra.mxu0 0
        %2675 = vmatprep.subr.bf16.mxu0 0
        %2676 = vmatpush1.bf16.msra.mxu0 0
        %2677 = vmatprep.subr.bf16.mxu0 0
        %2678 = vmatpush1.bf16.msra.mxu0 0
        %2679 = vmatprep.subr.bf16.mxu0 0
        %2680 = vmatpush1.bf16.msra.mxu0 0
        %2681 = vmatprep.subr.bf16.mxu0 0
        %2682 = vmatpush1.bf16.msra.mxu0 0
        %2683 = vmatprep.subr.bf16.mxu0 0
        %2684 = vmatpush1.bf16.msra.mxu0 0
        %2685 = vmatprep.subr.bf16.mxu0 0
        %2686 = vmatpush1.bf16.msra.mxu0 0
        %2687 = vmatprep.subr.bf16.mxu0 0
        %2688 = vmatpush1.bf16.msra.mxu0 0
        %2689 = vmatprep.subr.bf16.mxu0 0
        %2690 = vmatpush1.bf16.msra.mxu0 0
        %2691 = vmatprep.subr.bf16.mxu0 0
        %2692 = vmatpush1.bf16.msra.mxu0 0
        %2693 = vmatprep.subr.bf16.mxu0 0
        %2694 = vmatpush1.bf16.msra.mxu0 0
        %2695 = vmatprep.subr.bf16.mxu0 0
        %2696 = vmatpush1.bf16.msra.mxu0 0
        %2697 = vmatprep.subr.bf16.mxu0 0
        %2698 = vmatpush1.bf16.msra.mxu0 0
        %2699 = vmatprep.subr.bf16.mxu0 0
        %2700 = vmatpush1.bf16.msra.mxu0 0
        %2701 = vmatprep.mubr.bf16.mxu0 0
        %2702 = vmatmul.mubr.bf16.gmra.mrb[0].mxu0 %v2346
        %v2703 = vpop.f32.mrb[0].mxu0
        %v2704 = vadd.f32 %v2287, %v2703
        %v2705 = vpop.f32.mrb[0].mxu0
        %v2706 = vpop.f32.mrb[0].mxu0
        %v2707 = vadd.f32 %v2292, %v2706
        %v2708 = vpop.f32.mrb[0].mxu0
        %2709 = vmatprep.mubr.bf16.mxu0 0
        %2710 = vmatmul.mubr.bf16.gmra.mrb[0].mxu0 %v2349
        %v2711 = vpop.f32.mrb[0].mxu0
        %v2712 = vadd.f32 %v2297, %v2711
        %v2713 = vpop.f32.mrb[0].mxu0
        %v2714 = vpop.f32.mrb[0].mxu0
        %v2715 = vadd.f32 %v2302, %v2714
        %v2716 = vpop.f32.mrb[0].mxu0
        %2717 = vmatprep.mubr.bf16.mxu0 0
        %2718 = vmatmul.mubr.bf16.gmra.mrb[0].mxu0 %v2352
        %v2719 = vpop.f32.mrb[0].mxu0
        %v2720 = vadd.f32 %v2307, %v2719
        %v2721 = vpop.f32.mrb[0].mxu0
        %v2722 = vpop.f32.mrb[0].mxu0
        %v2723 = vadd.f32 %v2312, %v2722
        %v2724 = vpop.f32.mrb[0].mxu0
        %2725 = vmatprep.mubr.bf16.mxu0 0
        %2726 = vmatmul.mubr.bf16.gmra.mrb[0].mxu0 %v2355
        %v2727 = vpop.f32.mrb[0].mxu0
        %v2728 = vadd.f32 %v2317, %v2727
        %v2729 = vpop.f32.mrb[0].mxu0
        %v2730 = vpop.f32.mrb[0].mxu0
        %v2731 = vadd.f32 %v2322, %v2730
        %v2732 = vpop.f32.mrb[0].mxu0
        %2733 = vdwg.mxu0
        %v2734 = vxor.u32 %v2704, 2147483648
        %v2735 = vxor.u32 %v2707, 2147483648
        %v2736 = vxor.u32 %v2712, 2147483648
        %v2737 = vxor.u32 %v2715, 2147483648
        %v2738 = vmul.f32 %v2734, 1.442695
        %v2739 = vpow.pop %v2738
        %v2740 = vmul.f32 %v2735, 1.442695
        %v2741 = vpow.pop %v2740
        %v2742 = vmul.f32 %v2736, 1.442695
        %v2743 = vpow.pop %v2742
        %v2744 = vmul.f32 %v2737, 1.442695
        %v2745 = vpow.pop %v2744
        %v2746 = vadd.f32 %v2739, 1.0
        %v2747 = vadd.f32 %v2741, 1.0
        %v2748 = vadd.f32 %v2743, 1.0
        %v2749 = vadd.f32 %v2745, 1.0
        %v2750 = vrcp.pop %v2746
        %v2751 = vmul.f32 1.0, %v2750
        %v2752 = vrcp.pop %v2747
        %v2753 = vmul.f32 1.0, %v2752
        %v2754 = vrcp.pop %v2748
        %v2755 = vmul.f32 1.0, %v2754
        %v2756 = vrcp.pop %v2749
        %v2757 = vmul.f32 1.0, %v2756
        %v2758 = vmul.f32 %v2751, %v2720
        %v2759 = vmul.f32 %v2753, %v2723
        %v2760 = vmul.f32 %v2755, %v2728
        %v2761 = vmul.f32 %v2757, %v2731
        %v2762 = vpack.c.bf16 %v2759, %v2758
        %v2763 = vpack.c.bf16 %v2761, %v2760
        %2764 = vmatprep.subr.bf16.mxu0 0
        %2765 = vmatpush1.bf16.msra.mxu0 %v2762
        %2766 = vmatprep.subr.bf16.mxu0 0
        %2767 = vmatpush1.bf16.msra.mxu0 %v2763
        %2768 = vmatprep.subr.bf16.mxu0 0
        %2769 = vmatpush1.bf16.msra.mxu0 0
        %2770 = vmatprep.subr.bf16.mxu0 0
        %2771 = vmatpush1.bf16.msra.mxu0 0
        %2772 = vmatprep.subr.bf16.mxu0 0
        %2773 = vmatpush1.bf16.msra.mxu0 0
        %2774 = vmatprep.subr.bf16.mxu0 0
        %2775 = vmatpush1.bf16.msra.mxu0 0
        %2776 = vmatprep.subr.bf16.mxu0 0
        %2777 = vmatpush1.bf16.msra.mxu0 0
        %2778 = vmatprep.subr.bf16.mxu0 0
        %2779 = vmatpush1.bf16.msra.mxu0 0
        %2780 = vmatprep.subr.bf16.mxu0 0
        %2781 = vmatpush1.bf16.msra.mxu0 0
        %2782 = vmatprep.subr.bf16.mxu0 0
        %2783 = vmatpush1.bf16.msra.mxu0 0
        %2784 = vmatprep.subr.bf16.mxu0 0
        %2785 = vmatpush1.bf16.msra.mxu0 0
        %2786 = vmatprep.subr.bf16.mxu0 0
        %2787 = vmatpush1.bf16.msra.mxu0 0
        %2788 = vmatprep.subr.bf16.mxu0 0
        %2789 = vmatpush1.bf16.msra.mxu0 0
        %2790 = vmatprep.subr.bf16.mxu0 0
        %2791 = vmatpush1.bf16.msra.mxu0 0
        %2792 = vmatprep.subr.bf16.mxu0 0
        %2793 = vmatpush1.bf16.msra.mxu0 0
        %2794 = vmatprep.subr.bf16.mxu0 0
        %2795 = vmatpush1.bf16.msra.mxu0 0
        %2796 = vmatprep.mubr.bf16.mxu0 0
        %2797 = vmatmul.mubr.bf16.gmra.mrb[0].mxu0 %v2463
        %v2798 = vpop.f32.mrb[0].mxu0
        %v2799 = vadd.f32 %v2244, %v2798
        %v2800 = vpop.f32.mrb[0].mxu0
        %v2801 = vpop.f32.mrb[0].mxu0
        %v2802 = vadd.f32 %v2245, %v2801
        %v2803 = vpop.f32.mrb[0].mxu0
        %2804 = vmatprep.mubr.bf16.mxu0 0
        %2805 = vmatmul.mubr.bf16.gmra.mrb[0].mxu0 %v2466
        %v2806 = vpop.f32.mrb[0].mxu0
        %v2807 = vadd.f32 %v2246, %v2806
        %v2808 = vpop.f32.mrb[0].mxu0
        %v2809 = vpop.f32.mrb[0].mxu0
        %v2810 = vadd.f32 %v2247, %v2809
        %v2811 = vpop.f32.mrb[0].mxu0
        %2812 = vdwg.mxu0
        %2813 = vst [vmem:[%s459 + $0x40] sm:$0xff] %v2799
        %2814 = vst [vmem:[%s459 + $0x48] sm:$0xff] %v2802
        %2815 = vst [vmem:[%s459 + $0x50] sm:$0xff] %v2807
        %2816 = vst [vmem:[%s459 + $0x58] sm:$0xff] %v2810
        %2817 = vmatprep.subr.bf16.mxu0 0
        %2818 = vmatpush1.bf16.msra.mxu0 %v495
        %2819 = vmatprep.subr.bf16.mxu0 0
        %2820 = vmatpush1.bf16.msra.mxu0 %v496
        %2821 = vmatprep.subr.bf16.mxu0 0
        %2822 = vmatpush1.bf16.msra.mxu0 0
        %2823 = vmatprep.subr.bf16.mxu0 0
        %2824 = vmatpush1.bf16.msra.mxu0 0
        %2825 = vmatprep.subr.bf16.mxu0 0
        %2826 = vmatpush1.bf16.msra.mxu0 0
        %2827 = vmatprep.subr.bf16.mxu0 0
        %2828 = vmatpush1.bf16.msra.mxu0 0
        %2829 = vmatprep.subr.bf16.mxu0 0
        %2830 = vmatpush1.bf16.msra.mxu0 0
        %2831 = vmatprep.subr.bf16.mxu0 0
        %2832 = vmatpush1.bf16.msra.mxu0 0
        %2833 = vmatprep.subr.bf16.mxu0 0
        %2834 = vmatpush1.bf16.msra.mxu0 0
        %2835 = vmatprep.subr.bf16.mxu0 0
        %2836 = vmatpush1.bf16.msra.mxu0 0
        %2837 = vmatprep.subr.bf16.mxu0 0
        %2838 = vmatpush1.bf16.msra.mxu0 0
        %2839 = vmatprep.subr.bf16.mxu0 0
        %2840 = vmatpush1.bf16.msra.mxu0 0
        %2841 = vmatprep.subr.bf16.mxu0 0
        %2842 = vmatpush1.bf16.msra.mxu0 0
        %2843 = vmatprep.subr.bf16.mxu0 0
        %2844 = vmatpush1.bf16.msra.mxu0 0
        %2845 = vmatprep.subr.bf16.mxu0 0
        %2846 = vmatpush1.bf16.msra.mxu0 0
        %2847 = vmatprep.subr.bf16.mxu0 0
        %2848 = vmatpush1.bf16.msra.mxu0 0
        %2849 = vmatprep.mubr.bf16.mxu0 0
        %2850 = vmatmul.mubr.bf16.gmra.mrb[0].mxu0 %v2346
        %v2851 = vpop.f32.mrb[0].mxu0
        %v2852 = vadd.f32 %v2287, %v2851
        %v2853 = vpop.f32.mrb[0].mxu0
        %v2854 = vpop.f32.mrb[0].mxu0
        %v2855 = vadd.f32 %v2292, %v2854
        %v2856 = vpop.f32.mrb[0].mxu0
        %2857 = vmatprep.mubr.bf16.mxu0 0
        %2858 = vmatmul.mubr.bf16.gmra.mrb[0].mxu0 %v2349
        %v2859 = vpop.f32.mrb[0].mxu0
        %v2860 = vadd.f32 %v2297, %v2859
        %v2861 = vpop.f32.mrb[0].mxu0
        %v2862 = vpop.f32.mrb[0].mxu0
        %v2863 = vadd.f32 %v2302, %v2862
        %v2864 = vpop.f32.mrb[0].mxu0
        %2865 = vmatprep.mubr.bf16.mxu0 0
        %2866 = vmatmul.mubr.bf16.gmra.mrb[0].mxu0 %v2352
        %v2867 = vpop.f32.mrb[0].mxu0
        %v2868 = vadd.f32 %v2307, %v2867
        %v2869 = vpop.f32.mrb[0].mxu0
        %v2870 = vpop.f32.mrb[0].mxu0
        %v2871 = vadd.f32 %v2312, %v2870
        %v2872 = vpop.f32.mrb[0].mxu0
        %2873 = vmatprep.mubr.bf16.mxu0 0
        %2874 = vmatmul.mubr.bf16.gmra.mrb[0].mxu0 %v2355
        %v2875 = vpop.f32.mrb[0].mxu0
        %v2876 = vadd.f32 %v2317, %v2875
        %v2877 = vpop.f32.mrb[0].mxu0
        %v2878 = vpop.f32.mrb[0].mxu0
        %v2879 = vadd.f32 %v2322, %v2878
        %v2880 = vpop.f32.mrb[0].mxu0
        %2881 = vdwg.mxu0
        %v2882 = vxor.u32 %v2852, 2147483648
        %v2883 = vxor.u32 %v2855, 2147483648
        %v2884 = vxor.u32 %v2860, 2147483648
        %v2885 = vxor.u32 %v2863, 2147483648
        %v2886 = vmul.f32 %v2882, 1.442695
        %v2887 = vpow.pop %v2886
        %v2888 = vmul.f32 %v2883, 1.442695
        %v2889 = vpow.pop %v2888
        %v2890 = vmul.f32 %v2884, 1.442695
        %v2891 = vpow.pop %v2890
        %v2892 = vmul.f32 %v2885, 1.442695
        %v2893 = vpow.pop %v2892
        %v2894 = vadd.f32 %v2887, 1.0
        %v2895 = vadd.f32 %v2889, 1.0
        %v2896 = vadd.f32 %v2891, 1.0
        %v2897 = vadd.f32 %v2893, 1.0
        %v2898 = vrcp.pop %v2894
        %v2899 = vmul.f32 1.0, %v2898
        %v2900 = vrcp.pop %v2895
        %v2901 = vmul.f32 1.0, %v2900
        %v2902 = vrcp.pop %v2896
        %v2903 = vmul.f32 1.0, %v2902
        %v2904 = vrcp.pop %v2897
        %v2905 = vmul.f32 1.0, %v2904
        %v2906 = vmul.f32 %v2899, %v2868
        %v2907 = vmul.f32 %v2901, %v2871
        %v2908 = vmul.f32 %v2903, %v2876
        %v2909 = vmul.f32 %v2905, %v2879
        %v2910 = vpack.c.bf16 %v2907, %v2906
        %v2911 = vpack.c.bf16 %v2909, %v2908
        %2912 = vmatprep.subr.bf16.mxu0 0
        %2913 = vmatpush1.bf16.msra.mxu0 %v2910
        %2914 = vmatprep.subr.bf16.mxu0 0
        %2915 = vmatpush1.bf16.msra.mxu0 %v2911
        %2916 = vmatprep.subr.bf16.mxu0 0
        %2917 = vmatpush1.bf16.msra.mxu0 0
        %2918 = vmatprep.subr.bf16.mxu0 0
        %2919 = vmatpush1.bf16.msra.mxu0 0
        %2920 = vmatprep.subr.bf16.mxu0 0
        %2921 = vmatpush1.bf16.msra.mxu0 0
        %2922 = vmatprep.subr.bf16.mxu0 0
        %2923 = vmatpush1.bf16.msra.mxu0 0
        %2924 = vmatprep.subr.bf16.mxu0 0
        %2925 = vmatpush1.bf16.msra.mxu0 0
        %2926 = vmatprep.subr.bf16.mxu0 0
        %2927 = vmatpush1.bf16.msra.mxu0 0
        %2928 = vmatprep.subr.bf16.mxu0 0
        %2929 = vmatpush1.bf16.msra.mxu0 0
        %2930 = vmatprep.subr.bf16.mxu0 0
        %2931 = vmatpush1.bf16.msra.mxu0 0
        %2932 = vmatprep.subr.bf16.mxu0 0
        %2933 = vmatpush1.bf16.msra.mxu0 0
        %2934 = vmatprep.subr.bf16.mxu0 0
        %2935 = vmatpush1.bf16.msra.mxu0 0
        %2936 = vmatprep.subr.bf16.mxu0 0
        %2937 = vmatpush1.bf16.msra.mxu0 0
        %2938 = vmatprep.subr.bf16.mxu0 0
        %2939 = vmatpush1.bf16.msra.mxu0 0
        %2940 = vmatprep.subr.bf16.mxu0 0
        %2941 = vmatpush1.bf16.msra.mxu0 0
        %2942 = vmatprep.subr.bf16.mxu0 0
        %2943 = vmatpush1.bf16.msra.mxu0 0
        %2944 = vmatprep.mubr.bf16.mxu0 0
        %2945 = vmatmul.mubr.bf16.gmra.mrb[0].mxu0 %v2463
        %v2946 = vpop.f32.mrb[0].mxu0
        %v2947 = vadd.f32 %v2248, %v2946
        %v2948 = vpop.f32.mrb[0].mxu0
        %v2949 = vpop.f32.mrb[0].mxu0
        %v2950 = vadd.f32 %v2249, %v2949
        %v2951 = vpop.f32.mrb[0].mxu0
        %2952 = vmatprep.mubr.bf16.mxu0 0
        %2953 = vmatmul.mubr.bf16.gmra.mrb[0].mxu0 %v2466
        %v2954 = vpop.f32.mrb[0].mxu0
        %v2955 = vadd.f32 %v2250, %v2954
        %v2956 = vpop.f32.mrb[0].mxu0
        %v2957 = vpop.f32.mrb[0].mxu0
        %v2958 = vadd.f32 %v2251, %v2957
        %v2959 = vpop.f32.mrb[0].mxu0
        %2960 = vdwg.mxu0
        %2961 = vst [vmem:[%s459 + $0x60] sm:$0xff] %v2947
        %2962 = vst [vmem:[%s459 + $0x68] sm:$0xff] %v2950
        %2963 = vst [vmem:[%s459 + $0x70] sm:$0xff] %v2955
        %2964 = vst [vmem:[%s459 + $0x78] sm:$0xff] %v2958
        %2965 = vmatprep.subr.bf16.mxu0 0
        %2966 = vmatpush1.bf16.msra.mxu0 %v497
        %2967 = vmatprep.subr.bf16.mxu0 0
        %2968 = vmatpush1.bf16.msra.mxu0 %v498
        %2969 = vmatprep.subr.bf16.mxu0 0
        %2970 = vmatpush1.bf16.msra.mxu0 0
        %2971 = vmatprep.subr.bf16.mxu0 0
        %2972 = vmatpush1.bf16.msra.mxu0 0
        %2973 = vmatprep.subr.bf16.mxu0 0
        %2974 = vmatpush1.bf16.msra.mxu0 0
        %2975 = vmatprep.subr.bf16.mxu0 0
        %2976 = vmatpush1.bf16.msra.mxu0 0
        %2977 = vmatprep.subr.bf16.mxu0 0
        %2978 = vmatpush1.bf16.msra.mxu0 0
        %2979 = vmatprep.subr.bf16.mxu0 0
        %2980 = vmatpush1.bf16.msra.mxu0 0
        %2981 = vmatprep.subr.bf16.mxu0 0
        %2982 = vmatpush1.bf16.msra.mxu0 0
        %2983 = vmatprep.subr.bf16.mxu0 0
        %2984 = vmatpush1.bf16.msra.mxu0 0
        %2985 = vmatprep.subr.bf16.mxu0 0
        %2986 = vmatpush1.bf16.msra.mxu0 0
        %2987 = vmatprep.subr.bf16.mxu0 0
        %2988 = vmatpush1.bf16.msra.mxu0 0
        %2989 = vmatprep.subr.bf16.mxu0 0
        %2990 = vmatpush1.bf16.msra.mxu0 0
        %2991 = vmatprep.subr.bf16.mxu0 0
        %2992 = vmatpush1.bf16.msra.mxu0 0
        %2993 = vmatprep.subr.bf16.mxu0 0
        %2994 = vmatpush1.bf16.msra.mxu0 0
        %2995 = vmatprep.subr.bf16.mxu0 0
        %2996 = vmatpush1.bf16.msra.mxu0 0
        %2997 = vmatprep.mubr.bf16.mxu0 0
        %2998 = vmatmul.mubr.bf16.gmra.mrb[0].mxu0 %v2346
        %v2999 = vpop.f32.mrb[0].mxu0
        %v3000 = vadd.f32 %v2287, %v2999
        %v3001 = vpop.f32.mrb[0].mxu0
        %v3002 = vpop.f32.mrb[0].mxu0
        %v3003 = vadd.f32 %v2292, %v3002
        %v3004 = vpop.f32.mrb[0].mxu0
        %3005 = vmatprep.mubr.bf16.mxu0 0
        %3006 = vmatmul.mubr.bf16.gmra.mrb[0].mxu0 %v2349
        %v3007 = vpop.f32.mrb[0].mxu0
        %v3008 = vadd.f32 %v2297, %v3007
        %v3009 = vpop.f32.mrb[0].mxu0
        %v3010 = vpop.f32.mrb[0].mxu0
        %v3011 = vadd.f32 %v2302, %v3010
        %v3012 = vpop.f32.mrb[0].mxu0
        %3013 = vmatprep.mubr.bf16.mxu0 0
        %3014 = vmatmul.mubr.bf16.gmra.mrb[0].mxu0 %v2352
        %v3015 = vpop.f32.mrb[0].mxu0
        %v3016 = vadd.f32 %v2307, %v3015
        %v3017 = vpop.f32.mrb[0].mxu0
        %v3018 = vpop.f32.mrb[0].mxu0
        %v3019 = vadd.f32 %v2312, %v3018
        %v3020 = vpop.f32.mrb[0].mxu0
        %3021 = vmatprep.mubr.bf16.mxu0 0
        %3022 = vmatmul.mubr.bf16.gmra.mrb[0].mxu0 %v2355
        %v3023 = vpop.f32.mrb[0].mxu0
        %v3024 = vadd.f32 %v2317, %v3023
        %v3025 = vpop.f32.mrb[0].mxu0
        %v3026 = vpop.f32.mrb[0].mxu0
        %v3027 = vadd.f32 %v2322, %v3026
        %v3028 = vpop.f32.mrb[0].mxu0
        %3029 = vdwg.mxu0
        %v3030 = vxor.u32 %v3000, 2147483648
        %v3031 = vxor.u32 %v3003, 2147483648
        %v3032 = vxor.u32 %v3008, 2147483648
        %v3033 = vxor.u32 %v3011, 2147483648
        %v3034 = vmul.f32 %v3030, 1.442695
        %v3035 = vpow.pop %v3034
        %v3036 = vmul.f32 %v3031, 1.442695
        %v3037 = vpow.pop %v3036
        %v3038 = vmul.f32 %v3032, 1.442695
        %v3039 = vpow.pop %v3038
        %v3040 = vmul.f32 %v3033, 1.442695
        %v3041 = vpow.pop %v3040
        %v3042 = vadd.f32 %v3035, 1.0
        %v3043 = vadd.f32 %v3037, 1.0
        %v3044 = vadd.f32 %v3039, 1.0
        %v3045 = vadd.f32 %v3041, 1.0
        %v3046 = vrcp.pop %v3042
        %v3047 = vmul.f32 1.0, %v3046
        %v3048 = vrcp.pop %v3043
        %v3049 = vmul.f32 1.0, %v3048
        %v3050 = vrcp.pop %v3044
        %v3051 = vmul.f32 1.0, %v3050
        %v3052 = vrcp.pop %v3045
        %v3053 = vmul.f32 1.0, %v3052
        %v3054 = vmul.f32 %v3047, %v3016
        %v3055 = vmul.f32 %v3049, %v3019
        %v3056 = vmul.f32 %v3051, %v3024
        %v3057 = vmul.f32 %v3053, %v3027
        %v3058 = vpack.c.bf16 %v3055, %v3054
        %v3059 = vpack.c.bf16 %v3057, %v3056
        %3060 = vmatprep.subr.bf16.mxu0 0
        %3061 = vmatpush1.bf16.msra.mxu0 %v3058
        %3062 = vmatprep.subr.bf16.mxu0 0
        %3063 = vmatpush1.bf16.msra.mxu0 %v3059
        %3064 = vmatprep.subr.bf16.mxu0 0
        %3065 = vmatpush1.bf16.msra.mxu0 0
        %3066 = vmatprep.subr.bf16.mxu0 0
        %3067 = vmatpush1.bf16.msra.mxu0 0
        %3068 = vmatprep.subr.bf16.mxu0 0
        %3069 = vmatpush1.bf16.msra.mxu0 0
        %3070 = vmatprep.subr.bf16.mxu0 0
        %3071 = vmatpush1.bf16.msra.mxu0 0
        %3072 = vmatprep.subr.bf16.mxu0 0
        %3073 = vmatpush1.bf16.msra.mxu0 0
        %3074 = vmatprep.subr.bf16.mxu0 0
        %3075 = vmatpush1.bf16.msra.mxu0 0
        %3076 = vmatprep.subr.bf16.mxu0 0
        %3077 = vmatpush1.bf16.msra.mxu0 0
        %3078 = vmatprep.subr.bf16.mxu0 0
        %3079 = vmatpush1.bf16.msra.mxu0 0
        %3080 = vmatprep.subr.bf16.mxu0 0
        %3081 = vmatpush1.bf16.msra.mxu0 0
        %3082 = vmatprep.subr.bf16.mxu0 0
        %3083 = vmatpush1.bf16.msra.mxu0 0
        %3084 = vmatprep.subr.bf16.mxu0 0
        %3085 = vmatpush1.bf16.msra.mxu0 0
        %3086 = vmatprep.subr.bf16.mxu0 0
        %3087 = vmatpush1.bf16.msra.mxu0 0
        %3088 = vmatprep.subr.bf16.mxu0 0
        %3089 = vmatpush1.bf16.msra.mxu0 0
        %3090 = vmatprep.subr.bf16.mxu0 0
        %3091 = vmatpush1.bf16.msra.mxu0 0
        %3092 = vmatprep.mubr.bf16.mxu0 0
        %3093 = vmatmul.mubr.bf16.gmra.mrb[0].mxu0 %v2463
        %v3094 = vpop.f32.mrb[0].mxu0
        %v3095 = vadd.f32 %v2252, %v3094
        %v3096 = vpop.f32.mrb[0].mxu0
        %v3097 = vpop.f32.mrb[0].mxu0
        %v3098 = vadd.f32 %v2253, %v3097
        %v3099 = vpop.f32.mrb[0].mxu0
        %3100 = vmatprep.mubr.bf16.mxu0 0
        %3101 = vmatmul.mubr.bf16.gmra.mrb[0].mxu0 %v2466
        %v3102 = vpop.f32.mrb[0].mxu0
        %v3103 = vadd.f32 %v2254, %v3102
        %v3104 = vpop.f32.mrb[0].mxu0
        %v3105 = vpop.f32.mrb[0].mxu0
        %v3106 = vadd.f32 %v2255, %v3105
        %v3107 = vpop.f32.mrb[0].mxu0
        %3108 = vdwg.mxu0
        %3109 = vst [vmem:[%s459 + $0x80] sm:$0xff] %v3095
        %3110 = vst [vmem:[%s459 + $0x88] sm:$0xff] %v3098
        %3111 = vst [vmem:[%s459 + $0x90] sm:$0xff] %v3103
        %3112 = vst [vmem:[%s459 + $0x98] sm:$0xff] %v3106
        %3113 = vmatprep.subr.bf16.mxu0 0
        %3114 = vmatpush1.bf16.msra.mxu0 %v499
        %3115 = vmatprep.subr.bf16.mxu0 0
        %3116 = vmatpush1.bf16.msra.mxu0 %v500
        %3117 = vmatprep.subr.bf16.mxu0 0
        %3118 = vmatpush1.bf16.msra.mxu0 0
        %3119 = vmatprep.subr.bf16.mxu0 0
        %3120 = vmatpush1.bf16.msra.mxu0 0
        %3121 = vmatprep.subr.bf16.mxu0 0
        %3122 = vmatpush1.bf16.msra.mxu0 0
        %3123 = vmatprep.subr.bf16.mxu0 0
        %3124 = vmatpush1.bf16.msra.mxu0 0
        %3125 = vmatprep.subr.bf16.mxu0 0
        %3126 = vmatpush1.bf16.msra.mxu0 0
        %3127 = vmatprep.subr.bf16.mxu0 0
        %3128 = vmatpush1.bf16.msra.mxu0 0
        %3129 = vmatprep.subr.bf16.mxu0 0
        %3130 = vmatpush1.bf16.msra.mxu0 0
        %3131 = vmatprep.subr.bf16.mxu0 0
        %3132 = vmatpush1.bf16.msra.mxu0 0
        %3133 = vmatprep.subr.bf16.mxu0 0
        %3134 = vmatpush1.bf16.msra.mxu0 0
        %3135 = vmatprep.subr.bf16.mxu0 0
        %3136 = vmatpush1.bf16.msra.mxu0 0
        %3137 = vmatprep.subr.bf16.mxu0 0
        %3138 = vmatpush1.bf16.msra.mxu0 0
        %3139 = vmatprep.subr.bf16.mxu0 0
        %3140 = vmatpush1.bf16.msra.mxu0 0
        %3141 = vmatprep.subr.bf16.mxu0 0
        %3142 = vmatpush1.bf16.msra.mxu0 0
        %3143 = vmatprep.subr.bf16.mxu0 0
        %3144 = vmatpush1.bf16.msra.mxu0 0
        %3145 = vmatprep.mubr.bf16.mxu0 0
        %3146 = vmatmul.mubr.bf16.gmra.mrb[0].mxu0 %v2346
        %v3147 = vpop.f32.mrb[0].mxu0
        %v3148 = vadd.f32 %v2287, %v3147
        %v3149 = vpop.f32.mrb[0].mxu0
        %v3150 = vpop.f32.mrb[0].mxu0
        %v3151 = vadd.f32 %v2292, %v3150
        %v3152 = vpop.f32.mrb[0].mxu0
        %3153 = vmatprep.mubr.bf16.mxu0 0
        %3154 = vmatmul.mubr.bf16.gmra.mrb[0].mxu0 %v2349
        %v3155 = vpop.f32.mrb[0].mxu0
        %v3156 = vadd.f32 %v2297, %v3155
        %v3157 = vpop.f32.mrb[0].mxu0
        %v3158 = vpop.f32.mrb[0].mxu0
        %v3159 = vadd.f32 %v2302, %v3158
        %v3160 = vpop.f32.mrb[0].mxu0
        %3161 = vmatprep.mubr.bf16.mxu0 0
        %3162 = vmatmul.mubr.bf16.gmra.mrb[0].mxu0 %v2352
        %v3163 = vpop.f32.mrb[0].mxu0
        %v3164 = vadd.f32 %v2307, %v3163
        %v3165 = vpop.f32.mrb[0].mxu0
        %v3166 = vpop.f32.mrb[0].mxu0
        %v3167 = vadd.f32 %v2312, %v3166
        %v3168 = vpop.f32.mrb[0].mxu0
        %3169 = vmatprep.mubr.bf16.mxu0 0
        %3170 = vmatmul.mubr.bf16.gmra.mrb[0].mxu0 %v2355
        %v3171 = vpop.f32.mrb[0].mxu0
        %v3172 = vadd.f32 %v2317, %v3171
        %v3173 = vpop.f32.mrb[0].mxu0
        %v3174 = vpop.f32.mrb[0].mxu0
        %v3175 = vadd.f32 %v2322, %v3174
        %v3176 = vpop.f32.mrb[0].mxu0
        %3177 = vdwg.mxu0
        %v3178 = vxor.u32 %v3148, 2147483648
        %v3179 = vxor.u32 %v3151, 2147483648
        %v3180 = vxor.u32 %v3156, 2147483648
        %v3181 = vxor.u32 %v3159, 2147483648
        %v3182 = vmul.f32 %v3178, 1.442695
        %v3183 = vpow.pop %v3182
        %v3184 = vmul.f32 %v3179, 1.442695
        %v3185 = vpow.pop %v3184
        %v3186 = vmul.f32 %v3180, 1.442695
        %v3187 = vpow.pop %v3186
        %v3188 = vmul.f32 %v3181, 1.442695
        %v3189 = vpow.pop %v3188
        %v3190 = vadd.f32 %v3183, 1.0
        %v3191 = vadd.f32 %v3185, 1.0
        %v3192 = vadd.f32 %v3187, 1.0
        %v3193 = vadd.f32 %v3189, 1.0
        %v3194 = vrcp.pop %v3190
        %v3195 = vmul.f32 1.0, %v3194
        %v3196 = vrcp.pop %v3191
        %v3197 = vmul.f32 1.0, %v3196
        %v3198 = vrcp.pop %v3192
        %v3199 = vmul.f32 1.0, %v3198
        %v3200 = vrcp.pop %v3193
        %v3201 = vmul.f32 1.0, %v3200
        %v3202 = vmul.f32 %v3195, %v3164
        %v3203 = vmul.f32 %v3197, %v3167
        %v3204 = vmul.f32 %v3199, %v3172
        %v3205 = vmul.f32 %v3201, %v3175
        %v3206 = vpack.c.bf16 %v3203, %v3202
        %v3207 = vpack.c.bf16 %v3205, %v3204
        %3208 = vmatprep.subr.bf16.mxu0 0
        %3209 = vmatpush1.bf16.msra.mxu0 %v3206
        %3210 = vmatprep.subr.bf16.mxu0 0
        %3211 = vmatpush1.bf16.msra.mxu0 %v3207
        %3212 = vmatprep.subr.bf16.mxu0 0
        %3213 = vmatpush1.bf16.msra.mxu0 0
        %3214 = vmatprep.subr.bf16.mxu0 0
        %3215 = vmatpush1.bf16.msra.mxu0 0
        %3216 = vmatprep.subr.bf16.mxu0 0
        %3217 = vmatpush1.bf16.msra.mxu0 0
        %3218 = vmatprep.subr.bf16.mxu0 0
        %3219 = vmatpush1.bf16.msra.mxu0 0
        %3220 = vmatprep.subr.bf16.mxu0 0
        %3221 = vmatpush1.bf16.msra.mxu0 0
        %3222 = vmatprep.subr.bf16.mxu0 0
        %3223 = vmatpush1.bf16.msra.mxu0 0
        %3224 = vmatprep.subr.bf16.mxu0 0
        %3225 = vmatpush1.bf16.msra.mxu0 0
        %3226 = vmatprep.subr.bf16.mxu0 0
        %3227 = vmatpush1.bf16.msra.mxu0 0
        %3228 = vmatprep.subr.bf16.mxu0 0
        %3229 = vmatpush1.bf16.msra.mxu0 0
        %3230 = vmatprep.subr.bf16.mxu0 0
        %3231 = vmatpush1.bf16.msra.mxu0 0
        %3232 = vmatprep.subr.bf16.mxu0 0
        %3233 = vmatpush1.bf16.msra.mxu0 0
        %3234 = vmatprep.subr.bf16.mxu0 0
        %3235 = vmatpush1.bf16.msra.mxu0 0
        %3236 = vmatprep.subr.bf16.mxu0 0
        %3237 = vmatpush1.bf16.msra.mxu0 0
        %3238 = vmatprep.subr.bf16.mxu0 0
        %3239 = vmatpush1.bf16.msra.mxu0 0
        %3240 = vmatprep.mubr.bf16.mxu0 0
        %3241 = vmatmul.mubr.bf16.gmra.mrb[0].mxu0 %v2463
        %v3242 = vpop.f32.mrb[0].mxu0
        %v3243 = vadd.f32 %v2256, %v3242
        %v3244 = vpop.f32.mrb[0].mxu0
        %v3245 = vpop.f32.mrb[0].mxu0
        %v3246 = vadd.f32 %v2257, %v3245
        %v3247 = vpop.f32.mrb[0].mxu0
        %3248 = vmatprep.mubr.bf16.mxu0 0
        %3249 = vmatmul.mubr.bf16.gmra.mrb[0].mxu0 %v2466
        %v3250 = vpop.f32.mrb[0].mxu0
        %v3251 = vadd.f32 %v2258, %v3250
        %v3252 = vpop.f32.mrb[0].mxu0
        %v3253 = vpop.f32.mrb[0].mxu0
        %v3254 = vadd.f32 %v2259, %v3253
        %v3255 = vpop.f32.mrb[0].mxu0
        %3256 = vdwg.mxu0
        %3257 = vst [vmem:[%s459 + $0xa0] sm:$0xff] %v3243
        %3258 = vst [vmem:[%s459 + $0xa8] sm:$0xff] %v3246
        %3259 = vst [vmem:[%s459 + $0xb0] sm:$0xff] %v3251
        %3260 = vst [vmem:[%s459 + $0xb8] sm:$0xff] %v3254
        %3261 = vmatprep.subr.bf16.mxu0 0
        %3262 = vmatpush1.bf16.msra.mxu0 %v501
        %3263 = vmatprep.subr.bf16.mxu0 0
        %3264 = vmatpush1.bf16.msra.mxu0 %v502
        %3265 = vmatprep.subr.bf16.mxu0 0
        %3266 = vmatpush1.bf16.msra.mxu0 0
        %3267 = vmatprep.subr.bf16.mxu0 0
        %3268 = vmatpush1.bf16.msra.mxu0 0
        %3269 = vmatprep.subr.bf16.mxu0 0
        %3270 = vmatpush1.bf16.msra.mxu0 0
        %3271 = vmatprep.subr.bf16.mxu0 0
        %3272 = vmatpush1.bf16.msra.mxu0 0
        %3273 = vmatprep.subr.bf16.mxu0 0
        %3274 = vmatpush1.bf16.msra.mxu0 0
        %3275 = vmatprep.subr.bf16.mxu0 0
        %3276 = vmatpush1.bf16.msra.mxu0 0
        %3277 = vmatprep.subr.bf16.mxu0 0
        %3278 = vmatpush1.bf16.msra.mxu0 0
        %3279 = vmatprep.subr.bf16.mxu0 0
        %3280 = vmatpush1.bf16.msra.mxu0 0
        %3281 = vmatprep.subr.bf16.mxu0 0
        %3282 = vmatpush1.bf16.msra.mxu0 0
        %3283 = vmatprep.subr.bf16.mxu0 0
        %3284 = vmatpush1.bf16.msra.mxu0 0
        %3285 = vmatprep.subr.bf16.mxu0 0
        %3286 = vmatpush1.bf16.msra.mxu0 0
        %3287 = vmatprep.subr.bf16.mxu0 0
        %3288 = vmatpush1.bf16.msra.mxu0 0
        %3289 = vmatprep.subr.bf16.mxu0 0
        %3290 = vmatpush1.bf16.msra.mxu0 0
        %3291 = vmatprep.subr.bf16.mxu0 0
        %3292 = vmatpush1.bf16.msra.mxu0 0
        %3293 = vmatprep.mubr.bf16.mxu0 0
        %3294 = vmatmul.mubr.bf16.gmra.mrb[0].mxu0 %v2346
        %v3295 = vpop.f32.mrb[0].mxu0
        %v3296 = vadd.f32 %v2287, %v3295
        %v3297 = vpop.f32.mrb[0].mxu0
        %v3298 = vpop.f32.mrb[0].mxu0
        %v3299 = vadd.f32 %v2292, %v3298
        %v3300 = vpop.f32.mrb[0].mxu0
        %3301 = vmatprep.mubr.bf16.mxu0 0
        %3302 = vmatmul.mubr.bf16.gmra.mrb[0].mxu0 %v2349
        %v3303 = vpop.f32.mrb[0].mxu0
        %v3304 = vadd.f32 %v2297, %v3303
        %v3305 = vpop.f32.mrb[0].mxu0
        %v3306 = vpop.f32.mrb[0].mxu0
        %v3307 = vadd.f32 %v2302, %v3306
        %v3308 = vpop.f32.mrb[0].mxu0
        %3309 = vmatprep.mubr.bf16.mxu0 0
        %3310 = vmatmul.mubr.bf16.gmra.mrb[0].mxu0 %v2352
        %v3311 = vpop.f32.mrb[0].mxu0
        %v3312 = vadd.f32 %v2307, %v3311
        %v3313 = vpop.f32.mrb[0].mxu0
        %v3314 = vpop.f32.mrb[0].mxu0
        %v3315 = vadd.f32 %v2312, %v3314
        %v3316 = vpop.f32.mrb[0].mxu0
        %3317 = vmatprep.mubr.bf16.mxu0 0
        %3318 = vmatmul.mubr.bf16.gmra.mrb[0].mxu0 %v2355
        %v3319 = vpop.f32.mrb[0].mxu0
        %v3320 = vadd.f32 %v2317, %v3319
        %v3321 = vpop.f32.mrb[0].mxu0
        %v3322 = vpop.f32.mrb[0].mxu0
        %v3323 = vadd.f32 %v2322, %v3322
        %v3324 = vpop.f32.mrb[0].mxu0
        %3325 = vdwg.mxu0
        %v3326 = vxor.u32 %v3296, 2147483648
        %v3327 = vxor.u32 %v3299, 2147483648
        %v3328 = vxor.u32 %v3304, 2147483648
        %v3329 = vxor.u32 %v3307, 2147483648
        %v3330 = vmul.f32 %v3326, 1.442695
        %v3331 = vpow.pop %v3330
        %v3332 = vmul.f32 %v3327, 1.442695
        %v3333 = vpow.pop %v3332
        %v3334 = vmul.f32 %v3328, 1.442695
        %v3335 = vpow.pop %v3334
        %v3336 = vmul.f32 %v3329, 1.442695
        %v3337 = vpow.pop %v3336
        %v3338 = vadd.f32 %v3331, 1.0
        %v3339 = vadd.f32 %v3333, 1.0
        %v3340 = vadd.f32 %v3335, 1.0
        %v3341 = vadd.f32 %v3337, 1.0
        %v3342 = vrcp.pop %v3338
        %v3343 = vmul.f32 1.0, %v3342
        %v3344 = vrcp.pop %v3339
        %v3345 = vmul.f32 1.0, %v3344
        %v3346 = vrcp.pop %v3340
        %v3347 = vmul.f32 1.0, %v3346
        %v3348 = vrcp.pop %v3341
        %v3349 = vmul.f32 1.0, %v3348
        %v3350 = vmul.f32 %v3343, %v3312
        %v3351 = vmul.f32 %v3345, %v3315
        %v3352 = vmul.f32 %v3347, %v3320
        %v3353 = vmul.f32 %v3349, %v3323
        %v3354 = vpack.c.bf16 %v3351, %v3350
        %v3355 = vpack.c.bf16 %v3353, %v3352
        %3356 = vmatprep.subr.bf16.mxu0 0
        %3357 = vmatpush1.bf16.msra.mxu0 %v3354
        %3358 = vmatprep.subr.bf16.mxu0 0
        %3359 = vmatpush1.bf16.msra.mxu0 %v3355
        %3360 = vmatprep.subr.bf16.mxu0 0
        %3361 = vmatpush1.bf16.msra.mxu0 0
        %3362 = vmatprep.subr.bf16.mxu0 0
        %3363 = vmatpush1.bf16.msra.mxu0 0
        %3364 = vmatprep.subr.bf16.mxu0 0
        %3365 = vmatpush1.bf16.msra.mxu0 0
        %3366 = vmatprep.subr.bf16.mxu0 0
        %3367 = vmatpush1.bf16.msra.mxu0 0
        %3368 = vmatprep.subr.bf16.mxu0 0
        %3369 = vmatpush1.bf16.msra.mxu0 0
        %3370 = vmatprep.subr.bf16.mxu0 0
        %3371 = vmatpush1.bf16.msra.mxu0 0
        %3372 = vmatprep.subr.bf16.mxu0 0
        %3373 = vmatpush1.bf16.msra.mxu0 0
        %3374 = vmatprep.subr.bf16.mxu0 0
        %3375 = vmatpush1.bf16.msra.mxu0 0
        %3376 = vmatprep.subr.bf16.mxu0 0
        %3377 = vmatpush1.bf16.msra.mxu0 0
        %3378 = vmatprep.subr.bf16.mxu0 0
        %3379 = vmatpush1.bf16.msra.mxu0 0
        %3380 = vmatprep.subr.bf16.mxu0 0
        %3381 = vmatpush1.bf16.msra.mxu0 0
        %3382 = vmatprep.subr.bf16.mxu0 0
        %3383 = vmatpush1.bf16.msra.mxu0 0
        %3384 = vmatprep.subr.bf16.mxu0 0
        %3385 = vmatpush1.bf16.msra.mxu0 0
        %3386 = vmatprep.subr.bf16.mxu0 0
        %3387 = vmatpush1.bf16.msra.mxu0 0
        %3388 = vmatprep.mubr.bf16.mxu0 0
        %3389 = vmatmul.mubr.bf16.gmra.mrb[0].mxu0 %v2463
        %v3390 = vpop.f32.mrb[0].mxu0
        %v3391 = vadd.f32 %v2260, %v3390
        %v3392 = vpop.f32.mrb[0].mxu0
        %v3393 = vpop.f32.mrb[0].mxu0
        %v3394 = vadd.f32 %v2261, %v3393
        %v3395 = vpop.f32.mrb[0].mxu0
        %3396 = vmatprep.mubr.bf16.mxu0 0
        %3397 = vmatmul.mubr.bf16.gmra.mrb[0].mxu0 %v2466
        %v3398 = vpop.f32.mrb[0].mxu0
        %v3399 = vadd.f32 %v2262, %v3398
        %v3400 = vpop.f32.mrb[0].mxu0
        %v3401 = vpop.f32.mrb[0].mxu0
        %v3402 = vadd.f32 %v2263, %v3401
        %v3403 = vpop.f32.mrb[0].mxu0
        %3404 = vdwg.mxu0
        %3405 = vst [vmem:[%s459 + $0xc0] sm:$0xff] %v3391
        %3406 = vst [vmem:[%s459 + $0xc8] sm:$0xff] %v3394
        %3407 = vst [vmem:[%s459 + $0xd0] sm:$0xff] %v3399
        %3408 = vst [vmem:[%s459 + $0xd8] sm:$0xff] %v3402
        %s3409 = sand.u32 %s216, 1
        %s3410 = sand.u32 %s216, 1
        %s3411 = smul.addr %s3410, 224
        %s3412 = scalar_lea.vmem [#allocation3], %s3411
        // Predicated region
        $region91: #{epab_pallas.1} parent=85 // pred_check
          %p3413 = pneg %p226
        $region92: #{epab_pallas.1} parent=85 // pred_check_branch
          %3415 = sbr.rel (%p3413) target = $region94
        $region93: #{epab_pallas.1} parent=85 // pred_region
          %s3416 = smul.addr %s23, 56
          %s3417 = sadd.s32 %s24, %s3416
          %s3418 = smul.addr %s3417, 8
          %s3419 = scalar_lea.vmem %s8, %s3418
          // Predicated region
          $region95: #{epab_pallas.1} parent=93 // pred_check
            _
          $region96: #{epab_pallas.1} parent=93 // pred_check_branch
            %3421 = sbr.rel (0) target = $region98
          $region97: #{epab_pallas.1} parent=93 // pred_region
            // Predicated region
            $region99: #{epab_pallas.1} parent=97 // pred_check
              _
            $region100: #{epab_pallas.1} parent=97 // pred_check_branch
              %3423 = sbr.rel (0) target = $region102
            $region101: #{epab_pallas.1} parent=97 // pred_region
              // Predicated region
              $region114: #{epab_pallas.1} parent=101 // pred_check
                _
              $region115: #{epab_pallas.1} parent=101 // pred_check_branch
                %3492 = sbr.rel (0) target = $region117
              $region116: #{epab_pallas.1} parent=101 // pred_region
                loop: start=0, step=1, limit=1
                $region118: #{epab_pallas.1} parent=116 // loop_pre_header
                  _
                $region119: #{epab_pallas.1} parent=116 // loop_header
                  %s3494 = sphi 0, %s3498
                  %p3495 = scmp.ge.s32.totalorder %s3494, 1
                  %s3499 = sphi %s3412, %s3412
                  %s3500 = sphi %s3419, %s3419
                $region120: #{epab_pallas.1} parent=116 // loop_header_branch
                  %3497 = sbr.rel (%p3495) target = $region124
                $region121: #{epab_pallas.1} parent=116 // loop_body
                  %v3501 = vld [vmem:[%s3499] sm:$0xff]
                  %3502 = vst [vmem:[%s3500] sm:$0xff] %v3501
                  %v3503 = vld [vmem:[%s3499 + $0x8] sm:$0xff]
                  %3504 = vst [vmem:[%s3500 + $0x10] sm:$0xff] %v3503
                  %v3505 = vld [vmem:[%s3499 + $0x10] sm:$0xff]
                  %3506 = vst [vmem:[%s3500 + $0x20] sm:$0xff] %v3505
                  %v3507 = vld [vmem:[%s3499 + $0x18] sm:$0xff]
                  %3508 = vst [vmem:[%s3500 + $0x30] sm:$0xff] %v3507
                  %v3509 = vld [vmem:[%s3499 + $0x20] sm:$0xff]
                  %3510 = vst [vmem:[%s3500 + $0x40] sm:$0xff] %v3509
                  %v3511 = vld [vmem:[%s3499 + $0x28] sm:$0xff]
                  %3512 = vst [vmem:[%s3500 + $0x50] sm:$0xff] %v3511
                  %v3513 = vld [vmem:[%s3499 + $0x30] sm:$0xff]
                  %3514 = vst [vmem:[%s3500 + $0x60] sm:$0xff] %v3513
                  %v3515 = vld [vmem:[%s3499 + $0x38] sm:$0xff]
                  %3516 = vst [vmem:[%s3500 + $0x70] sm:$0xff] %v3515
                  %v3517 = vld [vmem:[%s3499 + $0x40] sm:$0xff]
                  %3518 = vst [vmem:[%s3500 + $0x80] sm:$0xff] %v3517
                  %v3519 = vld [vmem:[%s3499 + $0x48] sm:$0xff]
                  %3520 = vst [vmem:[%s3500 + $0x90] sm:$0xff] %v3519
                  %v3521 = vld [vmem:[%s3499 + $0x50] sm:$0xff]
                  %3522 = vst [vmem:[%s3500 + $0xa0] sm:$0xff] %v3521
                  %v3523 = vld [vmem:[%s3499 + $0x58] sm:$0xff]
                  %3524 = vst [vmem:[%s3500 + $0xb0] sm:$0xff] %v3523
                  %v3525 = vld [vmem:[%s3499 + $0x60] sm:$0xff]
                  %3526 = vst [vmem:[%s3500 + $0xc0] sm:$0xff] %v3525
                  %v3527 = vld [vmem:[%s3499 + $0x68] sm:$0xff]
                  %3528 = vst [vmem:[%s3500 + $0xd0] sm:$0xff] %v3527
                  %v3529 = vld [vmem:[%s3499 + $0x70] sm:$0xff]
                  %3530 = vst [vmem:[%s3500 + $0xe0] sm:$0xff] %v3529
                  %v3531 = vld [vmem:[%s3499 + $0x78] sm:$0xff]
                  %3532 = vst [vmem:[%s3500 + $0xf0] sm:$0xff] %v3531
                  %v3533 = vld [vmem:[%s3499 + $0x80] sm:$0xff]
                  %3534 = vst [vmem:[%s3500 + $0x100] sm:$0xff] %v3533
                  %v3535 = vld [vmem:[%s3499 + $0x88] sm:$0xff]
                  %3536 = vst [vmem:[%s3500 + $0x110] sm:$0xff] %v3535
                  %v3537 = vld [vmem:[%s3499 + $0x90] sm:$0xff]
                  %3538 = vst [vmem:[%s3500 + $0x120] sm:$0xff] %v3537
                  %v3539 = vld [vmem:[%s3499 + $0x98] sm:$0xff]
                  %3540 = vst [vmem:[%s3500 + $0x130] sm:$0xff] %v3539
                  %v3541 = vld [vmem:[%s3499 + $0xa0] sm:$0xff]
                  %3542 = vst [vmem:[%s3500 + $0x140] sm:$0xff] %v3541
                  %v3543 = vld [vmem:[%s3499 + $0xa8] sm:$0xff]
                  %3544 = vst [vmem:[%s3500 + $0x150] sm:$0xff] %v3543
                  %v3545 = vld [vmem:[%s3499 + $0xb0] sm:$0xff]
                  %3546 = vst [vmem:[%s3500 + $0x160] sm:$0xff] %v3545
                  %v3547 = vld [vmem:[%s3499 + $0xb8] sm:$0xff]
                  %3548 = vst [vmem:[%s3500 + $0x170] sm:$0xff] %v3547
                  %v3549 = vld [vmem:[%s3499 + $0xc0] sm:$0xff]
                  %3550 = vst [vmem:[%s3500 + $0x180] sm:$0xff] %v3549
                  %v3551 = vld [vmem:[%s3499 + $0xc8] sm:$0xff]
                  %3552 = vst [vmem:[%s3500 + $0x190] sm:$0xff] %v3551
                  %v3553 = vld [vmem:[%s3499 + $0xd0] sm:$0xff]
                  %3554 = vst [vmem:[%s3500 + $0x1a0] sm:$0xff] %v3553
                  %v3555 = vld [vmem:[%s3499 + $0xd8] sm:$0xff]
                  %3556 = vst [vmem:[%s3500 + $0x1b0] sm:$0xff] %v3555
                $region122: #{epab_pallas.1} parent=116 // loop_footer
                  %s3498 = sadd.s32 1, %s3494
                $region123: #{epab_pallas.1} parent=116 // loop_footer_branch
                  %3493 = sbr.rel target = $region119
                $region124: #{epab_pallas.1} parent=116 // loop_exit
                  _
              $region117: #{epab_pallas.1} parent=101 // pred_fallthru
                _
              // Predicated region
              $region125: #{epab_pallas.1} parent=101 // pred_check
                _
              $region126: #{epab_pallas.1} parent=101 // pred_check_branch
                %3558 = sbr.rel target = $region128
              $region127: #{epab_pallas.1} parent=101 // pred_region
                _
              $region128: #{epab_pallas.1} parent=101 // pred_fallthru
                _
            $region102: #{epab_pallas.1} parent=97 // pred_fallthru
              _
            // Predicated region
            $region103: #{epab_pallas.1} parent=97 // pred_check
              _
            $region104: #{epab_pallas.1} parent=97 // pred_check_branch
              %3425 = sbr.rel target = $region106
            $region105: #{epab_pallas.1} parent=97 // pred_region
              loop: start=0, step=1, limit=1
              $region107: #{epab_pallas.1} parent=105 // loop_pre_header
                _
              $region108: #{epab_pallas.1} parent=105 // loop_header
                %s3428 = sphi 0, %s3432
                %p3429 = scmp.ge.s32.totalorder %s3428, 1
                %s3433 = sphi %s3412, %s3412
                %s3434 = sphi %s3419, %s3419
              $region109: #{epab_pallas.1} parent=105 // loop_header_branch
                %3431 = sbr.rel (%p3429) target = $region113
              $region110: #{epab_pallas.1} parent=105 // loop_body
                %v3435 = vld [vmem:[%s3433] sm:$0xff]
                %3436 = vst [vmem:[%s3434] sm:$0xff] %v3435
                %v3437 = vld [vmem:[%s3433 + $0x8] sm:$0xff]
                %3438 = vst [vmem:[%s3434 + $0x10] sm:$0xff] %v3437
                %v3439 = vld [vmem:[%s3433 + $0x10] sm:$0xff]
                %3440 = vst [vmem:[%s3434 + $0x20] sm:$0xff] %v3439
                %v3441 = vld [vmem:[%s3433 + $0x18] sm:$0xff]
                %3442 = vst [vmem:[%s3434 + $0x30] sm:$0xff] %v3441
                %v3443 = vld [vmem:[%s3433 + $0x20] sm:$0xff]
                %3444 = vst [vmem:[%s3434 + $0x40] sm:$0xff] %v3443
                %v3445 = vld [vmem:[%s3433 + $0x28] sm:$0xff]
                %3446 = vst [vmem:[%s3434 + $0x50] sm:$0xff] %v3445
                %v3447 = vld [vmem:[%s3433 + $0x30] sm:$0xff]
                %3448 = vst [vmem:[%s3434 + $0x60] sm:$0xff] %v3447
                %v3449 = vld [vmem:[%s3433 + $0x38] sm:$0xff]
                %3450 = vst [vmem:[%s3434 + $0x70] sm:$0xff] %v3449
                %v3451 = vld [vmem:[%s3433 + $0x40] sm:$0xff]
                %3452 = vst [vmem:[%s3434 + $0x80] sm:$0xff] %v3451
                %v3453 = vld [vmem:[%s3433 + $0x48] sm:$0xff]
                %3454 = vst [vmem:[%s3434 + $0x90] sm:$0xff] %v3453
                %v3455 = vld [vmem:[%s3433 + $0x50] sm:$0xff]
                %3456 = vst [vmem:[%s3434 + $0xa0] sm:$0xff] %v3455
                %v3457 = vld [vmem:[%s3433 + $0x58] sm:$0xff]
                %3458 = vst [vmem:[%s3434 + $0xb0] sm:$0xff] %v3457
                %v3459 = vld [vmem:[%s3433 + $0x60] sm:$0xff]
                %3460 = vst [vmem:[%s3434 + $0xc0] sm:$0xff] %v3459
                %v3461 = vld [vmem:[%s3433 + $0x68] sm:$0xff]
                %3462 = vst [vmem:[%s3434 + $0xd0] sm:$0xff] %v3461
                %v3463 = vld [vmem:[%s3433 + $0x70] sm:$0xff]
                %3464 = vst [vmem:[%s3434 + $0xe0] sm:$0xff] %v3463
                %v3465 = vld [vmem:[%s3433 + $0x78] sm:$0xff]
                %3466 = vst [vmem:[%s3434 + $0xf0] sm:$0xff] %v3465
                %v3467 = vld [vmem:[%s3433 + $0x80] sm:$0xff]
                %3468 = vst [vmem:[%s3434 + $0x100] sm:$0xff] %v3467
                %v3469 = vld [vmem:[%s3433 + $0x88] sm:$0xff]
                %3470 = vst [vmem:[%s3434 + $0x110] sm:$0xff] %v3469
                %v3471 = vld [vmem:[%s3433 + $0x90] sm:$0xff]
                %3472 = vst [vmem:[%s3434 + $0x120] sm:$0xff] %v3471
                %v3473 = vld [vmem:[%s3433 + $0x98] sm:$0xff]
                %3474 = vst [vmem:[%s3434 + $0x130] sm:$0xff] %v3473
                %v3475 = vld [vmem:[%s3433 + $0xa0] sm:$0xff]
                %3476 = vst [vmem:[%s3434 + $0x140] sm:$0xff] %v3475
                %v3477 = vld [vmem:[%s3433 + $0xa8] sm:$0xff]
                %3478 = vst [vmem:[%s3434 + $0x150] sm:$0xff] %v3477
                %v3479 = vld [vmem:[%s3433 + $0xb0] sm:$0xff]
                %3480 = vst [vmem:[%s3434 + $0x160] sm:$0xff] %v3479
                %v3481 = vld [vmem:[%s3433 + $0xb8] sm:$0xff]
                %3482 = vst [vmem:[%s3434 + $0x170] sm:$0xff] %v3481
                %v3483 = vld [vmem:[%s3433 + $0xc0] sm:$0xff]
                %3484 = vst [vmem:[%s3434 + $0x180] sm:$0xff] %v3483
                %v3485 = vld [vmem:[%s3433 + $0xc8] sm:$0xff]
                %3486 = vst [vmem:[%s3434 + $0x190] sm:$0xff] %v3485
                %v3487 = vld [vmem:[%s3433 + $0xd0] sm:$0xff]
                %3488 = vst [vmem:[%s3434 + $0x1a0] sm:$0xff] %v3487
                %v3489 = vld [vmem:[%s3433 + $0xd8] sm:$0xff]
                %3490 = vst [vmem:[%s3434 + $0x1b0] sm:$0xff] %v3489
              $region111: #{epab_pallas.1} parent=105 // loop_footer
                %s3432 = sadd.s32 1, %s3428
              $region112: #{epab_pallas.1} parent=105 // loop_footer_branch
                %3427 = sbr.rel target = $region108
              $region113: #{epab_pallas.1} parent=105 // loop_exit
                _
            $region106: #{epab_pallas.1} parent=97 // pred_fallthru
              _
          $region98: #{epab_pallas.1} parent=93 // pred_fallthru
            _
          %3559 = vnop
        $region94: #{epab_pallas.1} parent=85 // pred_fallthru
          _
      $region86: #{epab_pallas.1} parent=5 // pred_fallthru
        _
      %p3560 = scmp.le.s32.totalorder 2, %s14
      // Predicated region
      $region129: #{epab_pallas.1} parent=5 // pred_check
        %p3561 = pneg %p3560
      $region130: #{epab_pallas.1} parent=5 // pred_check_branch
        %3563 = sbr.rel (%p3561) target = $region132
      $region131: #{epab_pallas.1} parent=5 // pred_region
        %s3564 = ssub.s32 %s14, 2
        // Predicated region
        $region133: #{epab_pallas.1} parent=131 // pred_check
          %p3565 = pneg %p232
        $region134: #{epab_pallas.1} parent=131 // pred_check_branch
          %3567 = sbr.rel (%p3565) target = $region136
        $region135: #{epab_pallas.1} parent=131 // pred_region
          %s3568 = sand.u32 %s217, 1
          %s3569 = sand.u32 %s217, 1
          %s3570 = smul.addr %s3569, 224
          %s3571 = scalar_lea.vmem [#allocation3], %s3570
        $region136: #{epab_pallas.1} parent=131 // pred_fallthru
          _
      $region132: #{epab_pallas.1} parent=5 // pred_fallthru
        _
    $region6: #{epab_pallas.1} parent=1 // loop_footer
      %s18 = sadd.s32 1, %s14
    $region7: #{epab_pallas.1} parent=1 // loop_footer_branch
      %13 = sbr.rel target = $region3
    $region8: #{epab_pallas.1} parent=1 // loop_exit
      _

</llo_original>
